<compile_context>
chip_gen: v6e
topology: v6e:2x2x1
jax: 0.10.0
libtpu: 0.0.40
codegen_flags: <defaults>
</compile_context>

<pallas_src>
import numpy as np

import jax
import jax.numpy as jnp
from jax.experimental import pallas as pl
from jax.experimental.pallas import tpu as pltpu

_LANE = 128          # TPU lane width; conv activations are padded to this
_BATCH_BLOCK = 128   # max images per grid step (~20 MB VMEM; fits v7x's 64 MiB/TC)
_KH = 5              # conv kernel height (both convs are 5x5)


# ----------------------------------------------------------------------------
# Parameter repacking (runs once, outside the hot path).
# ----------------------------------------------------------------------------
def _banded_conv_weight(w_oihw, w_in):
    """(Cout, Cin, KH, KW) torch conv weight -> (KH*128, 256) banded matrix.

    Row block kh (rows [kh*128, (kh+1)*128)) maps an input image row laid out
    as lanes (w*Cin + ci) (zero padded to 128) onto output lanes
    (s*128 + pw*Cout + co), i.e. the valid-conv outputs at column ow = 2*pw+s.
    A single K=640 matmul against the kh-concatenated im2col LHS therefore
    performs the whole 5x5 convolution with MXU-internal accumulation.
    """
    co_n, ci_n, kh_n, kw_n = (int(d) for d in w_oihw.shape)
    ow = w_in - kw_n + 1
    pw_n = ow // 2
    w_np = np.asarray(w_oihw, np.float32)
    wb = np.zeros((kh_n, _LANE, 2 * _LANE), np.float32)
    for kh in range(kh_n):
        for kw in range(kw_n):
            blk = w_np[:, :, kh, kw].T                      # (Cin, Cout)
            for s in range(2):
                for p in range(pw_n):
                    w_col = 2 * p + s + kw                  # input column used
                    r0 = w_col * ci_n
                    c0 = s * _LANE + p * co_n
                    wb[kh, r0:r0 + ci_n, c0:c0 + co_n] = blk
    return wb.reshape(kh_n * _LANE, 2 * _LANE)


def _wide_bias(b, pw_n):
    """Bias tiled to match the banded conv output lanes (pad lanes get 0)."""
    b = np.asarray(b, np.float32)
    co_n = b.shape[0]
    half = np.zeros((_LANE,), np.float32)
    half[:pw_n * co_n] = np.tile(b, pw_n)
    return np.concatenate([half, half]).reshape(1, 2 * _LANE)


def _fc1_weight(fc1_w):
    """torch fc1 weight (120, 400), inputs ordered (c, h, w) -> (5, 128, 128).

    Slice h holds the weights for pooled-conv2 row h, whose 80 used lanes are
    ordered (w*16 + c); outputs are zero-padded from 120 to 128 lanes so the
    FC chain stays lane-dense.
    """
    w = np.asarray(fc1_w, np.float32).reshape(120, 16, 5, 5)   # (n, c, h, w)
    w = np.transpose(w, (2, 3, 1, 0))                          # (h, w, c, n)
    out = np.zeros((5, _LANE, _LANE), np.float32)
    out[:, :80, :120] = w.reshape(5, 80, 120)
    return out


def _pad_mat(w_t, rows=_LANE, cols=_LANE):
    out = np.zeros((rows, cols), np.float32)
    a = np.asarray(w_t, np.float32)
    out[:a.shape[0], :a.shape[1]] = a
    return out


def _pad_bias(b, n=_LANE):
    out = np.zeros((1, n), np.float32)
    a = np.asarray(b, np.float32)
    out[0, :a.shape[0]] = a
    return out


def init_params(key):
    """Random parameters in the PyTorch layouts of `Net`."""
    ks = jax.random.split(key, 10)
    s = 0.1
    rnd = lambda k, shp: s * jax.random.normal(k, shp, jnp.float32)
    return {
        "conv1_w": rnd(ks[0], (6, 3, 5, 5)),   "conv1_b": rnd(ks[1], (6,)),
        "conv2_w": rnd(ks[2], (16, 6, 5, 5)),  "conv2_b": rnd(ks[3], (16,)),
        "fc1_w": rnd(ks[4], (120, 16 * 5 * 5)), "fc1_b": rnd(ks[5], (120,)),
        "fc2_w": rnd(ks[6], (84, 120)),         "fc2_b": rnd(ks[7], (84,)),
        "fc3_w": rnd(ks[8], (10, 84)),          "fc3_b": rnd(ks[9], (10,)),
    }


def prepare_params(p):
    """Repack torch-layout params into the kernel layout (bf16 matmul operands)."""
    return {
        "w1b": jnp.asarray(_banded_conv_weight(p["conv1_w"], 32), jnp.bfloat16),
        "b1": jnp.asarray(_wide_bias(p["conv1_b"], 14), jnp.float32),
        "w2b": jnp.asarray(_banded_conv_weight(p["conv2_w"], 14), jnp.bfloat16),
        "b2": jnp.asarray(_wide_bias(p["conv2_b"], 5), jnp.float32),
        "fw1": jnp.asarray(_fc1_weight(p["fc1_w"]), jnp.bfloat16),
        "fb1": jnp.asarray(_pad_bias(p["fc1_b"]), jnp.float32),
        "fw2": jnp.asarray(_pad_mat(np.asarray(p["fc2_w"], np.float32).T), jnp.bfloat16),
        "fb2": jnp.asarray(_pad_bias(p["fc2_b"]), jnp.float32),
        "fw3": jnp.asarray(_pad_mat(np.asarray(p["fc3_w"], np.float32).T), jnp.bfloat16),
        "fb3": jnp.asarray(_pad_bias(p["fc3_b"]), jnp.float32),
    }


# ----------------------------------------------------------------------------
# Fused forward kernel.
# ----------------------------------------------------------------------------
def _lenet_kernel(x_ref, w1_ref, b1_ref, w2_ref, b2_ref,
                  fw1_ref, fb1_ref, fw2_ref, fb2_ref, fw3_ref, fb3_ref,
                  o_ref, im2col_ref, x2_ref):
    bb = x_ref.shape[1]   # images in this grid step (rows are ordered (h, b))

    def conv_pool(src_ref, w_ref, b_ref, oh):
        """valid 5x5 conv + bias + ReLU + 2x2/2 max-pool as ONE K=640 MXU matmul.

        src_ref: (H, bb, 128) bf16 rows, lanes (w*Cin+ci) zero-padded to 128.
        Returns (oh//2, bb, 128) f32: lanes (pw*Cout + co), pad lanes 0.
        """
        rows = oh * bb
        # im2col along kh: 5 aligned stores (slice start kh selects whole
        # (bb,128) slabs of the (H,bb,128) ref; lane offset kh*128 is aligned).
        for kh in range(_KH):
            im2col_ref[pl.ds(0, rows), pl.ds(kh * _LANE, _LANE)] = (
                src_ref[pl.ds(kh, oh), :, :].reshape(rows, _LANE))
        acc = jnp.dot(im2col_ref[pl.ds(0, rows), :], w_ref[...],
                      preferred_element_type=jnp.float32)
        acc = jnp.maximum(acc + b_ref[...], 0.0)              # bias + ReLU (f32)
        # horizontal pool: the two lane halves hold ow=2*pw and ow=2*pw+1
        wp = jnp.maximum(acc[:, :_LANE], acc[:, _LANE:])      # (oh*bb, 128)
        # vertical pool: with rows ordered (oh, b), even/odd conv output rows
        # are two contiguous bb-row blocks -> whole-block max, no strided gather.
        wp = wp.reshape(oh // 2, 2, bb, _LANE)
        return jnp.maximum(wp[:, 0], wp[:, 1])                # (oh//2, bb, 128)

    # conv1: 32x32x3 -> 28x28x6 -> pool -> 14x14x6 (stored once as bf16)
    x2_ref[...] = conv_pool(x_ref, w1_ref, b1_ref, 28).astype(jnp.bfloat16)

    # conv2: 14x14x6 -> 10x10x16 -> pool -> 5x5x16
    p2 = conv_pool(x2_ref, w2_ref, b2_ref, 10).astype(jnp.bfloat16)  # (5, bb, 128)

    # fc1 directly from the pooled activation: sum of 5 (bb,128)x(128,128)
    # matmuls (fc1 weight rows were permuted to the (w*16+c) lane order and the
    # whole FC chain is zero-padded to 128 lanes -> lane-dense, unmasked stores).
    z = jnp.dot(p2[0], fw1_ref[0], preferred_element_type=jnp.float32)
    for h in range(1, _KH):
        z = z + jnp.dot(p2[h], fw1_ref[h], preferred_element_type=jnp.float32)
    z = jnp.maximum(z + fb1_ref[...], 0.0).astype(jnp.bfloat16)
    z = jnp.dot(z, fw2_ref[...], preferred_element_type=jnp.float32) + fb2_ref[...]
    z = jnp.maximum(z, 0.0).astype(jnp.bfloat16)
    o_ref[...] = jnp.dot(z, fw3_ref[...], preferred_element_type=jnp.float32) + fb3_ref[...]


def net_forward(x_nchw, params):
    B = x_nchw.shape[0]
    # Single layout pass outside the kernel: NCHW -> (H, B, W*Cin) bf16,
    # lane-padded to 128 and batch-padded to a multiple of the block size.
    x = jnp.transpose(x_nchw, (2, 0, 3, 1)).reshape(32, B, 32 * 3)
    x = x.astype(jnp.bfloat16)

    # Block size: multiple of 16 (clean bf16 sublane packing), <= _BATCH_BLOCK,
    # targeting a grid of >= 2 steps so v7x's two TensorCores both get work.
    half = (B + 1) // 2
    bb = min(_BATCH_BLOCK, max(16, ((half + 15) // 16) * 16))
    pad = (-B) % bb
    bp = B + pad
    x = jnp.pad(x, ((0, 0), (0, pad), (0, _LANE - 32 * 3)))

    out = pl.pallas_call(
        _lenet_kernel,
        out_shape=jax.ShapeDtypeStruct((bp, _LANE), jnp.float32),
        grid=(bp // bb,),
        in_specs=[
            pl.BlockSpec((32, bb, _LANE), lambda i: (0, i, 0)),        # image block
            pl.BlockSpec((_KH * _LANE, 2 * _LANE), lambda i: (0, 0)),  # conv1 banded w
            pl.BlockSpec((1, 2 * _LANE), lambda i: (0, 0)),            # conv1 bias
            pl.BlockSpec((_KH * _LANE, 2 * _LANE), lambda i: (0, 0)),  # conv2 banded w
            pl.BlockSpec((1, 2 * _LANE), lambda i: (0, 0)),            # conv2 bias
            pl.BlockSpec((_KH, _LANE, _LANE), lambda i: (0, 0, 0)),    # fc1 w
            pl.BlockSpec((1, _LANE), lambda i: (0, 0)),                # fc1 b
            pl.BlockSpec((_LANE, _LANE), lambda i: (0, 0)),            # fc2 w
            pl.BlockSpec((1, _LANE), lambda i: (0, 0)),                # fc2 b
            pl.BlockSpec((_LANE, _LANE), lambda i: (0, 0)),            # fc3 w
            pl.BlockSpec((1, _LANE), lambda i: (0, 0)),                # fc3 b
        ],
        out_specs=pl.BlockSpec((bb, _LANE), lambda i: (i, 0)),
        scratch_shapes=[
            pltpu.VMEM((28 * bb, _KH * _LANE), jnp.bfloat16),  # shared im2col LHS
            pltpu.VMEM((14, bb, _LANE), jnp.bfloat16),         # conv1 pooled output
        ],
        compiler_params=pltpu.CompilerParams(
            dimension_semantics=("parallel",),
            vmem_limit_bytes=48 * 1024 * 1024),
    )(x, params["w1b"], params["b1"], params["w2b"], params["b2"],
      params["fw1"], params["fb1"], params["fw2"], params["fb2"],
      params["fw3"], params["fb3"])
    return out[:B, :10]


# ----------------------------------------------------------------------------
# Pure-JAX f32 reference (PyTorch semantics) for a correctness sanity check.
# ----------------------------------------------------------------------------
def net_forward_ref(x, p):
    def conv(y, w, b):
        y = jax.lax.conv_general_dilated(y, w, (1, 1), "VALID",
                                         dimension_numbers=("NCHW", "OIHW", "NCHW"))
        return y + b.reshape(1, -1, 1, 1)

    def pool(y):
        return jax.lax.reduce_window(y, -jnp.inf, jax.lax.max,
                                     (1, 1, 2, 2), (1, 1, 2, 2), "VALID")

    y = pool(jax.nn.relu(conv(x, p["conv1_w"], p["conv1_b"])))
    y = pool(jax.nn.relu(conv(y, p["conv2_w"], p["conv2_b"])))
    y = y.reshape(y.shape[0], -1)                       # (c, h, w) flatten order
    y = jax.nn.relu(y @ p["fc1_w"].T + p["fc1_b"])
    y = jax.nn.relu(y @ p["fc2_w"].T + p["fc2_b"])
    return y @ p["fc3_w"].T + p["fc3_b"]


if __name__ == "__main__":
    key = jax.random.PRNGKey(0)
    k_x, k_p = jax.random.split(key)
    # Spatial size must be 32 so 16*5*5 features reach fc1, as in the PyTorch Net.
    x = jax.random.normal(k_x, (2, 3, 32, 32), jnp.float32)
    torch_params = init_params(k_p)
    params = prepare_params(torch_params)

    fwd = jax.jit(net_forward)
    out = jax.block_until_ready(fwd(x, params))
    assert out.shape == (2, 10) and out.dtype == jnp.float32

    # Matmul operands are bf16 (f32 accumulate), so allow ~1e-2-level deviation.
    ref = net_forward_ref(x, torch_params)
    np.testing.assert_allclose(np.asarray(out), np.asarray(ref), rtol=0.05, atol=0.05)
    print("KERNEL_OK")
</pallas_src>

<mosaic_0001>
module attributes {stable_mosaic.version = 11 : i64} {
  func.func @_lenet_kernel(%arg0: i32, %arg1: memref<32x16x128xbf16, #tpu.memory_space<vmem>>, %arg2: memref<640x256xbf16, #tpu.memory_space<vmem>>, %arg3: memref<1x256xf32, #tpu.memory_space<vmem>>, %arg4: memref<640x256xbf16, #tpu.memory_space<vmem>>, %arg5: memref<1x256xf32, #tpu.memory_space<vmem>>, %arg6: memref<5x128x128xbf16, #tpu.memory_space<vmem>>, %arg7: memref<1x128xf32, #tpu.memory_space<vmem>>, %arg8: memref<128x128xbf16, #tpu.memory_space<vmem>>, %arg9: memref<1x128xf32, #tpu.memory_space<vmem>>, %arg10: memref<128x128xbf16, #tpu.memory_space<vmem>>, %arg11: memref<1x128xf32, #tpu.memory_space<vmem>>, %arg12: memref<16x128xf32, #tpu.memory_space<vmem>>, %arg13: memref<448x640xbf16, #tpu.memory_space<vmem>>, %arg14: memref<14x16x128xbf16, #tpu.memory_space<vmem>>) attributes {dimension_semantics = [#tpu.dimension_semantics<parallel>], iteration_bounds = array<i64: 1>, scalar_prefetch = 0 : i64, scratch_operands = 2 : i64, tpu.core_type = #tpu.core_type<tc>, window_params = [{transform_indices = @transform_0, window_bounds = array<i64: 32, 16, 128>}, {pipeline_mode = #tpu.pipeline_mode<synchronous>, transform_indices = @transform_1, window_bounds = array<i64: 640, 256>}, {pipeline_mode = #tpu.pipeline_mode<synchronous>, transform_indices = @transform_2, window_bounds = array<i64: 1, 256>}, {pipeline_mode = #tpu.pipeline_mode<synchronous>, transform_indices = @transform_3, window_bounds = array<i64: 640, 256>}, {pipeline_mode = #tpu.pipeline_mode<synchronous>, transform_indices = @transform_4, window_bounds = array<i64: 1, 256>}, {pipeline_mode = #tpu.pipeline_mode<synchronous>, transform_indices = @transform_5, window_bounds = array<i64: 5, 128, 128>}, {pipeline_mode = #tpu.pipeline_mode<synchronous>, transform_indices = @transform_6, window_bounds = array<i64: 1, 128>}, {pipeline_mode = #tpu.pipeline_mode<synchronous>, transform_indices = @transform_7, window_bounds = array<i64: 128, 128>}, {pipeline_mode = #tpu.pipeline_mode<synchronous>, transform_indices = @transform_8, window_bounds = array<i64: 1, 128>}, {pipeline_mode = #tpu.pipeline_mode<synchronous>, transform_indices = @transform_9, window_bounds = array<i64: 128, 128>}, {pipeline_mode = #tpu.pipeline_mode<synchronous>, transform_indices = @transform_10, window_bounds = array<i64: 1, 128>}, {transform_indices = @transform_11, window_bounds = array<i64: 16, 128>}]} {
    %c0 = arith.constant 0 : index
    %c0_0 = arith.constant 0 : index
    %c0_1 = arith.constant 0 : index
    %0 = vector.load %arg1[%c0, %c0_0, %c0_1] : memref<32x16x128xbf16, #tpu.memory_space<vmem>>, vector<28x16x128xbf16>
    %1 = vector.shape_cast %0 : vector<28x16x128xbf16> to vector<448x128xbf16>
    %c0_2 = arith.constant 0 : index
    %c0_3 = arith.constant 0 : index
    %2 = vector.load %arg13[%c0_2, %c0_3] : memref<448x640xbf16, #tpu.memory_space<vmem>>, vector<448x128xbf16>
    tpu.vector_store %arg13[%c0_2, %c0_3], %1 {strides = array<i32>} : memref<448x640xbf16, #tpu.memory_space<vmem>>, vector<448x128xbf16>,
    %c1 = arith.constant 1 : index
    %c0_4 = arith.constant 0 : index
    %c0_5 = arith.constant 0 : index
    %3 = vector.load %arg1[%c1, %c0_4, %c0_5] : memref<32x16x128xbf16, #tpu.memory_space<vmem>>, vector<28x16x128xbf16>
    %4 = vector.shape_cast %3 : vector<28x16x128xbf16> to vector<448x128xbf16>
    %c0_6 = arith.constant 0 : index
    %c128 = arith.constant 128 : index
    %5 = vector.load %arg13[%c0_6, %c128] : memref<448x640xbf16, #tpu.memory_space<vmem>>, vector<448x128xbf16>
    tpu.vector_store %arg13[%c0_6, %c128], %4 {strides = array<i32>} : memref<448x640xbf16, #tpu.memory_space<vmem>>, vector<448x128xbf16>,
    %c2 = arith.constant 2 : index
    %c0_7 = arith.constant 0 : index
    %c0_8 = arith.constant 0 : index
    %6 = vector.load %arg1[%c2, %c0_7, %c0_8] : memref<32x16x128xbf16, #tpu.memory_space<vmem>>, vector<28x16x128xbf16>
    %7 = vector.shape_cast %6 : vector<28x16x128xbf16> to vector<448x128xbf16>
    %c0_9 = arith.constant 0 : index
    %c256 = arith.constant 256 : index
    %8 = vector.load %arg13[%c0_9, %c256] : memref<448x640xbf16, #tpu.memory_space<vmem>>, vector<448x128xbf16>
    tpu.vector_store %arg13[%c0_9, %c256], %7 {strides = array<i32>} : memref<448x640xbf16, #tpu.memory_space<vmem>>, vector<448x128xbf16>,
    %c3 = arith.constant 3 : index
    %c0_10 = arith.constant 0 : index
    %c0_11 = arith.constant 0 : index
    %9 = vector.load %arg1[%c3, %c0_10, %c0_11] : memref<32x16x128xbf16, #tpu.memory_space<vmem>>, vector<28x16x128xbf16>
    %10 = vector.shape_cast %9 : vector<28x16x128xbf16> to vector<448x128xbf16>
    %c0_12 = arith.constant 0 : index
    %c384 = arith.constant 384 : index
    %11 = vector.load %arg13[%c0_12, %c384] : memref<448x640xbf16, #tpu.memory_space<vmem>>, vector<448x128xbf16>
    tpu.vector_store %arg13[%c0_12, %c384], %10 {strides = array<i32>} : memref<448x640xbf16, #tpu.memory_space<vmem>>, vector<448x128xbf16>,
    %c4 = arith.constant 4 : index
    %c0_13 = arith.constant 0 : index
    %c0_14 = arith.constant 0 : index
    %12 = vector.load %arg1[%c4, %c0_13, %c0_14] : memref<32x16x128xbf16, #tpu.memory_space<vmem>>, vector<28x16x128xbf16>
    %13 = vector.shape_cast %12 : vector<28x16x128xbf16> to vector<448x128xbf16>
    %c0_15 = arith.constant 0 : index
    %c512 = arith.constant 512 : index
    %14 = vector.load %arg13[%c0_15, %c512] : memref<448x640xbf16, #tpu.memory_space<vmem>>, vector<448x128xbf16>
    tpu.vector_store %arg13[%c0_15, %c512], %13 {strides = array<i32>} : memref<448x640xbf16, #tpu.memory_space<vmem>>, vector<448x128xbf16>,
    %c0_16 = arith.constant 0 : index
    %c0_17 = arith.constant 0 : index
    %15 = vector.load %arg13[%c0_16, %c0_17] : memref<448x640xbf16, #tpu.memory_space<vmem>>, vector<448x640xbf16>
    %c0_18 = arith.constant 0 : index
    %c0_19 = arith.constant 0 : index
    %16 = vector.load %arg2[%c0_18, %c0_19] : memref<640x256xbf16, #tpu.memory_space<vmem>>, vector<640x256xbf16>
    %cst = arith.constant dense<0.000000e+00> : vector<448x256xf32>
    %17 = tpu.matmul %15, %16, %cst {dimension_numbers = #tpu.dot_dimension_numbers<[1], [0], [0], [1], [0, 0, 1, 1], [], []>} : vector<448x640xbf16>, vector<640x256xbf16>, vector<448x256xf32> -> vector<448x256xf32>
    %c0_20 = arith.constant 0 : index
    %c0_21 = arith.constant 0 : index
    %18 = vector.load %arg3[%c0_20, %c0_21] : memref<1x256xf32, #tpu.memory_space<vmem>>, vector<1x256xf32>
    %19 = vector.broadcast %18 : vector<1x256xf32> to vector<448x256xf32>
    %20 = arith.addf %17, %19 : vector<448x256xf32>
    %cst_22 = arith.constant 0.000000e+00 : f32
    %21 = vector.broadcast %cst_22 : f32 to vector<448x256xf32>
    %22 = arith.maximumf %20, %21 : vector<448x256xf32>
    %23 = vector.extract_strided_slice %22 {offsets = [0, 0], sizes = [448, 128], strides = [1, 1]} : vector<448x256xf32> to vector<448x128xf32>
    %24 = vector.extract_strided_slice %22 {offsets = [0, 128], sizes = [448, 128], strides = [1, 1]} : vector<448x256xf32> to vector<448x128xf32>
    %25 = arith.maximumf %23, %24 : vector<448x128xf32>
    %26 = vector.shape_cast %25 : vector<448x128xf32> to vector<14x2x16x128xf32>
    %27 = vector.extract_strided_slice %26 {offsets = [0, 0, 0, 0], sizes = [14, 1, 16, 128], strides = [1, 1, 1, 1]} : vector<14x2x16x128xf32> to vector<14x1x16x128xf32>
    %28 = vector.shape_cast %27 : vector<14x1x16x128xf32> to vector<14x16x128xf32>
    %29 = vector.extract_strided_slice %26 {offsets = [0, 1, 0, 0], sizes = [14, 1, 16, 128], strides = [1, 1, 1, 1]} : vector<14x2x16x128xf32> to vector<14x1x16x128xf32>
    %30 = vector.shape_cast %29 : vector<14x1x16x128xf32> to vector<14x16x128xf32>
    %31 = arith.maximumf %28, %30 : vector<14x16x128xf32>
    %32 = arith.truncf %31 : vector<14x16x128xf32> to vector<14x16x128xbf16>
    %c0_23 = arith.constant 0 : index
    %c0_24 = arith.constant 0 : index
    %c0_25 = arith.constant 0 : index
    %33 = vector.load %arg14[%c0_23, %c0_24, %c0_25] : memref<14x16x128xbf16, #tpu.memory_space<vmem>>, vector<14x16x128xbf16>
    tpu.vector_store %arg14[%c0_23, %c0_24, %c0_25], %32 {strides = array<i32>} : memref<14x16x128xbf16, #tpu.memory_space<vmem>>, vector<14x16x128xbf16>,
    %c0_26 = arith.constant 0 : index
    %c0_27 = arith.constant 0 : index
    %c0_28 = arith.constant 0 : index
    %34 = vector.load %arg14[%c0_26, %c0_27, %c0_28] : memref<14x16x128xbf16, #tpu.memory_space<vmem>>, vector<10x16x128xbf16>
    %35 = vector.shape_cast %34 : vector<10x16x128xbf16> to vector<160x128xbf16>
    %c0_29 = arith.constant 0 : index
    %c0_30 = arith.constant 0 : index
    %36 = vector.load %arg13[%c0_29, %c0_30] : memref<448x640xbf16, #tpu.memory_space<vmem>>, vector<160x128xbf16>
    tpu.vector_store %arg13[%c0_29, %c0_30], %35 {strides = array<i32>} : memref<448x640xbf16, #tpu.memory_space<vmem>>, vector<160x128xbf16>,
    %c1_31 = arith.constant 1 : index
    %c0_32 = arith.constant 0 : index
    %c0_33 = arith.constant 0 : index
    %37 = vector.load %arg14[%c1_31, %c0_32, %c0_33] : memref<14x16x128xbf16, #tpu.memory_space<vmem>>, vector<10x16x128xbf16>
    %38 = vector.shape_cast %37 : vector<10x16x128xbf16> to vector<160x128xbf16>
    %c0_34 = arith.constant 0 : index
    %c128_35 = arith.constant 128 : index
    %39 = vector.load %arg13[%c0_34, %c128_35] : memref<448x640xbf16, #tpu.memory_space<vmem>>, vector<160x128xbf16>
    tpu.vector_store %arg13[%c0_34, %c128_35], %38 {strides = array<i32>} : memref<448x640xbf16, #tpu.memory_space<vmem>>, vector<160x128xbf16>,
    %c2_36 = arith.constant 2 : index
    %c0_37 = arith.constant 0 : index
    %c0_38 = arith.constant 0 : index
    %40 = vector.load %arg14[%c2_36, %c0_37, %c0_38] : memref<14x16x128xbf16, #tpu.memory_space<vmem>>, vector<10x16x128xbf16>
    %41 = vector.shape_cast %40 : vector<10x16x128xbf16> to vector<160x128xbf16>
    %c0_39 = arith.constant 0 : index
    %c256_40 = arith.constant 256 : index
    %42 = vector.load %arg13[%c0_39, %c256_40] : memref<448x640xbf16, #tpu.memory_space<vmem>>, vector<160x128xbf16>
    tpu.vector_store %arg13[%c0_39, %c256_40], %41 {strides = array<i32>} : memref<448x640xbf16, #tpu.memory_space<vmem>>, vector<160x128xbf16>,
    %c3_41 = arith.constant 3 : index
    %c0_42 = arith.constant 0 : index
    %c0_43 = arith.constant 0 : index
    %43 = vector.load %arg14[%c3_41, %c0_42, %c0_43] : memref<14x16x128xbf16, #tpu.memory_space<vmem>>, vector<10x16x128xbf16>
    %44 = vector.shape_cast %43 : vector<10x16x128xbf16> to vector<160x128xbf16>
    %c0_44 = arith.constant 0 : index
    %c384_45 = arith.constant 384 : index
    %45 = vector.load %arg13[%c0_44, %c384_45] : memref<448x640xbf16, #tpu.memory_space<vmem>>, vector<160x128xbf16>
    tpu.vector_store %arg13[%c0_44, %c384_45], %44 {strides = array<i32>} : memref<448x640xbf16, #tpu.memory_space<vmem>>, vector<160x128xbf16>,
    %c4_46 = arith.constant 4 : index
    %c0_47 = arith.constant 0 : index
    %c0_48 = arith.constant 0 : index
    %46 = vector.load %arg14[%c4_46, %c0_47, %c0_48] : memref<14x16x128xbf16, #tpu.memory_space<vmem>>, vector<10x16x128xbf16>
    %47 = vector.shape_cast %46 : vector<10x16x128xbf16> to vector<160x128xbf16>
    %c0_49 = arith.constant 0 : index
    %c512_50 = arith.constant 512 : index
    %48 = vector.load %arg13[%c0_49, %c512_50] : memref<448x640xbf16, #tpu.memory_space<vmem>>, vector<160x128xbf16>
    tpu.vector_store %arg13[%c0_49, %c512_50], %47 {strides = array<i32>} : memref<448x640xbf16, #tpu.memory_space<vmem>>, vector<160x128xbf16>,
    %c0_51 = arith.constant 0 : index
    %c0_52 = arith.constant 0 : index
    %49 = vector.load %arg13[%c0_51, %c0_52] : memref<448x640xbf16, #tpu.memory_space<vmem>>, vector<160x640xbf16>
    %c0_53 = arith.constant 0 : index
    %c0_54 = arith.constant 0 : index
    %50 = vector.load %arg4[%c0_53, %c0_54] : memref<640x256xbf16, #tpu.memory_space<vmem>>, vector<640x256xbf16>
    %cst_55 = arith.constant dense<0.000000e+00> : vector<160x256xf32>
    %51 = tpu.matmul %49, %50, %cst_55 {dimension_numbers = #tpu.dot_dimension_numbers<[1], [0], [0], [1], [0, 0, 1, 1], [], []>} : vector<160x640xbf16>, vector<640x256xbf16>, vector<160x256xf32> -> vector<160x256xf32>
    %c0_56 = arith.constant 0 : index
    %c0_57 = arith.constant 0 : index
    %52 = vector.load %arg5[%c0_56, %c0_57] : memref<1x256xf32, #tpu.memory_space<vmem>>, vector<1x256xf32>
    %53 = vector.broadcast %52 : vector<1x256xf32> to vector<160x256xf32>
    %54 = arith.addf %51, %53 : vector<160x256xf32>
    %cst_58 = arith.constant 0.000000e+00 : f32
    %55 = vector.broadcast %cst_58 : f32 to vector<160x256xf32>
    %56 = arith.maximumf %54, %55 : vector<160x256xf32>
    %57 = vector.extract_strided_slice %56 {offsets = [0, 0], sizes = [160, 128], strides = [1, 1]} : vector<160x256xf32> to vector<160x128xf32>
    %58 = vector.extract_strided_slice %56 {offsets = [0, 128], sizes = [160, 128], strides = [1, 1]} : vector<160x256xf32> to vector<160x128xf32>
    %59 = arith.maximumf %57, %58 : vector<160x128xf32>
    %60 = vector.shape_cast %59 : vector<160x128xf32> to vector<5x2x16x128xf32>
    %61 = vector.extract_strided_slice %60 {offsets = [0, 0, 0, 0], sizes = [5, 1, 16, 128], strides = [1, 1, 1, 1]} : vector<5x2x16x128xf32> to vector<5x1x16x128xf32>
    %62 = vector.shape_cast %61 : vector<5x1x16x128xf32> to vector<5x16x128xf32>
    %63 = vector.extract_strided_slice %60 {offsets = [0, 1, 0, 0], sizes = [5, 1, 16, 128], strides = [1, 1, 1, 1]} : vector<5x2x16x128xf32> to vector<5x1x16x128xf32>
    %64 = vector.shape_cast %63 : vector<5x1x16x128xf32> to vector<5x16x128xf32>
    %65 = arith.maximumf %62, %64 : vector<5x16x128xf32>
    %66 = arith.truncf %65 : vector<5x16x128xf32> to vector<5x16x128xbf16>
    %67 = vector.extract_strided_slice %66 {offsets = [0, 0, 0], sizes = [1, 16, 128], strides = [1, 1, 1]} : vector<5x16x128xbf16> to vector<1x16x128xbf16>
    %68 = vector.shape_cast %67 : vector<1x16x128xbf16> to vector<16x128xbf16>
    %c0_59 = arith.constant 0 : index
    %c0_60 = arith.constant 0 : index
    %c0_61 = arith.constant 0 : index
    %69 = vector.load %arg6[%c0_59, %c0_60, %c0_61] : memref<5x128x128xbf16, #tpu.memory_space<vmem>>, vector<1x128x128xbf16>
    %70 = vector.shape_cast %69 : vector<1x128x128xbf16> to vector<128x128xbf16>
    %cst_62 = arith.constant dense<0.000000e+00> : vector<16x128xf32>
    %71 = tpu.matmul %68, %70, %cst_62 {dimension_numbers = #tpu.dot_dimension_numbers<[1], [0], [0], [1], [0, 0, 1, 1], [], []>} : vector<16x128xbf16>, vector<128x128xbf16>, vector<16x128xf32> -> vector<16x128xf32>
    %72 = vector.extract_strided_slice %66 {offsets = [1, 0, 0], sizes = [1, 16, 128], strides = [1, 1, 1]} : vector<5x16x128xbf16> to vector<1x16x128xbf16>
    %73 = vector.shape_cast %72 : vector<1x16x128xbf16> to vector<16x128xbf16>
    %c1_63 = arith.constant 1 : index
    %c0_64 = arith.constant 0 : index
    %c0_65 = arith.constant 0 : index
    %74 = vector.load %arg6[%c1_63, %c0_64, %c0_65] : memref<5x128x128xbf16, #tpu.memory_space<vmem>>, vector<1x128x128xbf16>
    %75 = vector.shape_cast %74 : vector<1x128x128xbf16> to vector<128x128xbf16>
    %cst_66 = arith.constant dense<0.000000e+00> : vector<16x128xf32>
    %76 = tpu.matmul %73, %75, %cst_66 {dimension_numbers = #tpu.dot_dimension_numbers<[1], [0], [0], [1], [0, 0, 1, 1], [], []>} : vector<16x128xbf16>, vector<128x128xbf16>, vector<16x128xf32> -> vector<16x128xf32>
    %77 = arith.addf %71, %76 : vector<16x128xf32>
    %78 = vector.extract_strided_slice %66 {offsets = [2, 0, 0], sizes = [1, 16, 128], strides = [1, 1, 1]} : vector<5x16x128xbf16> to vector<1x16x128xbf16>
    %79 = vector.shape_cast %78 : vector<1x16x128xbf16> to vector<16x128xbf16>
    %c2_67 = arith.constant 2 : index
    %c0_68 = arith.constant 0 : index
    %c0_69 = arith.constant 0 : index
    %80 = vector.load %arg6[%c2_67, %c0_68, %c0_69] : memref<5x128x128xbf16, #tpu.memory_space<vmem>>, vector<1x128x128xbf16>
    %81 = vector.shape_cast %80 : vector<1x128x128xbf16> to vector<128x128xbf16>
    %cst_70 = arith.constant dense<0.000000e+00> : vector<16x128xf32>
    %82 = tpu.matmul %79, %81, %cst_70 {dimension_numbers = #tpu.dot_dimension_numbers<[1], [0], [0], [1], [0, 0, 1, 1], [], []>} : vector<16x128xbf16>, vector<128x128xbf16>, vector<16x128xf32> -> vector<16x128xf32>
    %83 = arith.addf %77, %82 : vector<16x128xf32>
    %84 = vector.extract_strided_slice %66 {offsets = [3, 0, 0], sizes = [1, 16, 128], strides = [1, 1, 1]} : vector<5x16x128xbf16> to vector<1x16x128xbf16>
    %85 = vector.shape_cast %84 : vector<1x16x128xbf16> to vector<16x128xbf16>
    %c3_71 = arith.constant 3 : index
    %c0_72 = arith.constant 0 : index
    %c0_73 = arith.constant 0 : index
    %86 = vector.load %arg6[%c3_71, %c0_72, %c0_73] : memref<5x128x128xbf16, #tpu.memory_space<vmem>>, vector<1x128x128xbf16>
    %87 = vector.shape_cast %86 : vector<1x128x128xbf16> to vector<128x128xbf16>
    %cst_74 = arith.constant dense<0.000000e+00> : vector<16x128xf32>
    %88 = tpu.matmul %85, %87, %cst_74 {dimension_numbers = #tpu.dot_dimension_numbers<[1], [0], [0], [1], [0, 0, 1, 1], [], []>} : vector<16x128xbf16>, vector<128x128xbf16>, vector<16x128xf32> -> vector<16x128xf32>
    %89 = arith.addf %83, %88 : vector<16x128xf32>
    %90 = vector.extract_strided_slice %66 {offsets = [4, 0, 0], sizes = [1, 16, 128], strides = [1, 1, 1]} : vector<5x16x128xbf16> to vector<1x16x128xbf16>
    %91 = vector.shape_cast %90 : vector<1x16x128xbf16> to vector<16x128xbf16>
    %c4_75 = arith.constant 4 : index
    %c0_76 = arith.constant 0 : index
    %c0_77 = arith.constant 0 : index
    %92 = vector.load %arg6[%c4_75, %c0_76, %c0_77] : memref<5x128x128xbf16, #tpu.memory_space<vmem>>, vector<1x128x128xbf16>
    %93 = vector.shape_cast %92 : vector<1x128x128xbf16> to vector<128x128xbf16>
    %cst_78 = arith.constant dense<0.000000e+00> : vector<16x128xf32>
    %94 = tpu.matmul %91, %93, %cst_78 {dimension_numbers = #tpu.dot_dimension_numbers<[1], [0], [0], [1], [0, 0, 1, 1], [], []>} : vector<16x128xbf16>, vector<128x128xbf16>, vector<16x128xf32> -> vector<16x128xf32>
    %95 = arith.addf %89, %94 : vector<16x128xf32>
    %c0_79 = arith.constant 0 : index
    %c0_80 = arith.constant 0 : index
    %96 = vector.load %arg7[%c0_79, %c0_80] : memref<1x128xf32, #tpu.memory_space<vmem>>, vector<1x128xf32>
    %97 = vector.broadcast %96 : vector<1x128xf32> to vector<16x128xf32>
    %98 = arith.addf %95, %97 : vector<16x128xf32>
    %cst_81 = arith.constant 0.000000e+00 : f32
    %99 = vector.broadcast %cst_81 : f32 to vector<16x128xf32>
    %100 = arith.maximumf %98, %99 : vector<16x128xf32>
    %101 = arith.truncf %100 : vector<16x128xf32> to vector<16x128xbf16>
    %c0_82 = arith.constant 0 : index
    %c0_83 = arith.constant 0 : index
    %102 = vector.load %arg8[%c0_82, %c0_83] : memref<128x128xbf16, #tpu.memory_space<vmem>>, vector<128x128xbf16>
    %cst_84 = arith.constant dense<0.000000e+00> : vector<16x128xf32>
    %103 = tpu.matmul %101, %102, %cst_84 {dimension_numbers = #tpu.dot_dimension_numbers<[1], [0], [0], [1], [0, 0, 1, 1], [], []>} : vector<16x128xbf16>, vector<128x128xbf16>, vector<16x128xf32> -> vector<16x128xf32>
    %c0_85 = arith.constant 0 : index
    %c0_86 = arith.constant 0 : index
    %104 = vector.load %arg9[%c0_85, %c0_86] : memref<1x128xf32, #tpu.memory_space<vmem>>, vector<1x128xf32>
    %105 = vector.broadcast %104 : vector<1x128xf32> to vector<16x128xf32>
    %106 = arith.addf %103, %105 : vector<16x128xf32>
    %cst_87 = arith.constant 0.000000e+00 : f32
    %107 = vector.broadcast %cst_87 : f32 to vector<16x128xf32>
    %108 = arith.maximumf %106, %107 : vector<16x128xf32>
    %109 = arith.truncf %108 : vector<16x128xf32> to vector<16x128xbf16>
    %c0_88 = arith.constant 0 : index
    %c0_89 = arith.constant 0 : index
    %110 = vector.load %arg10[%c0_88, %c0_89] : memref<128x128xbf16, #tpu.memory_space<vmem>>, vector<128x128xbf16>
    %cst_90 = arith.constant dense<0.000000e+00> : vector<16x128xf32>
    %111 = tpu.matmul %109, %110, %cst_90 {dimension_numbers = #tpu.dot_dimension_numbers<[1], [0], [0], [1], [0, 0, 1, 1], [], []>} : vector<16x128xbf16>, vector<128x128xbf16>, vector<16x128xf32> -> vector<16x128xf32>
    %c0_91 = arith.constant 0 : index
    %c0_92 = arith.constant 0 : index
    %112 = vector.load %arg11[%c0_91, %c0_92] : memref<1x128xf32, #tpu.memory_space<vmem>>, vector<1x128xf32>
    %113 = vector.broadcast %112 : vector<1x128xf32> to vector<16x128xf32>
    %114 = arith.addf %111, %113 : vector<16x128xf32>
    %c0_93 = arith.constant 0 : index
    %c0_94 = arith.constant 0 : index
    %115 = vector.load %arg12[%c0_93, %c0_94] : memref<16x128xf32, #tpu.memory_space<vmem>>, vector<16x128xf32>
    tpu.vector_store %arg12[%c0_93, %c0_94], %114 {strides = array<i32>} : memref<16x128xf32, #tpu.memory_space<vmem>>, vector<16x128xf32>,
    return
  }
  func.func @transform_0(%arg0: i32) -> (i32, i32, i32) {
    %c0_i32 = arith.constant 0 : i32
    %c0_i32_0 = arith.constant 0 : i32
    %c0_i32_1 = arith.constant 0 : i32
    return %c0_i32, %arg0, %c0_i32_0 : i32, i32, i32
  }
  func.func @transform_1(%arg0: i32) -> (i32, i32) {
    %c0_i32 = arith.constant 0 : i32
    %c0_i32_0 = arith.constant 0 : i32
    %c0_i32_1 = arith.constant 0 : i32
    return %c0_i32, %c0_i32_0 : i32, i32
  }
  func.func @transform_2(%arg0: i32) -> (i32, i32) {
    %c0_i32 = arith.constant 0 : i32
    %c0_i32_0 = arith.constant 0 : i32
    %c0_i32_1 = arith.constant 0 : i32
    return %c0_i32, %c0_i32_0 : i32, i32
  }
  func.func @transform_3(%arg0: i32) -> (i32, i32) {
    %c0_i32 = arith.constant 0 : i32
    %c0_i32_0 = arith.constant 0 : i32
    %c0_i32_1 = arith.constant 0 : i32
    return %c0_i32, %c0_i32_0 : i32, i32
  }
  func.func @transform_4(%arg0: i32) -> (i32, i32) {
    %c0_i32 = arith.constant 0 : i32
    %c0_i32_0 = arith.constant 0 : i32
    %c0_i32_1 = arith.constant 0 : i32
    return %c0_i32, %c0_i32_0 : i32, i32
  }
  func.func @transform_5(%arg0: i32) -> (i32, i32, i32) {
    %c0_i32 = arith.constant 0 : i32
    %c0_i32_0 = arith.constant 0 : i32
    %c0_i32_1 = arith.constant 0 : i32
    %c0_i32_2 = arith.constant 0 : i32
    return %c0_i32, %c0_i32_0, %c0_i32_1 : i32, i32, i32
  }
  func.func @transform_6(%arg0: i32) -> (i32, i32) {
    %c0_i32 = arith.constant 0 : i32
    %c0_i32_0 = arith.constant 0 : i32
    %c0_i32_1 = arith.constant 0 : i32
    return %c0_i32, %c0_i32_0 : i32, i32
  }
  func.func @transform_7(%arg0: i32) -> (i32, i32) {
    %c0_i32 = arith.constant 0 : i32
    %c0_i32_0 = arith.constant 0 : i32
    %c0_i32_1 = arith.constant 0 : i32
    return %c0_i32, %c0_i32_0 : i32, i32
  }
  func.func @transform_8(%arg0: i32) -> (i32, i32) {
    %c0_i32 = arith.constant 0 : i32
    %c0_i32_0 = arith.constant 0 : i32
    %c0_i32_1 = arith.constant 0 : i32
    return %c0_i32, %c0_i32_0 : i32, i32
  }
  func.func @transform_9(%arg0: i32) -> (i32, i32) {
    %c0_i32 = arith.constant 0 : i32
    %c0_i32_0 = arith.constant 0 : i32
    %c0_i32_1 = arith.constant 0 : i32
    return %c0_i32, %c0_i32_0 : i32, i32
  }
  func.func @transform_10(%arg0: i32) -> (i32, i32) {
    %c0_i32 = arith.constant 0 : i32
    %c0_i32_0 = arith.constant 0 : i32
    %c0_i32_1 = arith.constant 0 : i32
    return %c0_i32, %c0_i32_0 : i32, i32
  }
  func.func @transform_11(%arg0: i32) -> (i32, i32) {
    %c0_i32 = arith.constant 0 : i32
    %c0_i32_0 = arith.constant 0 : i32
    return %arg0, %c0_i32 : i32, i32
  }
}

</mosaic_0001>

<llo_original>
// kernel: net_forward.1
$region0: #{net_forward.1}
  #allocation0 [shape = 'u32[]', space=smem, size = 0x4, offset = 0x4, fixed_abs, tag = 'smem constant byte address 0x4 - core index']
  #allocation1 [shape = 'u32[144,128]{1,0:T(1,128)}', space=vmem, size = 0x12000, scoped, tag = 'internal scratch']
  #allocation2 [shape = 'bf16[448,640]{1,0:T(8,128)(2,1)}', space=vmem, size = 0x8c000, scoped, tag = 'scratch operand']
  #allocation3 [shape = 'bf16[14,16,128]{2,1,0:T(8,128)(2,1)}', space=vmem, size = 0xe000, scoped, tag = 'scratch operand']
  %s0 = inlined_call_operand.vmem [shape: bf16[32,16,128], index: 0, kind: input, shape index: {}]
  %s1 = inlined_call_operand.vmem [shape: bf16[640,256], index: 1, kind: input, shape index: {}]
  %s2 = inlined_call_operand.vmem [shape: f32[1,256], index: 2, kind: input, shape index: {}]
  %s3 = inlined_call_operand.hbm [shape: bf16[640,256], index: 3, kind: input, shape index: {}]
  %s4 = inlined_call_operand.vmem [shape: f32[1,256], index: 4, kind: input, shape index: {}]
  %s5 = inlined_call_operand.hbm [shape: bf16[5,128,128], index: 5, kind: input, shape index: {}]
  %s6 = inlined_call_operand.vmem [shape: f32[1,128], index: 6, kind: input, shape index: {}]
  %s7 = inlined_call_operand.vmem [shape: bf16[128,128], index: 7, kind: input, shape index: {}]
  %s8 = inlined_call_operand.vmem [shape: f32[1,128], index: 8, kind: input, shape index: {}]
  %s9 = inlined_call_operand.vmem [shape: bf16[128,128], index: 9, kind: input, shape index: {}]
  %s10 = inlined_call_operand.vmem [shape: f32[1,128], index: 10, kind: input, shape index: {}]
  %s11 = inlined_call_operand.vmem [shape: f32[16,128], index: 11, kind: output, shape index: {}]
  %s12 = sld [smem:[#allocation0]]
  $region62: #{net_forward.1} parent=0
    _
  %s14 = ssub.s32 1, %s12
  %s15 = scalar_select 0, %s14, %s12
  $region1: #{net_forward.1} parent=0
    #allocation4 [shape = 'u8[327680]{0}', space=vmem, size = 0x50000, scoped, tag = 'input window, operand 3, single buffered']
    #allocation5 [shape = 's32[1]{0}', space=sflag, size = 0x4, scoped, tag = 'scoped memory for net_forward.1']
    #allocation6 [shape = 'u8[163840]{0}', space=vmem, size = 0x28000, scoped, tag = 'input window, operand 5, single buffered']
    #allocation7 [shape = 's32[1]{0}', space=sflag, size = 0x4, scoped, tag = 'scoped memory for net_forward.1']
    %16 = vsyncpa [#allocation5], 0
    %17 = vsyncpa [#allocation7], 0
    // Predicated region
    $region2: #{net_forward.1} parent=1 // pred_check
      _
    $region3: #{net_forward.1} parent=1 // pred_check_branch
      %19 = sbr.rel (0) target = $region5
    $region4: #{net_forward.1} parent=1 // pred_region
      _
    $region5: #{net_forward.1} parent=1 // pred_fallthru
      _
    // Predicated region
    $region6: #{net_forward.1} parent=1 // pred_check
      _
    $region7: #{net_forward.1} parent=1 // pred_check_branch
      %21 = sbr.rel (0) target = $region9
    $region8: #{net_forward.1} parent=1 // pred_region
      _
    $region9: #{net_forward.1} parent=1 // pred_fallthru
      _
    // Predicated region
    $region10: #{net_forward.1} parent=1 // pred_check
      _
    $region11: #{net_forward.1} parent=1 // pred_check_branch
      %23 = sbr.rel (0) target = $region13
    $region12: #{net_forward.1} parent=1 // pred_region
      _
    $region13: #{net_forward.1} parent=1 // pred_fallthru
      _
    // Predicated region
    $region14: #{net_forward.1} parent=1 // pred_check
      _
    $region15: #{net_forward.1} parent=1 // pred_check_branch
      %25 = sbr.rel (0) target = $region17
    $region16: #{net_forward.1} parent=1 // pred_region
      %s27 = ssub.s32 10240, 10240
      %28 = vsyncadd [#allocation5], %s27
      %s29 = sshll.u32 [#allocation4], 4
      %s30 = int_to_ptr.vmem [resolvable:$true] %s29
      %35 = dma.hbm_to_vmem [thread:$0]  %s3, 10240, %s30, [#allocation5], 128, 128, 8
    $region17: #{net_forward.1} parent=1 // pred_fallthru
      _
    // Predicated region
    $region18: #{net_forward.1} parent=1 // pred_check
      _
    $region19: #{net_forward.1} parent=1 // pred_check_branch
      %37 = sbr.rel (0) target = $region21
    $region20: #{net_forward.1} parent=1 // pred_region
      _
    $region21: #{net_forward.1} parent=1 // pred_fallthru
      _
    // Predicated region
    $region22: #{net_forward.1} parent=1 // pred_check
      _
    $region23: #{net_forward.1} parent=1 // pred_check_branch
      %39 = sbr.rel (0) target = $region25
    $region24: #{net_forward.1} parent=1 // pred_region
      %s41 = ssub.s32 5120, 5120
      %42 = vsyncadd [#allocation7], %s41
      %s43 = sshll.u32 [#allocation6], 4
      %s44 = int_to_ptr.vmem [resolvable:$true] %s43
      %49 = dma.hbm_to_vmem [thread:$0]  %s5, 5120, %s44, [#allocation7], 64, 64, 4
    $region25: #{net_forward.1} parent=1 // pred_fallthru
      _
    // Predicated region
    $region26: #{net_forward.1} parent=1 // pred_check
      _
    $region27: #{net_forward.1} parent=1 // pred_check_branch
      %51 = sbr.rel (0) target = $region29
    $region28: #{net_forward.1} parent=1 // pred_region
      _
    $region29: #{net_forward.1} parent=1 // pred_fallthru
      _
    // Predicated region
    $region30: #{net_forward.1} parent=1 // pred_check
      _
    $region31: #{net_forward.1} parent=1 // pred_check_branch
      %53 = sbr.rel (0) target = $region33
    $region32: #{net_forward.1} parent=1 // pred_region
      _
    $region33: #{net_forward.1} parent=1 // pred_fallthru
      _
    // Predicated region
    $region34: #{net_forward.1} parent=1 // pred_check
      _
    $region35: #{net_forward.1} parent=1 // pred_check_branch
      %55 = sbr.rel (0) target = $region37
    $region36: #{net_forward.1} parent=1 // pred_region
      _
    $region37: #{net_forward.1} parent=1 // pred_fallthru
      _
    // Predicated region
    $region38: #{net_forward.1} parent=1 // pred_check
      _
    $region39: #{net_forward.1} parent=1 // pred_check_branch
      %57 = sbr.rel (0) target = $region41
    $region40: #{net_forward.1} parent=1 // pred_region
      _
    $region41: #{net_forward.1} parent=1 // pred_fallthru
      _
    // Predicated region
    $region42: #{net_forward.1} parent=1 // pred_check
      _
    $region43: #{net_forward.1} parent=1 // pred_check_branch
      %59 = sbr.rel (0) target = $region45
    $region44: #{net_forward.1} parent=1 // pred_region
      _
    $region45: #{net_forward.1} parent=1 // pred_fallthru
      _
    // Predicated region
    $region46: #{net_forward.1} parent=1 // pred_check
      _
    $region47: #{net_forward.1} parent=1 // pred_check_branch
      %61 = sbr.rel (0) target = $region49
    $region48: #{net_forward.1} parent=1 // pred_region
      %62 = dma.done [#allocation5], 10240
    $region49: #{net_forward.1} parent=1 // pred_fallthru
      _
    // Predicated region
    $region50: #{net_forward.1} parent=1 // pred_check
      _
    $region51: #{net_forward.1} parent=1 // pred_check_branch
      %64 = sbr.rel (0) target = $region53
    $region52: #{net_forward.1} parent=1 // pred_region
      %65 = dma.done [#allocation7], 5120
    $region53: #{net_forward.1} parent=1 // pred_fallthru
      _
    %v67 = vld [vmem:[%s0] sm:$0xf]
    %v68 = vld [vmem:[%s0 + $0x4] sm:$0xf]
    %v69 = vld [vmem:[%s0 + $0x8] sm:$0xf]
    %v70 = vld [vmem:[%s0 + $0xc] sm:$0xf]
    %v71 = vld [vmem:[%s0 + $0x10] sm:$0xf]
    %v72 = vld [vmem:[%s0 + $0x14] sm:$0xf]
    %v73 = vld [vmem:[%s0 + $0x18] sm:$0xf]
    %v74 = vld [vmem:[%s0 + $0x1c] sm:$0xf]
    %v75 = vld [vmem:[%s0 + $0x20] sm:$0xf]
    %v76 = vld [vmem:[%s0 + $0x24] sm:$0xf]
    %v77 = vld [vmem:[%s0 + $0x28] sm:$0xf]
    %v78 = vld [vmem:[%s0 + $0x2c] sm:$0xf]
    %v79 = vld [vmem:[%s0 + $0x30] sm:$0xf]
    %v80 = vld [vmem:[%s0 + $0x34] sm:$0xf]
    %v81 = vld [vmem:[%s0 + $0x38] sm:$0xf]
    %v82 = vld [vmem:[%s0 + $0x3c] sm:$0xf]
    %v83 = vld [vmem:[%s0 + $0x40] sm:$0xf]
    %v84 = vld [vmem:[%s0 + $0x44] sm:$0xf]
    %v85 = vld [vmem:[%s0 + $0x48] sm:$0xf]
    %v86 = vld [vmem:[%s0 + $0x4c] sm:$0xf]
    %v87 = vld [vmem:[%s0 + $0x50] sm:$0xf]
    %v88 = vld [vmem:[%s0 + $0x54] sm:$0xf]
    %v89 = vld [vmem:[%s0 + $0x58] sm:$0xf]
    %v90 = vld [vmem:[%s0 + $0x5c] sm:$0xf]
    %v91 = vld [vmem:[%s0 + $0x60] sm:$0xf]
    %v92 = vld [vmem:[%s0 + $0x64] sm:$0xf]
    %v93 = vld [vmem:[%s0 + $0x68] sm:$0xf]
    %v94 = vld [vmem:[%s0 + $0x6c] sm:$0xf]
    %v95 = vld [vmem:[%s0 + $0x70] sm:$0xf]
    %v96 = vld [vmem:[%s0 + $0x74] sm:$0xf]
    %v97 = vld [vmem:[%s0 + $0x78] sm:$0xf]
    %v98 = vld [vmem:[%s0 + $0x7c] sm:$0xf]
    %v99 = vld [vmem:[%s0 + $0x80] sm:$0xf]
    %v100 = vld [vmem:[%s0 + $0x84] sm:$0xf]
    %v101 = vld [vmem:[%s0 + $0x88] sm:$0xf]
    %v102 = vld [vmem:[%s0 + $0x8c] sm:$0xf]
    %v103 = vld [vmem:[%s0 + $0x90] sm:$0xf]
    %v104 = vld [vmem:[%s0 + $0x94] sm:$0xf]
    %v105 = vld [vmem:[%s0 + $0x98] sm:$0xf]
    %v106 = vld [vmem:[%s0 + $0x9c] sm:$0xf]
    %v107 = vld [vmem:[%s0 + $0xa0] sm:$0xf]
    %v108 = vld [vmem:[%s0 + $0xa4] sm:$0xf]
    %v109 = vld [vmem:[%s0 + $0xa8] sm:$0xf]
    %v110 = vld [vmem:[%s0 + $0xac] sm:$0xf]
    %v111 = vld [vmem:[%s0 + $0xb0] sm:$0xf]
    %v112 = vld [vmem:[%s0 + $0xb4] sm:$0xf]
    %v113 = vld [vmem:[%s0 + $0xb8] sm:$0xf]
    %v114 = vld [vmem:[%s0 + $0xbc] sm:$0xf]
    %v115 = vld [vmem:[%s0 + $0xc0] sm:$0xf]
    %v116 = vld [vmem:[%s0 + $0xc4] sm:$0xf]
    %v117 = vld [vmem:[%s0 + $0xc8] sm:$0xf]
    %v118 = vld [vmem:[%s0 + $0xcc] sm:$0xf]
    %v119 = vld [vmem:[%s0 + $0xd0] sm:$0xf]
    %v120 = vld [vmem:[%s0 + $0xd4] sm:$0xf]
    %v121 = vld [vmem:[%s0 + $0xd8] sm:$0xf]
    %v122 = vld [vmem:[%s0 + $0xdc] sm:$0xf]
    %123 = vst [vmem:[#allocation2] sm:$0xf] %v67
    %124 = vst [vmem:[#allocation2 + $0x14] sm:$0xf] %v68
    %125 = vst [vmem:[#allocation2 + $0x28] sm:$0xf] %v69
    %126 = vst [vmem:[#allocation2 + $0x3c] sm:$0xf] %v70
    %127 = vst [vmem:[#allocation2 + $0x50] sm:$0xf] %v71
    %128 = vst [vmem:[#allocation2 + $0x64] sm:$0xf] %v72
    %129 = vst [vmem:[#allocation2 + $0x78] sm:$0xf] %v73
    %130 = vst [vmem:[#allocation2 + $0x8c] sm:$0xf] %v74
    %131 = vst [vmem:[#allocation2 + $0xa0] sm:$0xf] %v75
    %132 = vst [vmem:[#allocation2 + $0xb4] sm:$0xf] %v76
    %133 = vst [vmem:[#allocation2 + $0xc8] sm:$0xf] %v77
    %134 = vst [vmem:[#allocation2 + $0xdc] sm:$0xf] %v78
    %135 = vst [vmem:[#allocation2 + $0xf0] sm:$0xf] %v79
    %136 = vst [vmem:[#allocation2 + $0x104] sm:$0xf] %v80
    %137 = vst [vmem:[#allocation2 + $0x118] sm:$0xf] %v81
    %138 = vst [vmem:[#allocation2 + $0x12c] sm:$0xf] %v82
    %139 = vst [vmem:[#allocation2 + $0x140] sm:$0xf] %v83
    %140 = vst [vmem:[#allocation2 + $0x154] sm:$0xf] %v84
    %141 = vst [vmem:[#allocation2 + $0x168] sm:$0xf] %v85
    %142 = vst [vmem:[#allocation2 + $0x17c] sm:$0xf] %v86
    %143 = vst [vmem:[#allocation2 + $0x190] sm:$0xf] %v87
    %144 = vst [vmem:[#allocation2 + $0x1a4] sm:$0xf] %v88
    %145 = vst [vmem:[#allocation2 + $0x1b8] sm:$0xf] %v89
    %146 = vst [vmem:[#allocation2 + $0x1cc] sm:$0xf] %v90
    %147 = vst [vmem:[#allocation2 + $0x1e0] sm:$0xf] %v91
    %148 = vst [vmem:[#allocation2 + $0x1f4] sm:$0xf] %v92
    %149 = vst [vmem:[#allocation2 + $0x208] sm:$0xf] %v93
    %150 = vst [vmem:[#allocation2 + $0x21c] sm:$0xf] %v94
    %151 = vst [vmem:[#allocation2 + $0x230] sm:$0xf] %v95
    %152 = vst [vmem:[#allocation2 + $0x244] sm:$0xf] %v96
    %153 = vst [vmem:[#allocation2 + $0x258] sm:$0xf] %v97
    %154 = vst [vmem:[#allocation2 + $0x26c] sm:$0xf] %v98
    %155 = vst [vmem:[#allocation2 + $0x280] sm:$0xf] %v99
    %156 = vst [vmem:[#allocation2 + $0x294] sm:$0xf] %v100
    %157 = vst [vmem:[#allocation2 + $0x2a8] sm:$0xf] %v101
    %158 = vst [vmem:[#allocation2 + $0x2bc] sm:$0xf] %v102
    %159 = vst [vmem:[#allocation2 + $0x2d0] sm:$0xf] %v103
    %160 = vst [vmem:[#allocation2 + $0x2e4] sm:$0xf] %v104
    %161 = vst [vmem:[#allocation2 + $0x2f8] sm:$0xf] %v105
    %162 = vst [vmem:[#allocation2 + $0x30c] sm:$0xf] %v106
    %163 = vst [vmem:[#allocation2 + $0x320] sm:$0xf] %v107
    %164 = vst [vmem:[#allocation2 + $0x334] sm:$0xf] %v108
    %165 = vst [vmem:[#allocation2 + $0x348] sm:$0xf] %v109
    %166 = vst [vmem:[#allocation2 + $0x35c] sm:$0xf] %v110
    %167 = vst [vmem:[#allocation2 + $0x370] sm:$0xf] %v111
    %168 = vst [vmem:[#allocation2 + $0x384] sm:$0xf] %v112
    %169 = vst [vmem:[#allocation2 + $0x398] sm:$0xf] %v113
    %170 = vst [vmem:[#allocation2 + $0x3ac] sm:$0xf] %v114
    %171 = vst [vmem:[#allocation2 + $0x3c0] sm:$0xf] %v115
    %172 = vst [vmem:[#allocation2 + $0x3d4] sm:$0xf] %v116
    %173 = vst [vmem:[#allocation2 + $0x3e8] sm:$0xf] %v117
    %174 = vst [vmem:[#allocation2 + $0x3fc] sm:$0xf] %v118
    %175 = vst [vmem:[#allocation2 + $0x410] sm:$0xf] %v119
    %176 = vst [vmem:[#allocation2 + $0x424] sm:$0xf] %v120
    %177 = vst [vmem:[#allocation2 + $0x438] sm:$0xf] %v121
    %178 = vst [vmem:[#allocation2 + $0x44c] sm:$0xf] %v122
    %s179 = scalar_lea.vmem %s0, 8
    %v180 = vld [vmem:[%s179] sm:$0xf]
    %v181 = vld [vmem:[%s179 + $0x4] sm:$0xf]
    %v182 = vld [vmem:[%s179 + $0x8] sm:$0xf]
    %v183 = vld [vmem:[%s179 + $0xc] sm:$0xf]
    %v184 = vld [vmem:[%s179 + $0x10] sm:$0xf]
    %v185 = vld [vmem:[%s179 + $0x14] sm:$0xf]
    %v186 = vld [vmem:[%s179 + $0x18] sm:$0xf]
    %v187 = vld [vmem:[%s179 + $0x1c] sm:$0xf]
    %v188 = vld [vmem:[%s179 + $0x20] sm:$0xf]
    %v189 = vld [vmem:[%s179 + $0x24] sm:$0xf]
    %v190 = vld [vmem:[%s179 + $0x28] sm:$0xf]
    %v191 = vld [vmem:[%s179 + $0x2c] sm:$0xf]
    %v192 = vld [vmem:[%s179 + $0x30] sm:$0xf]
    %v193 = vld [vmem:[%s179 + $0x34] sm:$0xf]
    %v194 = vld [vmem:[%s179 + $0x38] sm:$0xf]
    %v195 = vld [vmem:[%s179 + $0x3c] sm:$0xf]
    %v196 = vld [vmem:[%s179 + $0x40] sm:$0xf]
    %v197 = vld [vmem:[%s179 + $0x44] sm:$0xf]
    %v198 = vld [vmem:[%s179 + $0x48] sm:$0xf]
    %v199 = vld [vmem:[%s179 + $0x4c] sm:$0xf]
    %v200 = vld [vmem:[%s179 + $0x50] sm:$0xf]
    %v201 = vld [vmem:[%s179 + $0x54] sm:$0xf]
    %v202 = vld [vmem:[%s179 + $0x58] sm:$0xf]
    %v203 = vld [vmem:[%s179 + $0x5c] sm:$0xf]
    %v204 = vld [vmem:[%s179 + $0x60] sm:$0xf]
    %v205 = vld [vmem:[%s179 + $0x64] sm:$0xf]
    %v206 = vld [vmem:[%s179 + $0x68] sm:$0xf]
    %v207 = vld [vmem:[%s179 + $0x6c] sm:$0xf]
    %v208 = vld [vmem:[%s179 + $0x70] sm:$0xf]
    %v209 = vld [vmem:[%s179 + $0x74] sm:$0xf]
    %v210 = vld [vmem:[%s179 + $0x78] sm:$0xf]
    %v211 = vld [vmem:[%s179 + $0x7c] sm:$0xf]
    %v212 = vld [vmem:[%s179 + $0x80] sm:$0xf]
    %v213 = vld [vmem:[%s179 + $0x84] sm:$0xf]
    %v214 = vld [vmem:[%s179 + $0x88] sm:$0xf]
    %v215 = vld [vmem:[%s179 + $0x8c] sm:$0xf]
    %v216 = vld [vmem:[%s179 + $0x90] sm:$0xf]
    %v217 = vld [vmem:[%s179 + $0x94] sm:$0xf]
    %v218 = vld [vmem:[%s179 + $0x98] sm:$0xf]
    %v219 = vld [vmem:[%s179 + $0x9c] sm:$0xf]
    %v220 = vld [vmem:[%s179 + $0xa0] sm:$0xf]
    %v221 = vld [vmem:[%s179 + $0xa4] sm:$0xf]
    %v222 = vld [vmem:[%s179 + $0xa8] sm:$0xf]
    %v223 = vld [vmem:[%s179 + $0xac] sm:$0xf]
    %v224 = vld [vmem:[%s179 + $0xb0] sm:$0xf]
    %v225 = vld [vmem:[%s179 + $0xb4] sm:$0xf]
    %v226 = vld [vmem:[%s179 + $0xb8] sm:$0xf]
    %v227 = vld [vmem:[%s179 + $0xbc] sm:$0xf]
    %v228 = vld [vmem:[%s179 + $0xc0] sm:$0xf]
    %v229 = vld [vmem:[%s179 + $0xc4] sm:$0xf]
    %v230 = vld [vmem:[%s179 + $0xc8] sm:$0xf]
    %v231 = vld [vmem:[%s179 + $0xcc] sm:$0xf]
    %v232 = vld [vmem:[%s179 + $0xd0] sm:$0xf]
    %v233 = vld [vmem:[%s179 + $0xd4] sm:$0xf]
    %v234 = vld [vmem:[%s179 + $0xd8] sm:$0xf]
    %v235 = vld [vmem:[%s179 + $0xdc] sm:$0xf]
    %236 = vst [vmem:[#allocation2 + $0x4] sm:$0xf] %v180
    %237 = vst [vmem:[#allocation2 + $0x18] sm:$0xf] %v181
    %238 = vst [vmem:[#allocation2 + $0x2c] sm:$0xf] %v182
    %239 = vst [vmem:[#allocation2 + $0x40] sm:$0xf] %v183
    %240 = vst [vmem:[#allocation2 + $0x54] sm:$0xf] %v184
    %241 = vst [vmem:[#allocation2 + $0x68] sm:$0xf] %v185
    %242 = vst [vmem:[#allocation2 + $0x7c] sm:$0xf] %v186
    %243 = vst [vmem:[#allocation2 + $0x90] sm:$0xf] %v187
    %244 = vst [vmem:[#allocation2 + $0xa4] sm:$0xf] %v188
    %245 = vst [vmem:[#allocation2 + $0xb8] sm:$0xf] %v189
    %246 = vst [vmem:[#allocation2 + $0xcc] sm:$0xf] %v190
    %247 = vst [vmem:[#allocation2 + $0xe0] sm:$0xf] %v191
    %248 = vst [vmem:[#allocation2 + $0xf4] sm:$0xf] %v192
    %249 = vst [vmem:[#allocation2 + $0x108] sm:$0xf] %v193
    %250 = vst [vmem:[#allocation2 + $0x11c] sm:$0xf] %v194
    %251 = vst [vmem:[#allocation2 + $0x130] sm:$0xf] %v195
    %252 = vst [vmem:[#allocation2 + $0x144] sm:$0xf] %v196
    %253 = vst [vmem:[#allocation2 + $0x158] sm:$0xf] %v197
    %254 = vst [vmem:[#allocation2 + $0x16c] sm:$0xf] %v198
    %255 = vst [vmem:[#allocation2 + $0x180] sm:$0xf] %v199
    %256 = vst [vmem:[#allocation2 + $0x194] sm:$0xf] %v200
    %257 = vst [vmem:[#allocation2 + $0x1a8] sm:$0xf] %v201
    %258 = vst [vmem:[#allocation2 + $0x1bc] sm:$0xf] %v202
    %259 = vst [vmem:[#allocation2 + $0x1d0] sm:$0xf] %v203
    %260 = vst [vmem:[#allocation2 + $0x1e4] sm:$0xf] %v204
    %261 = vst [vmem:[#allocation2 + $0x1f8] sm:$0xf] %v205
    %262 = vst [vmem:[#allocation2 + $0x20c] sm:$0xf] %v206
    %263 = vst [vmem:[#allocation2 + $0x220] sm:$0xf] %v207
    %264 = vst [vmem:[#allocation2 + $0x234] sm:$0xf] %v208
    %265 = vst [vmem:[#allocation2 + $0x248] sm:$0xf] %v209
    %266 = vst [vmem:[#allocation2 + $0x25c] sm:$0xf] %v210
    %267 = vst [vmem:[#allocation2 + $0x270] sm:$0xf] %v211
    %268 = vst [vmem:[#allocation2 + $0x284] sm:$0xf] %v212
    %269 = vst [vmem:[#allocation2 + $0x298] sm:$0xf] %v213
    %270 = vst [vmem:[#allocation2 + $0x2ac] sm:$0xf] %v214
    %271 = vst [vmem:[#allocation2 + $0x2c0] sm:$0xf] %v215
    %272 = vst [vmem:[#allocation2 + $0x2d4] sm:$0xf] %v216
    %273 = vst [vmem:[#allocation2 + $0x2e8] sm:$0xf] %v217
    %274 = vst [vmem:[#allocation2 + $0x2fc] sm:$0xf] %v218
    %275 = vst [vmem:[#allocation2 + $0x310] sm:$0xf] %v219
    %276 = vst [vmem:[#allocation2 + $0x324] sm:$0xf] %v220
    %277 = vst [vmem:[#allocation2 + $0x338] sm:$0xf] %v221
    %278 = vst [vmem:[#allocation2 + $0x34c] sm:$0xf] %v222
    %279 = vst [vmem:[#allocation2 + $0x360] sm:$0xf] %v223
    %280 = vst [vmem:[#allocation2 + $0x374] sm:$0xf] %v224
    %281 = vst [vmem:[#allocation2 + $0x388] sm:$0xf] %v225
    %282 = vst [vmem:[#allocation2 + $0x39c] sm:$0xf] %v226
    %283 = vst [vmem:[#allocation2 + $0x3b0] sm:$0xf] %v227
    %284 = vst [vmem:[#allocation2 + $0x3c4] sm:$0xf] %v228
    %285 = vst [vmem:[#allocation2 + $0x3d8] sm:$0xf] %v229
    %286 = vst [vmem:[#allocation2 + $0x3ec] sm:$0xf] %v230
    %287 = vst [vmem:[#allocation2 + $0x400] sm:$0xf] %v231
    %288 = vst [vmem:[#allocation2 + $0x414] sm:$0xf] %v232
    %289 = vst [vmem:[#allocation2 + $0x428] sm:$0xf] %v233
    %290 = vst [vmem:[#allocation2 + $0x43c] sm:$0xf] %v234
    %291 = vst [vmem:[#allocation2 + $0x450] sm:$0xf] %v235
    %s292 = scalar_lea.vmem %s0, 16
    %v293 = vld [vmem:[%s292] sm:$0xf]
    %v294 = vld [vmem:[%s292 + $0x4] sm:$0xf]
    %v295 = vld [vmem:[%s292 + $0x8] sm:$0xf]
    %v296 = vld [vmem:[%s292 + $0xc] sm:$0xf]
    %v297 = vld [vmem:[%s292 + $0x10] sm:$0xf]
    %v298 = vld [vmem:[%s292 + $0x14] sm:$0xf]
    %v299 = vld [vmem:[%s292 + $0x18] sm:$0xf]
    %v300 = vld [vmem:[%s292 + $0x1c] sm:$0xf]
    %v301 = vld [vmem:[%s292 + $0x20] sm:$0xf]
    %v302 = vld [vmem:[%s292 + $0x24] sm:$0xf]
    %v303 = vld [vmem:[%s292 + $0x28] sm:$0xf]
    %v304 = vld [vmem:[%s292 + $0x2c] sm:$0xf]
    %v305 = vld [vmem:[%s292 + $0x30] sm:$0xf]
    %v306 = vld [vmem:[%s292 + $0x34] sm:$0xf]
    %v307 = vld [vmem:[%s292 + $0x38] sm:$0xf]
    %v308 = vld [vmem:[%s292 + $0x3c] sm:$0xf]
    %v309 = vld [vmem:[%s292 + $0x40] sm:$0xf]
    %v310 = vld [vmem:[%s292 + $0x44] sm:$0xf]
    %v311 = vld [vmem:[%s292 + $0x48] sm:$0xf]
    %v312 = vld [vmem:[%s292 + $0x4c] sm:$0xf]
    %v313 = vld [vmem:[%s292 + $0x50] sm:$0xf]
    %v314 = vld [vmem:[%s292 + $0x54] sm:$0xf]
    %v315 = vld [vmem:[%s292 + $0x58] sm:$0xf]
    %v316 = vld [vmem:[%s292 + $0x5c] sm:$0xf]
    %v317 = vld [vmem:[%s292 + $0x60] sm:$0xf]
    %v318 = vld [vmem:[%s292 + $0x64] sm:$0xf]
    %v319 = vld [vmem:[%s292 + $0x68] sm:$0xf]
    %v320 = vld [vmem:[%s292 + $0x6c] sm:$0xf]
    %v321 = vld [vmem:[%s292 + $0x70] sm:$0xf]
    %v322 = vld [vmem:[%s292 + $0x74] sm:$0xf]
    %v323 = vld [vmem:[%s292 + $0x78] sm:$0xf]
    %v324 = vld [vmem:[%s292 + $0x7c] sm:$0xf]
    %v325 = vld [vmem:[%s292 + $0x80] sm:$0xf]
    %v326 = vld [vmem:[%s292 + $0x84] sm:$0xf]
    %v327 = vld [vmem:[%s292 + $0x88] sm:$0xf]
    %v328 = vld [vmem:[%s292 + $0x8c] sm:$0xf]
    %v329 = vld [vmem:[%s292 + $0x90] sm:$0xf]
    %v330 = vld [vmem:[%s292 + $0x94] sm:$0xf]
    %v331 = vld [vmem:[%s292 + $0x98] sm:$0xf]
    %v332 = vld [vmem:[%s292 + $0x9c] sm:$0xf]
    %v333 = vld [vmem:[%s292 + $0xa0] sm:$0xf]
    %v334 = vld [vmem:[%s292 + $0xa4] sm:$0xf]
    %v335 = vld [vmem:[%s292 + $0xa8] sm:$0xf]
    %v336 = vld [vmem:[%s292 + $0xac] sm:$0xf]
    %v337 = vld [vmem:[%s292 + $0xb0] sm:$0xf]
    %v338 = vld [vmem:[%s292 + $0xb4] sm:$0xf]
    %v339 = vld [vmem:[%s292 + $0xb8] sm:$0xf]
    %v340 = vld [vmem:[%s292 + $0xbc] sm:$0xf]
    %v341 = vld [vmem:[%s292 + $0xc0] sm:$0xf]
    %v342 = vld [vmem:[%s292 + $0xc4] sm:$0xf]
    %v343 = vld [vmem:[%s292 + $0xc8] sm:$0xf]
    %v344 = vld [vmem:[%s292 + $0xcc] sm:$0xf]
    %v345 = vld [vmem:[%s292 + $0xd0] sm:$0xf]
    %v346 = vld [vmem:[%s292 + $0xd4] sm:$0xf]
    %v347 = vld [vmem:[%s292 + $0xd8] sm:$0xf]
    %v348 = vld [vmem:[%s292 + $0xdc] sm:$0xf]
    %349 = vst [vmem:[#allocation2 + $0x8] sm:$0xf] %v293
    %350 = vst [vmem:[#allocation2 + $0x1c] sm:$0xf] %v294
    %351 = vst [vmem:[#allocation2 + $0x30] sm:$0xf] %v295
    %352 = vst [vmem:[#allocation2 + $0x44] sm:$0xf] %v296
    %353 = vst [vmem:[#allocation2 + $0x58] sm:$0xf] %v297
    %354 = vst [vmem:[#allocation2 + $0x6c] sm:$0xf] %v298
    %355 = vst [vmem:[#allocation2 + $0x80] sm:$0xf] %v299
    %356 = vst [vmem:[#allocation2 + $0x94] sm:$0xf] %v300
    %357 = vst [vmem:[#allocation2 + $0xa8] sm:$0xf] %v301
    %358 = vst [vmem:[#allocation2 + $0xbc] sm:$0xf] %v302
    %359 = vst [vmem:[#allocation2 + $0xd0] sm:$0xf] %v303
    %360 = vst [vmem:[#allocation2 + $0xe4] sm:$0xf] %v304
    %361 = vst [vmem:[#allocation2 + $0xf8] sm:$0xf] %v305
    %362 = vst [vmem:[#allocation2 + $0x10c] sm:$0xf] %v306
    %363 = vst [vmem:[#allocation2 + $0x120] sm:$0xf] %v307
    %364 = vst [vmem:[#allocation2 + $0x134] sm:$0xf] %v308
    %365 = vst [vmem:[#allocation2 + $0x148] sm:$0xf] %v309
    %366 = vst [vmem:[#allocation2 + $0x15c] sm:$0xf] %v310
    %367 = vst [vmem:[#allocation2 + $0x170] sm:$0xf] %v311
    %368 = vst [vmem:[#allocation2 + $0x184] sm:$0xf] %v312
    %369 = vst [vmem:[#allocation2 + $0x198] sm:$0xf] %v313
    %370 = vst [vmem:[#allocation2 + $0x1ac] sm:$0xf] %v314
    %371 = vst [vmem:[#allocation2 + $0x1c0] sm:$0xf] %v315
    %372 = vst [vmem:[#allocation2 + $0x1d4] sm:$0xf] %v316
    %373 = vst [vmem:[#allocation2 + $0x1e8] sm:$0xf] %v317
    %374 = vst [vmem:[#allocation2 + $0x1fc] sm:$0xf] %v318
    %375 = vst [vmem:[#allocation2 + $0x210] sm:$0xf] %v319
    %376 = vst [vmem:[#allocation2 + $0x224] sm:$0xf] %v320
    %377 = vst [vmem:[#allocation2 + $0x238] sm:$0xf] %v321
    %378 = vst [vmem:[#allocation2 + $0x24c] sm:$0xf] %v322
    %379 = vst [vmem:[#allocation2 + $0x260] sm:$0xf] %v323
    %380 = vst [vmem:[#allocation2 + $0x274] sm:$0xf] %v324
    %381 = vst [vmem:[#allocation2 + $0x288] sm:$0xf] %v325
    %382 = vst [vmem:[#allocation2 + $0x29c] sm:$0xf] %v326
    %383 = vst [vmem:[#allocation2 + $0x2b0] sm:$0xf] %v327
    %384 = vst [vmem:[#allocation2 + $0x2c4] sm:$0xf] %v328
    %385 = vst [vmem:[#allocation2 + $0x2d8] sm:$0xf] %v329
    %386 = vst [vmem:[#allocation2 + $0x2ec] sm:$0xf] %v330
    %387 = vst [vmem:[#allocation2 + $0x300] sm:$0xf] %v331
    %388 = vst [vmem:[#allocation2 + $0x314] sm:$0xf] %v332
    %389 = vst [vmem:[#allocation2 + $0x328] sm:$0xf] %v333
    %390 = vst [vmem:[#allocation2 + $0x33c] sm:$0xf] %v334
    %391 = vst [vmem:[#allocation2 + $0x350] sm:$0xf] %v335
    %392 = vst [vmem:[#allocation2 + $0x364] sm:$0xf] %v336
    %393 = vst [vmem:[#allocation2 + $0x378] sm:$0xf] %v337
    %394 = vst [vmem:[#allocation2 + $0x38c] sm:$0xf] %v338
    %395 = vst [vmem:[#allocation2 + $0x3a0] sm:$0xf] %v339
    %396 = vst [vmem:[#allocation2 + $0x3b4] sm:$0xf] %v340
    %397 = vst [vmem:[#allocation2 + $0x3c8] sm:$0xf] %v341
    %398 = vst [vmem:[#allocation2 + $0x3dc] sm:$0xf] %v342
    %399 = vst [vmem:[#allocation2 + $0x3f0] sm:$0xf] %v343
    %400 = vst [vmem:[#allocation2 + $0x404] sm:$0xf] %v344
    %401 = vst [vmem:[#allocation2 + $0x418] sm:$0xf] %v345
    %402 = vst [vmem:[#allocation2 + $0x42c] sm:$0xf] %v346
    %403 = vst [vmem:[#allocation2 + $0x440] sm:$0xf] %v347
    %404 = vst [vmem:[#allocation2 + $0x454] sm:$0xf] %v348
    %s405 = scalar_lea.vmem %s0, 24
    %v406 = vld [vmem:[%s405] sm:$0xf]
    %v407 = vld [vmem:[%s405 + $0x4] sm:$0xf]
    %v408 = vld [vmem:[%s405 + $0x8] sm:$0xf]
    %v409 = vld [vmem:[%s405 + $0xc] sm:$0xf]
    %v410 = vld [vmem:[%s405 + $0x10] sm:$0xf]
    %v411 = vld [vmem:[%s405 + $0x14] sm:$0xf]
    %v412 = vld [vmem:[%s405 + $0x18] sm:$0xf]
    %v413 = vld [vmem:[%s405 + $0x1c] sm:$0xf]
    %v414 = vld [vmem:[%s405 + $0x20] sm:$0xf]
    %v415 = vld [vmem:[%s405 + $0x24] sm:$0xf]
    %v416 = vld [vmem:[%s405 + $0x28] sm:$0xf]
    %v417 = vld [vmem:[%s405 + $0x2c] sm:$0xf]
    %v418 = vld [vmem:[%s405 + $0x30] sm:$0xf]
    %v419 = vld [vmem:[%s405 + $0x34] sm:$0xf]
    %v420 = vld [vmem:[%s405 + $0x38] sm:$0xf]
    %v421 = vld [vmem:[%s405 + $0x3c] sm:$0xf]
    %v422 = vld [vmem:[%s405 + $0x40] sm:$0xf]
    %v423 = vld [vmem:[%s405 + $0x44] sm:$0xf]
    %v424 = vld [vmem:[%s405 + $0x48] sm:$0xf]
    %v425 = vld [vmem:[%s405 + $0x4c] sm:$0xf]
    %v426 = vld [vmem:[%s405 + $0x50] sm:$0xf]
    %v427 = vld [vmem:[%s405 + $0x54] sm:$0xf]
    %v428 = vld [vmem:[%s405 + $0x58] sm:$0xf]
    %v429 = vld [vmem:[%s405 + $0x5c] sm:$0xf]
    %v430 = vld [vmem:[%s405 + $0x60] sm:$0xf]
    %v431 = vld [vmem:[%s405 + $0x64] sm:$0xf]
    %v432 = vld [vmem:[%s405 + $0x68] sm:$0xf]
    %v433 = vld [vmem:[%s405 + $0x6c] sm:$0xf]
    %v434 = vld [vmem:[%s405 + $0x70] sm:$0xf]
    %v435 = vld [vmem:[%s405 + $0x74] sm:$0xf]
    %v436 = vld [vmem:[%s405 + $0x78] sm:$0xf]
    %v437 = vld [vmem:[%s405 + $0x7c] sm:$0xf]
    %v438 = vld [vmem:[%s405 + $0x80] sm:$0xf]
    %v439 = vld [vmem:[%s405 + $0x84] sm:$0xf]
    %v440 = vld [vmem:[%s405 + $0x88] sm:$0xf]
    %v441 = vld [vmem:[%s405 + $0x8c] sm:$0xf]
    %v442 = vld [vmem:[%s405 + $0x90] sm:$0xf]
    %v443 = vld [vmem:[%s405 + $0x94] sm:$0xf]
    %v444 = vld [vmem:[%s405 + $0x98] sm:$0xf]
    %v445 = vld [vmem:[%s405 + $0x9c] sm:$0xf]
    %v446 = vld [vmem:[%s405 + $0xa0] sm:$0xf]
    %v447 = vld [vmem:[%s405 + $0xa4] sm:$0xf]
    %v448 = vld [vmem:[%s405 + $0xa8] sm:$0xf]
    %v449 = vld [vmem:[%s405 + $0xac] sm:$0xf]
    %v450 = vld [vmem:[%s405 + $0xb0] sm:$0xf]
    %v451 = vld [vmem:[%s405 + $0xb4] sm:$0xf]
    %v452 = vld [vmem:[%s405 + $0xb8] sm:$0xf]
    %v453 = vld [vmem:[%s405 + $0xbc] sm:$0xf]
    %v454 = vld [vmem:[%s405 + $0xc0] sm:$0xf]
    %v455 = vld [vmem:[%s405 + $0xc4] sm:$0xf]
    %v456 = vld [vmem:[%s405 + $0xc8] sm:$0xf]
    %v457 = vld [vmem:[%s405 + $0xcc] sm:$0xf]
    %v458 = vld [vmem:[%s405 + $0xd0] sm:$0xf]
    %v459 = vld [vmem:[%s405 + $0xd4] sm:$0xf]
    %v460 = vld [vmem:[%s405 + $0xd8] sm:$0xf]
    %v461 = vld [vmem:[%s405 + $0xdc] sm:$0xf]
    %462 = vst [vmem:[#allocation2 + $0xc] sm:$0xf] %v406
    %463 = vst [vmem:[#allocation2 + $0x20] sm:$0xf] %v407
    %464 = vst [vmem:[#allocation2 + $0x34] sm:$0xf] %v408
    %465 = vst [vmem:[#allocation2 + $0x48] sm:$0xf] %v409
    %466 = vst [vmem:[#allocation2 + $0x5c] sm:$0xf] %v410
    %467 = vst [vmem:[#allocation2 + $0x70] sm:$0xf] %v411
    %468 = vst [vmem:[#allocation2 + $0x84] sm:$0xf] %v412
    %469 = vst [vmem:[#allocation2 + $0x98] sm:$0xf] %v413
    %470 = vst [vmem:[#allocation2 + $0xac] sm:$0xf] %v414
    %471 = vst [vmem:[#allocation2 + $0xc0] sm:$0xf] %v415
    %472 = vst [vmem:[#allocation2 + $0xd4] sm:$0xf] %v416
    %473 = vst [vmem:[#allocation2 + $0xe8] sm:$0xf] %v417
    %474 = vst [vmem:[#allocation2 + $0xfc] sm:$0xf] %v418
    %475 = vst [vmem:[#allocation2 + $0x110] sm:$0xf] %v419
    %476 = vst [vmem:[#allocation2 + $0x124] sm:$0xf] %v420
    %477 = vst [vmem:[#allocation2 + $0x138] sm:$0xf] %v421
    %478 = vst [vmem:[#allocation2 + $0x14c] sm:$0xf] %v422
    %479 = vst [vmem:[#allocation2 + $0x160] sm:$0xf] %v423
    %480 = vst [vmem:[#allocation2 + $0x174] sm:$0xf] %v424
    %481 = vst [vmem:[#allocation2 + $0x188] sm:$0xf] %v425
    %482 = vst [vmem:[#allocation2 + $0x19c] sm:$0xf] %v426
    %483 = vst [vmem:[#allocation2 + $0x1b0] sm:$0xf] %v427
    %484 = vst [vmem:[#allocation2 + $0x1c4] sm:$0xf] %v428
    %485 = vst [vmem:[#allocation2 + $0x1d8] sm:$0xf] %v429
    %486 = vst [vmem:[#allocation2 + $0x1ec] sm:$0xf] %v430
    %487 = vst [vmem:[#allocation2 + $0x200] sm:$0xf] %v431
    %488 = vst [vmem:[#allocation2 + $0x214] sm:$0xf] %v432
    %489 = vst [vmem:[#allocation2 + $0x228] sm:$0xf] %v433
    %490 = vst [vmem:[#allocation2 + $0x23c] sm:$0xf] %v434
    %491 = vst [vmem:[#allocation2 + $0x250] sm:$0xf] %v435
    %492 = vst [vmem:[#allocation2 + $0x264] sm:$0xf] %v436
    %493 = vst [vmem:[#allocation2 + $0x278] sm:$0xf] %v437
    %494 = vst [vmem:[#allocation2 + $0x28c] sm:$0xf] %v438
    %495 = vst [vmem:[#allocation2 + $0x2a0] sm:$0xf] %v439
    %496 = vst [vmem:[#allocation2 + $0x2b4] sm:$0xf] %v440
    %497 = vst [vmem:[#allocation2 + $0x2c8] sm:$0xf] %v441
    %498 = vst [vmem:[#allocation2 + $0x2dc] sm:$0xf] %v442
    %499 = vst [vmem:[#allocation2 + $0x2f0] sm:$0xf] %v443
    %500 = vst [vmem:[#allocation2 + $0x304] sm:$0xf] %v444
    %501 = vst [vmem:[#allocation2 + $0x318] sm:$0xf] %v445
    %502 = vst [vmem:[#allocation2 + $0x32c] sm:$0xf] %v446
    %503 = vst [vmem:[#allocation2 + $0x340] sm:$0xf] %v447
    %504 = vst [vmem:[#allocation2 + $0x354] sm:$0xf] %v448
    %505 = vst [vmem:[#allocation2 + $0x368] sm:$0xf] %v449
    %506 = vst [vmem:[#allocation2 + $0x37c] sm:$0xf] %v450
    %507 = vst [vmem:[#allocation2 + $0x390] sm:$0xf] %v451
    %508 = vst [vmem:[#allocation2 + $0x3a4] sm:$0xf] %v452
    %509 = vst [vmem:[#allocation2 + $0x3b8] sm:$0xf] %v453
    %510 = vst [vmem:[#allocation2 + $0x3cc] sm:$0xf] %v454
    %511 = vst [vmem:[#allocation2 + $0x3e0] sm:$0xf] %v455
    %512 = vst [vmem:[#allocation2 + $0x3f4] sm:$0xf] %v456
    %513 = vst [vmem:[#allocation2 + $0x408] sm:$0xf] %v457
    %514 = vst [vmem:[#allocation2 + $0x41c] sm:$0xf] %v458
    %515 = vst [vmem:[#allocation2 + $0x430] sm:$0xf] %v459
    %516 = vst [vmem:[#allocation2 + $0x444] sm:$0xf] %v460
    %517 = vst [vmem:[#allocation2 + $0x458] sm:$0xf] %v461
    %s518 = scalar_lea.vmem %s0, 32
    %v519 = vld [vmem:[%s518] sm:$0xf]
    %v520 = vld [vmem:[%s518 + $0x4] sm:$0xf]
    %v521 = vld [vmem:[%s518 + $0x8] sm:$0xf]
    %v522 = vld [vmem:[%s518 + $0xc] sm:$0xf]
    %v523 = vld [vmem:[%s518 + $0x10] sm:$0xf]
    %v524 = vld [vmem:[%s518 + $0x14] sm:$0xf]
    %v525 = vld [vmem:[%s518 + $0x18] sm:$0xf]
    %v526 = vld [vmem:[%s518 + $0x1c] sm:$0xf]
    %v527 = vld [vmem:[%s518 + $0x20] sm:$0xf]
    %v528 = vld [vmem:[%s518 + $0x24] sm:$0xf]
    %v529 = vld [vmem:[%s518 + $0x28] sm:$0xf]
    %v530 = vld [vmem:[%s518 + $0x2c] sm:$0xf]
    %v531 = vld [vmem:[%s518 + $0x30] sm:$0xf]
    %v532 = vld [vmem:[%s518 + $0x34] sm:$0xf]
    %v533 = vld [vmem:[%s518 + $0x38] sm:$0xf]
    %v534 = vld [vmem:[%s518 + $0x3c] sm:$0xf]
    %v535 = vld [vmem:[%s518 + $0x40] sm:$0xf]
    %v536 = vld [vmem:[%s518 + $0x44] sm:$0xf]
    %v537 = vld [vmem:[%s518 + $0x48] sm:$0xf]
    %v538 = vld [vmem:[%s518 + $0x4c] sm:$0xf]
    %v539 = vld [vmem:[%s518 + $0x50] sm:$0xf]
    %v540 = vld [vmem:[%s518 + $0x54] sm:$0xf]
    %v541 = vld [vmem:[%s518 + $0x58] sm:$0xf]
    %v542 = vld [vmem:[%s518 + $0x5c] sm:$0xf]
    %v543 = vld [vmem:[%s518 + $0x60] sm:$0xf]
    %v544 = vld [vmem:[%s518 + $0x64] sm:$0xf]
    %v545 = vld [vmem:[%s518 + $0x68] sm:$0xf]
    %v546 = vld [vmem:[%s518 + $0x6c] sm:$0xf]
    %v547 = vld [vmem:[%s518 + $0x70] sm:$0xf]
    %v548 = vld [vmem:[%s518 + $0x74] sm:$0xf]
    %v549 = vld [vmem:[%s518 + $0x78] sm:$0xf]
    %v550 = vld [vmem:[%s518 + $0x7c] sm:$0xf]
    %v551 = vld [vmem:[%s518 + $0x80] sm:$0xf]
    %v552 = vld [vmem:[%s518 + $0x84] sm:$0xf]
    %v553 = vld [vmem:[%s518 + $0x88] sm:$0xf]
    %v554 = vld [vmem:[%s518 + $0x8c] sm:$0xf]
    %v555 = vld [vmem:[%s518 + $0x90] sm:$0xf]
    %v556 = vld [vmem:[%s518 + $0x94] sm:$0xf]
    %v557 = vld [vmem:[%s518 + $0x98] sm:$0xf]
    %v558 = vld [vmem:[%s518 + $0x9c] sm:$0xf]
    %v559 = vld [vmem:[%s518 + $0xa0] sm:$0xf]
    %v560 = vld [vmem:[%s518 + $0xa4] sm:$0xf]
    %v561 = vld [vmem:[%s518 + $0xa8] sm:$0xf]
    %v562 = vld [vmem:[%s518 + $0xac] sm:$0xf]
    %v563 = vld [vmem:[%s518 + $0xb0] sm:$0xf]
    %v564 = vld [vmem:[%s518 + $0xb4] sm:$0xf]
    %v565 = vld [vmem:[%s518 + $0xb8] sm:$0xf]
    %v566 = vld [vmem:[%s518 + $0xbc] sm:$0xf]
    %v567 = vld [vmem:[%s518 + $0xc0] sm:$0xf]
    %v568 = vld [vmem:[%s518 + $0xc4] sm:$0xf]
    %v569 = vld [vmem:[%s518 + $0xc8] sm:$0xf]
    %v570 = vld [vmem:[%s518 + $0xcc] sm:$0xf]
    %v571 = vld [vmem:[%s518 + $0xd0] sm:$0xf]
    %v572 = vld [vmem:[%s518 + $0xd4] sm:$0xf]
    %v573 = vld [vmem:[%s518 + $0xd8] sm:$0xf]
    %v574 = vld [vmem:[%s518 + $0xdc] sm:$0xf]
    %575 = vst [vmem:[#allocation2 + $0x10] sm:$0xf] %v519
    %576 = vst [vmem:[#allocation2 + $0x24] sm:$0xf] %v520
    %577 = vst [vmem:[#allocation2 + $0x38] sm:$0xf] %v521
    %578 = vst [vmem:[#allocation2 + $0x4c] sm:$0xf] %v522
    %579 = vst [vmem:[#allocation2 + $0x60] sm:$0xf] %v523
    %580 = vst [vmem:[#allocation2 + $0x74] sm:$0xf] %v524
    %581 = vst [vmem:[#allocation2 + $0x88] sm:$0xf] %v525
    %582 = vst [vmem:[#allocation2 + $0x9c] sm:$0xf] %v526
    %583 = vst [vmem:[#allocation2 + $0xb0] sm:$0xf] %v527
    %584 = vst [vmem:[#allocation2 + $0xc4] sm:$0xf] %v528
    %585 = vst [vmem:[#allocation2 + $0xd8] sm:$0xf] %v529
    %586 = vst [vmem:[#allocation2 + $0xec] sm:$0xf] %v530
    %587 = vst [vmem:[#allocation2 + $0x100] sm:$0xf] %v531
    %588 = vst [vmem:[#allocation2 + $0x114] sm:$0xf] %v532
    %589 = vst [vmem:[#allocation2 + $0x128] sm:$0xf] %v533
    %590 = vst [vmem:[#allocation2 + $0x13c] sm:$0xf] %v534
    %591 = vst [vmem:[#allocation2 + $0x150] sm:$0xf] %v535
    %592 = vst [vmem:[#allocation2 + $0x164] sm:$0xf] %v536
    %593 = vst [vmem:[#allocation2 + $0x178] sm:$0xf] %v537
    %594 = vst [vmem:[#allocation2 + $0x18c] sm:$0xf] %v538
    %595 = vst [vmem:[#allocation2 + $0x1a0] sm:$0xf] %v539
    %596 = vst [vmem:[#allocation2 + $0x1b4] sm:$0xf] %v540
    %597 = vst [vmem:[#allocation2 + $0x1c8] sm:$0xf] %v541
    %598 = vst [vmem:[#allocation2 + $0x1dc] sm:$0xf] %v542
    %599 = vst [vmem:[#allocation2 + $0x1f0] sm:$0xf] %v543
    %600 = vst [vmem:[#allocation2 + $0x204] sm:$0xf] %v544
    %601 = vst [vmem:[#allocation2 + $0x218] sm:$0xf] %v545
    %602 = vst [vmem:[#allocation2 + $0x22c] sm:$0xf] %v546
    %603 = vst [vmem:[#allocation2 + $0x240] sm:$0xf] %v547
    %604 = vst [vmem:[#allocation2 + $0x254] sm:$0xf] %v548
    %605 = vst [vmem:[#allocation2 + $0x268] sm:$0xf] %v549
    %606 = vst [vmem:[#allocation2 + $0x27c] sm:$0xf] %v550
    %607 = vst [vmem:[#allocation2 + $0x290] sm:$0xf] %v551
    %608 = vst [vmem:[#allocation2 + $0x2a4] sm:$0xf] %v552
    %609 = vst [vmem:[#allocation2 + $0x2b8] sm:$0xf] %v553
    %610 = vst [vmem:[#allocation2 + $0x2cc] sm:$0xf] %v554
    %611 = vst [vmem:[#allocation2 + $0x2e0] sm:$0xf] %v555
    %612 = vst [vmem:[#allocation2 + $0x2f4] sm:$0xf] %v556
    %613 = vst [vmem:[#allocation2 + $0x308] sm:$0xf] %v557
    %614 = vst [vmem:[#allocation2 + $0x31c] sm:$0xf] %v558
    %615 = vst [vmem:[#allocation2 + $0x330] sm:$0xf] %v559
    %616 = vst [vmem:[#allocation2 + $0x344] sm:$0xf] %v560
    %617 = vst [vmem:[#allocation2 + $0x358] sm:$0xf] %v561
    %618 = vst [vmem:[#allocation2 + $0x36c] sm:$0xf] %v562
    %619 = vst [vmem:[#allocation2 + $0x380] sm:$0xf] %v563
    %620 = vst [vmem:[#allocation2 + $0x394] sm:$0xf] %v564
    %621 = vst [vmem:[#allocation2 + $0x3a8] sm:$0xf] %v565
    %622 = vst [vmem:[#allocation2 + $0x3bc] sm:$0xf] %v566
    %623 = vst [vmem:[#allocation2 + $0x3d0] sm:$0xf] %v567
    %624 = vst [vmem:[#allocation2 + $0x3e4] sm:$0xf] %v568
    %625 = vst [vmem:[#allocation2 + $0x3f8] sm:$0xf] %v569
    %626 = vst [vmem:[#allocation2 + $0x40c] sm:$0xf] %v570
    %627 = vst [vmem:[#allocation2 + $0x420] sm:$0xf] %v571
    %628 = vst [vmem:[#allocation2 + $0x434] sm:$0xf] %v572
    %629 = vst [vmem:[#allocation2 + $0x448] sm:$0xf] %v573
    %630 = vst [vmem:[#allocation2 + $0x45c] sm:$0xf] %v574
    %v631 = vld [vmem:[#allocation2] sm:$0xff]
    %v632 = vld [vmem:[#allocation2 + $0x8] sm:$0xff]
    %v633 = vld [vmem:[#allocation2 + $0x10] sm:$0xf]
    %v634 = vld [vmem:[#allocation2 + $0x14] sm:$0xff]
    %v635 = vld [vmem:[#allocation2 + $0x1c] sm:$0xff]
    %v636 = vld [vmem:[#allocation2 + $0x24] sm:$0xf]
    %v637 = vld [vmem:[#allocation2 + $0x28] sm:$0xff]
    %v638 = vld [vmem:[#allocation2 + $0x30] sm:$0xff]
    %v639 = vld [vmem:[#allocation2 + $0x38] sm:$0xf]
    %v640 = vld [vmem:[#allocation2 + $0x3c] sm:$0xff]
    %v641 = vld [vmem:[#allocation2 + $0x44] sm:$0xff]
    %v642 = vld [vmem:[#allocation2 + $0x4c] sm:$0xf]
    %v643 = vld [vmem:[#allocation2 + $0x50] sm:$0xff]
    %v644 = vld [vmem:[#allocation2 + $0x58] sm:$0xff]
    %v645 = vld [vmem:[#allocation2 + $0x60] sm:$0xf]
    %v646 = vld [vmem:[#allocation2 + $0x64] sm:$0xff]
    %v647 = vld [vmem:[#allocation2 + $0x6c] sm:$0xff]
    %v648 = vld [vmem:[#allocation2 + $0x74] sm:$0xf]
    %v649 = vld [vmem:[#allocation2 + $0x78] sm:$0xff]
    %v650 = vld [vmem:[#allocation2 + $0x80] sm:$0xff]
    %v651 = vld [vmem:[#allocation2 + $0x88] sm:$0xf]
    %v652 = vld [vmem:[#allocation2 + $0x8c] sm:$0xff]
    %v653 = vld [vmem:[#allocation2 + $0x94] sm:$0xff]
    %v654 = vld [vmem:[#allocation2 + $0x9c] sm:$0xf]
    %v655 = vld [vmem:[#allocation2 + $0xa0] sm:$0xff]
    %v656 = vld [vmem:[#allocation2 + $0xa8] sm:$0xff]
    %v657 = vld [vmem:[#allocation2 + $0xb0] sm:$0xf]
    %v658 = vld [vmem:[#allocation2 + $0xb4] sm:$0xff]
    %v659 = vld [vmem:[#allocation2 + $0xbc] sm:$0xff]
    %v660 = vld [vmem:[#allocation2 + $0xc4] sm:$0xf]
    %v661 = vld [vmem:[#allocation2 + $0xc8] sm:$0xff]
    %v662 = vld [vmem:[#allocation2 + $0xd0] sm:$0xff]
    %v663 = vld [vmem:[#allocation2 + $0xd8] sm:$0xf]
    %v664 = vld [vmem:[#allocation2 + $0xdc] sm:$0xff]
    %v665 = vld [vmem:[#allocation2 + $0xe4] sm:$0xff]
    %v666 = vld [vmem:[#allocation2 + $0xec] sm:$0xf]
    %v667 = vld [vmem:[#allocation2 + $0xf0] sm:$0xff]
    %v668 = vld [vmem:[#allocation2 + $0xf8] sm:$0xff]
    %v669 = vld [vmem:[#allocation2 + $0x100] sm:$0xf]
    %v670 = vld [vmem:[#allocation2 + $0x104] sm:$0xff]
    %v671 = vld [vmem:[#allocation2 + $0x10c] sm:$0xff]
    %v672 = vld [vmem:[#allocation2 + $0x114] sm:$0xf]
    %v673 = vld [vmem:[#allocation2 + $0x118] sm:$0xff]
    %v674 = vld [vmem:[#allocation2 + $0x120] sm:$0xff]
    %v675 = vld [vmem:[#allocation2 + $0x128] sm:$0xf]
    %v676 = vld [vmem:[#allocation2 + $0x12c] sm:$0xff]
    %v677 = vld [vmem:[#allocation2 + $0x134] sm:$0xff]
    %v678 = vld [vmem:[#allocation2 + $0x13c] sm:$0xf]
    %v679 = vld [vmem:[#allocation2 + $0x140] sm:$0xff]
    %v680 = vld [vmem:[#allocation2 + $0x148] sm:$0xff]
    %v681 = vld [vmem:[#allocation2 + $0x150] sm:$0xf]
    %v682 = vld [vmem:[#allocation2 + $0x154] sm:$0xff]
    %v683 = vld [vmem:[#allocation2 + $0x15c] sm:$0xff]
    %v684 = vld [vmem:[#allocation2 + $0x164] sm:$0xf]
    %v685 = vld [vmem:[#allocation2 + $0x168] sm:$0xff]
    %v686 = vld [vmem:[#allocation2 + $0x170] sm:$0xff]
    %v687 = vld [vmem:[#allocation2 + $0x178] sm:$0xf]
    %v688 = vld [vmem:[#allocation2 + $0x17c] sm:$0xff]
    %v689 = vld [vmem:[#allocation2 + $0x184] sm:$0xff]
    %v690 = vld [vmem:[#allocation2 + $0x18c] sm:$0xf]
    %v691 = vld [vmem:[#allocation2 + $0x190] sm:$0xff]
    %v692 = vld [vmem:[#allocation2 + $0x198] sm:$0xff]
    %v693 = vld [vmem:[#allocation2 + $0x1a0] sm:$0xf]
    %v694 = vld [vmem:[#allocation2 + $0x1a4] sm:$0xff]
    %v695 = vld [vmem:[#allocation2 + $0x1ac] sm:$0xff]
    %v696 = vld [vmem:[#allocation2 + $0x1b4] sm:$0xf]
    %v697 = vld [vmem:[#allocation2 + $0x1b8] sm:$0xff]
    %v698 = vld [vmem:[#allocation2 + $0x1c0] sm:$0xff]
    %v699 = vld [vmem:[#allocation2 + $0x1c8] sm:$0xf]
    %v700 = vld [vmem:[#allocation2 + $0x1cc] sm:$0xff]
    %v701 = vld [vmem:[#allocation2 + $0x1d4] sm:$0xff]
    %v702 = vld [vmem:[#allocation2 + $0x1dc] sm:$0xf]
    %v703 = vld [vmem:[#allocation2 + $0x1e0] sm:$0xff]
    %v704 = vld [vmem:[#allocation2 + $0x1e8] sm:$0xff]
    %v705 = vld [vmem:[#allocation2 + $0x1f0] sm:$0xf]
    %v706 = vld [vmem:[#allocation2 + $0x1f4] sm:$0xff]
    %v707 = vld [vmem:[#allocation2 + $0x1fc] sm:$0xff]
    %v708 = vld [vmem:[#allocation2 + $0x204] sm:$0xf]
    %v709 = vld [vmem:[#allocation2 + $0x208] sm:$0xff]
    %v710 = vld [vmem:[#allocation2 + $0x210] sm:$0xff]
    %v711 = vld [vmem:[#allocation2 + $0x218] sm:$0xf]
    %v712 = vld [vmem:[#allocation2 + $0x21c] sm:$0xff]
    %v713 = vld [vmem:[#allocation2 + $0x224] sm:$0xff]
    %v714 = vld [vmem:[#allocation2 + $0x22c] sm:$0xf]
    %v715 = vld [vmem:[#allocation2 + $0x230] sm:$0xff]
    %v716 = vld [vmem:[#allocation2 + $0x238] sm:$0xff]
    %v717 = vld [vmem:[#allocation2 + $0x240] sm:$0xf]
    %v718 = vld [vmem:[#allocation2 + $0x244] sm:$0xff]
    %v719 = vld [vmem:[#allocation2 + $0x24c] sm:$0xff]
    %v720 = vld [vmem:[#allocation2 + $0x254] sm:$0xf]
    %v721 = vld [vmem:[#allocation2 + $0x258] sm:$0xff]
    %v722 = vld [vmem:[#allocation2 + $0x260] sm:$0xff]
    %v723 = vld [vmem:[#allocation2 + $0x268] sm:$0xf]
    %v724 = vld [vmem:[#allocation2 + $0x26c] sm:$0xff]
    %v725 = vld [vmem:[#allocation2 + $0x274] sm:$0xff]
    %v726 = vld [vmem:[#allocation2 + $0x27c] sm:$0xf]
    %v727 = vld [vmem:[#allocation2 + $0x280] sm:$0xff]
    %v728 = vld [vmem:[#allocation2 + $0x288] sm:$0xff]
    %v729 = vld [vmem:[#allocation2 + $0x290] sm:$0xf]
    %v730 = vld [vmem:[#allocation2 + $0x294] sm:$0xff]
    %v731 = vld [vmem:[#allocation2 + $0x29c] sm:$0xff]
    %v732 = vld [vmem:[#allocation2 + $0x2a4] sm:$0xf]
    %v733 = vld [vmem:[#allocation2 + $0x2a8] sm:$0xff]
    %v734 = vld [vmem:[#allocation2 + $0x2b0] sm:$0xff]
    %v735 = vld [vmem:[#allocation2 + $0x2b8] sm:$0xf]
    %v736 = vld [vmem:[#allocation2 + $0x2bc] sm:$0xff]
    %v737 = vld [vmem:[#allocation2 + $0x2c4] sm:$0xff]
    %v738 = vld [vmem:[#allocation2 + $0x2cc] sm:$0xf]
    %v739 = vld [vmem:[#allocation2 + $0x2d0] sm:$0xff]
    %v740 = vld [vmem:[#allocation2 + $0x2d8] sm:$0xff]
    %v741 = vld [vmem:[#allocation2 + $0x2e0] sm:$0xf]
    %v742 = vld [vmem:[#allocation2 + $0x2e4] sm:$0xff]
    %v743 = vld [vmem:[#allocation2 + $0x2ec] sm:$0xff]
    %v744 = vld [vmem:[#allocation2 + $0x2f4] sm:$0xf]
    %v745 = vld [vmem:[#allocation2 + $0x2f8] sm:$0xff]
    %v746 = vld [vmem:[#allocation2 + $0x300] sm:$0xff]
    %v747 = vld [vmem:[#allocation2 + $0x308] sm:$0xf]
    %v748 = vld [vmem:[#allocation2 + $0x30c] sm:$0xff]
    %v749 = vld [vmem:[#allocation2 + $0x314] sm:$0xff]
    %v750 = vld [vmem:[#allocation2 + $0x31c] sm:$0xf]
    %v751 = vld [vmem:[#allocation2 + $0x320] sm:$0xff]
    %v752 = vld [vmem:[#allocation2 + $0x328] sm:$0xff]
    %v753 = vld [vmem:[#allocation2 + $0x330] sm:$0xf]
    %v754 = vld [vmem:[#allocation2 + $0x334] sm:$0xff]
    %v755 = vld [vmem:[#allocation2 + $0x33c] sm:$0xff]
    %v756 = vld [vmem:[#allocation2 + $0x344] sm:$0xf]
    %v757 = vld [vmem:[#allocation2 + $0x348] sm:$0xff]
    %v758 = vld [vmem:[#allocation2 + $0x350] sm:$0xff]
    %v759 = vld [vmem:[#allocation2 + $0x358] sm:$0xf]
    %v760 = vld [vmem:[#allocation2 + $0x35c] sm:$0xff]
    %v761 = vld [vmem:[#allocation2 + $0x364] sm:$0xff]
    %v762 = vld [vmem:[#allocation2 + $0x36c] sm:$0xf]
    %v763 = vld [vmem:[#allocation2 + $0x370] sm:$0xff]
    %v764 = vld [vmem:[#allocation2 + $0x378] sm:$0xff]
    %v765 = vld [vmem:[#allocation2 + $0x380] sm:$0xf]
    %v766 = vld [vmem:[#allocation2 + $0x384] sm:$0xff]
    %v767 = vld [vmem:[#allocation2 + $0x38c] sm:$0xff]
    %v768 = vld [vmem:[#allocation2 + $0x394] sm:$0xf]
    %v769 = vld [vmem:[#allocation2 + $0x398] sm:$0xff]
    %v770 = vld [vmem:[#allocation2 + $0x3a0] sm:$0xff]
    %v771 = vld [vmem:[#allocation2 + $0x3a8] sm:$0xf]
    %v772 = vld [vmem:[#allocation2 + $0x3ac] sm:$0xff]
    %v773 = vld [vmem:[#allocation2 + $0x3b4] sm:$0xff]
    %v774 = vld [vmem:[#allocation2 + $0x3bc] sm:$0xf]
    %v775 = vld [vmem:[#allocation2 + $0x3c0] sm:$0xff]
    %v776 = vld [vmem:[#allocation2 + $0x3c8] sm:$0xff]
    %v777 = vld [vmem:[#allocation2 + $0x3d0] sm:$0xf]
    %v778 = vld [vmem:[#allocation2 + $0x3d4] sm:$0xff]
    %v779 = vld [vmem:[#allocation2 + $0x3dc] sm:$0xff]
    %v780 = vld [vmem:[#allocation2 + $0x3e4] sm:$0xf]
    %v781 = vld [vmem:[#allocation2 + $0x3e8] sm:$0xff]
    %v782 = vld [vmem:[#allocation2 + $0x3f0] sm:$0xff]
    %v783 = vld [vmem:[#allocation2 + $0x3f8] sm:$0xf]
    %v784 = vld [vmem:[#allocation2 + $0x3fc] sm:$0xff]
    %v785 = vld [vmem:[#allocation2 + $0x404] sm:$0xff]
    %v786 = vld [vmem:[#allocation2 + $0x40c] sm:$0xf]
    %v787 = vld [vmem:[#allocation2 + $0x410] sm:$0xff]
    %v788 = vld [vmem:[#allocation2 + $0x418] sm:$0xff]
    %v789 = vld [vmem:[#allocation2 + $0x420] sm:$0xf]
    %v790 = vld [vmem:[#allocation2 + $0x424] sm:$0xff]
    %v791 = vld [vmem:[#allocation2 + $0x42c] sm:$0xff]
    %v792 = vld [vmem:[#allocation2 + $0x434] sm:$0xf]
    %v793 = vld [vmem:[#allocation2 + $0x438] sm:$0xff]
    %v794 = vld [vmem:[#allocation2 + $0x440] sm:$0xff]
    %v795 = vld [vmem:[#allocation2 + $0x448] sm:$0xf]
    %v796 = vld [vmem:[#allocation2 + $0x44c] sm:$0xff]
    %v797 = vld [vmem:[#allocation2 + $0x454] sm:$0xff]
    %v798 = vld [vmem:[#allocation2 + $0x45c] sm:$0xf]
    %v799 = vld [vmem:[%s1] sm:$0xff]
    %v800 = vld [vmem:[%s1 + $0x8] sm:$0xff]
    %v801 = vld [vmem:[%s1 + $0x10] sm:$0xff]
    %v802 = vld [vmem:[%s1 + $0x18] sm:$0xff]
    %v803 = vld [vmem:[%s1 + $0x20] sm:$0xff]
    %v804 = vld [vmem:[%s1 + $0x28] sm:$0xff]
    %v805 = vld [vmem:[%s1 + $0x30] sm:$0xff]
    %v806 = vld [vmem:[%s1 + $0x38] sm:$0xff]
    %v807 = vld [vmem:[%s1 + $0x40] sm:$0xff]
    %v808 = vld [vmem:[%s1 + $0x48] sm:$0xff]
    %v809 = vld [vmem:[%s1 + $0x50] sm:$0xff]
    %v810 = vld [vmem:[%s1 + $0x58] sm:$0xff]
    %v811 = vld [vmem:[%s1 + $0x60] sm:$0xff]
    %v812 = vld [vmem:[%s1 + $0x68] sm:$0xff]
    %v813 = vld [vmem:[%s1 + $0x70] sm:$0xff]
    %v814 = vld [vmem:[%s1 + $0x78] sm:$0xff]
    %v815 = vld [vmem:[%s1 + $0x80] sm:$0xff]
    %v816 = vld [vmem:[%s1 + $0x88] sm:$0xff]
    %v817 = vld [vmem:[%s1 + $0x90] sm:$0xff]
    %v818 = vld [vmem:[%s1 + $0x98] sm:$0xff]
    %v819 = vld [vmem:[%s1 + $0xa0] sm:$0xff]
    %v820 = vld [vmem:[%s1 + $0xa8] sm:$0xff]
    %v821 = vld [vmem:[%s1 + $0xb0] sm:$0xff]
    %v822 = vld [vmem:[%s1 + $0xb8] sm:$0xff]
    %v823 = vld [vmem:[%s1 + $0xc0] sm:$0xff]
    %v824 = vld [vmem:[%s1 + $0xc8] sm:$0xff]
    %v825 = vld [vmem:[%s1 + $0xd0] sm:$0xff]
    %v826 = vld [vmem:[%s1 + $0xd8] sm:$0xff]
    %v827 = vld [vmem:[%s1 + $0xe0] sm:$0xff]
    %v828 = vld [vmem:[%s1 + $0xe8] sm:$0xff]
    %v829 = vld [vmem:[%s1 + $0xf0] sm:$0xff]
    %v830 = vld [vmem:[%s1 + $0xf8] sm:$0xff]
    %v831 = vld [vmem:[%s1 + $0x100] sm:$0xff]
    %v832 = vld [vmem:[%s1 + $0x108] sm:$0xff]
    %v833 = vld [vmem:[%s1 + $0x110] sm:$0xff]
    %v834 = vld [vmem:[%s1 + $0x118] sm:$0xff]
    %v835 = vld [vmem:[%s1 + $0x120] sm:$0xff]
    %v836 = vld [vmem:[%s1 + $0x128] sm:$0xff]
    %v837 = vld [vmem:[%s1 + $0x130] sm:$0xff]
    %v838 = vld [vmem:[%s1 + $0x138] sm:$0xff]
    %v839 = vld [vmem:[%s1 + $0x140] sm:$0xff]
    %v840 = vld [vmem:[%s1 + $0x148] sm:$0xff]
    %v841 = vld [vmem:[%s1 + $0x150] sm:$0xff]
    %v842 = vld [vmem:[%s1 + $0x158] sm:$0xff]
    %v843 = vld [vmem:[%s1 + $0x160] sm:$0xff]
    %v844 = vld [vmem:[%s1 + $0x168] sm:$0xff]
    %v845 = vld [vmem:[%s1 + $0x170] sm:$0xff]
    %v846 = vld [vmem:[%s1 + $0x178] sm:$0xff]
    %v847 = vld [vmem:[%s1 + $0x180] sm:$0xff]
    %v848 = vld [vmem:[%s1 + $0x188] sm:$0xff]
    %v849 = vld [vmem:[%s1 + $0x190] sm:$0xff]
    %v850 = vld [vmem:[%s1 + $0x198] sm:$0xff]
    %v851 = vld [vmem:[%s1 + $0x1a0] sm:$0xff]
    %v852 = vld [vmem:[%s1 + $0x1a8] sm:$0xff]
    %v853 = vld [vmem:[%s1 + $0x1b0] sm:$0xff]
    %v854 = vld [vmem:[%s1 + $0x1b8] sm:$0xff]
    %v855 = vld [vmem:[%s1 + $0x1c0] sm:$0xff]
    %v856 = vld [vmem:[%s1 + $0x1c8] sm:$0xff]
    %v857 = vld [vmem:[%s1 + $0x1d0] sm:$0xff]
    %v858 = vld [vmem:[%s1 + $0x1d8] sm:$0xff]
    %v859 = vld [vmem:[%s1 + $0x1e0] sm:$0xff]
    %v860 = vld [vmem:[%s1 + $0x1e8] sm:$0xff]
    %v861 = vld [vmem:[%s1 + $0x1f0] sm:$0xff]
    %v862 = vld [vmem:[%s1 + $0x1f8] sm:$0xff]
    %v863 = vld [vmem:[%s1 + $0x200] sm:$0xff]
    %v864 = vld [vmem:[%s1 + $0x208] sm:$0xff]
    %v865 = vld [vmem:[%s1 + $0x210] sm:$0xff]
    %v866 = vld [vmem:[%s1 + $0x218] sm:$0xff]
    %v867 = vld [vmem:[%s1 + $0x220] sm:$0xff]
    %v868 = vld [vmem:[%s1 + $0x228] sm:$0xff]
    %v869 = vld [vmem:[%s1 + $0x230] sm:$0xff]
    %v870 = vld [vmem:[%s1 + $0x238] sm:$0xff]
    %v871 = vld [vmem:[%s1 + $0x240] sm:$0xff]
    %v872 = vld [vmem:[%s1 + $0x248] sm:$0xff]
    %v873 = vld [vmem:[%s1 + $0x250] sm:$0xff]
    %v874 = vld [vmem:[%s1 + $0x258] sm:$0xff]
    %v875 = vld [vmem:[%s1 + $0x260] sm:$0xff]
    %v876 = vld [vmem:[%s1 + $0x268] sm:$0xff]
    %v877 = vld [vmem:[%s1 + $0x270] sm:$0xff]
    %v878 = vld [vmem:[%s1 + $0x278] sm:$0xff]
    %v879 = vld [vmem:[%s2] sm:$0x3]
    %v881 = vlaneseq
    %v882 = vshrl.u32 %v881, 7
    %v883 = vsub.s32 0, %v882
    %v884 = vrot.slane %v879, %v883
    %v885 = vlaneseq
    %v886 = vshrl.u32 %v885, 7
    %v887 = vsub.s32 1, %v886
    %v888 = vrot.slane %v879, %v887
    %v1059 = vunpack.c.l.b16 %v631
    %v1060 = vunpack.c.h.b16 %v631
    %v1061 = vunpack.c.l.b16 %v632
    %v1062 = vunpack.c.h.b16 %v632
    %v1063 = vunpack.c.l.b16 %v633
    %v1064 = vunpack.c.l.b16 %v634
    %v1065 = vunpack.c.h.b16 %v634
    %v1066 = vunpack.c.l.b16 %v635
    %v1067 = vunpack.c.h.b16 %v635
    %v1068 = vunpack.c.l.b16 %v636
    %v1069 = vunpack.c.l.b16 %v637
    %v1070 = vunpack.c.h.b16 %v637
    %v1071 = vunpack.c.l.b16 %v638
    %v1072 = vunpack.c.h.b16 %v638
    %v1073 = vunpack.c.l.b16 %v639
    %v1074 = vunpack.c.l.b16 %v640
    %v1075 = vunpack.c.h.b16 %v640
    %v1076 = vunpack.c.l.b16 %v641
    %v1077 = vunpack.c.h.b16 %v641
    %v1078 = vunpack.c.l.b16 %v642
    %v1079 = vunpack.c.l.b16 %v643
    %v1080 = vunpack.c.h.b16 %v643
    %v1081 = vunpack.c.l.b16 %v644
    %v1082 = vunpack.c.h.b16 %v644
    %v1083 = vunpack.c.l.b16 %v645
    %v1084 = vunpack.c.l.b16 %v646
    %v1085 = vunpack.c.h.b16 %v646
    %v1086 = vunpack.c.l.b16 %v647
    %v1087 = vunpack.c.h.b16 %v647
    %v1088 = vunpack.c.l.b16 %v648
    %v1089 = vunpack.c.l.b16 %v649
    %v1090 = vunpack.c.h.b16 %v649
    %v1091 = vunpack.c.l.b16 %v650
    %v1092 = vunpack.c.h.b16 %v650
    %v1093 = vunpack.c.l.b16 %v651
    %v1094 = vunpack.c.l.b16 %v652
    %v1095 = vunpack.c.h.b16 %v652
    %v1096 = vunpack.c.l.b16 %v653
    %v1097 = vunpack.c.h.b16 %v653
    %v1098 = vunpack.c.l.b16 %v654
    %v1099 = vunpack.c.l.b16 %v655
    %v1100 = vunpack.c.h.b16 %v655
    %v1101 = vunpack.c.l.b16 %v656
    %v1102 = vunpack.c.h.b16 %v656
    %v1103 = vunpack.c.l.b16 %v657
    %v1104 = vunpack.c.l.b16 %v658
    %v1105 = vunpack.c.h.b16 %v658
    %v1106 = vunpack.c.l.b16 %v659
    %v1107 = vunpack.c.h.b16 %v659
    %v1108 = vunpack.c.l.b16 %v660
    %v1109 = vunpack.c.l.b16 %v661
    %v1110 = vunpack.c.h.b16 %v661
    %v1111 = vunpack.c.l.b16 %v662
    %v1112 = vunpack.c.h.b16 %v662
    %v1113 = vunpack.c.l.b16 %v663
    %v1114 = vunpack.c.l.b16 %v664
    %v1115 = vunpack.c.h.b16 %v664
    %v1116 = vunpack.c.l.b16 %v665
    %v1117 = vunpack.c.h.b16 %v665
    %v1118 = vunpack.c.l.b16 %v666
    %v1119 = vunpack.c.l.b16 %v667
    %v1120 = vunpack.c.h.b16 %v667
    %v1121 = vunpack.c.l.b16 %v668
    %v1122 = vunpack.c.h.b16 %v668
    %v1123 = vunpack.c.l.b16 %v669
    %v1124 = vunpack.c.l.b16 %v670
    %v1125 = vunpack.c.h.b16 %v670
    %v1126 = vunpack.c.l.b16 %v671
    %v1127 = vunpack.c.h.b16 %v671
    %v1128 = vunpack.c.l.b16 %v672
    %v1129 = vunpack.c.l.b16 %v673
    %v1130 = vunpack.c.h.b16 %v673
    %v1131 = vunpack.c.l.b16 %v674
    %v1132 = vunpack.c.h.b16 %v674
    %v1133 = vunpack.c.l.b16 %v675
    %v1134 = vunpack.c.l.b16 %v676
    %v1135 = vunpack.c.h.b16 %v676
    %v1136 = vunpack.c.l.b16 %v677
    %v1137 = vunpack.c.h.b16 %v677
    %v1138 = vunpack.c.l.b16 %v678
    %v1139 = vunpack.c.l.b16 %v679
    %v1140 = vunpack.c.h.b16 %v679
    %v1141 = vunpack.c.l.b16 %v680
    %v1142 = vunpack.c.h.b16 %v680
    %v1143 = vunpack.c.l.b16 %v681
    %v1144 = vunpack.c.l.b16 %v682
    %v1145 = vunpack.c.h.b16 %v682
    %v1146 = vunpack.c.l.b16 %v683
    %v1147 = vunpack.c.h.b16 %v683
    %v1148 = vunpack.c.l.b16 %v684
    %v1149 = vunpack.c.l.b16 %v685
    %v1150 = vunpack.c.h.b16 %v685
    %v1151 = vunpack.c.l.b16 %v686
    %v1152 = vunpack.c.h.b16 %v686
    %v1153 = vunpack.c.l.b16 %v687
    %v1154 = vunpack.c.l.b16 %v688
    %v1155 = vunpack.c.h.b16 %v688
    %v1156 = vunpack.c.l.b16 %v689
    %v1157 = vunpack.c.h.b16 %v689
    %v1158 = vunpack.c.l.b16 %v690
    %v1159 = vunpack.c.l.b16 %v691
    %v1160 = vunpack.c.h.b16 %v691
    %v1161 = vunpack.c.l.b16 %v692
    %v1162 = vunpack.c.h.b16 %v692
    %v1163 = vunpack.c.l.b16 %v693
    %v1164 = vunpack.c.l.b16 %v694
    %v1165 = vunpack.c.h.b16 %v694
    %v1166 = vunpack.c.l.b16 %v695
    %v1167 = vunpack.c.h.b16 %v695
    %v1168 = vunpack.c.l.b16 %v696
    %v1169 = vunpack.c.l.b16 %v697
    %v1170 = vunpack.c.h.b16 %v697
    %v1171 = vunpack.c.l.b16 %v698
    %v1172 = vunpack.c.h.b16 %v698
    %v1173 = vunpack.c.l.b16 %v699
    %v1174 = vunpack.c.l.b16 %v700
    %v1175 = vunpack.c.h.b16 %v700
    %v1176 = vunpack.c.l.b16 %v701
    %v1177 = vunpack.c.h.b16 %v701
    %v1178 = vunpack.c.l.b16 %v702
    %v1179 = vunpack.c.l.b16 %v703
    %v1180 = vunpack.c.h.b16 %v703
    %v1181 = vunpack.c.l.b16 %v704
    %v1182 = vunpack.c.h.b16 %v704
    %v1183 = vunpack.c.l.b16 %v705
    %v1184 = vunpack.c.l.b16 %v706
    %v1185 = vunpack.c.h.b16 %v706
    %v1186 = vunpack.c.l.b16 %v707
    %v1187 = vunpack.c.h.b16 %v707
    %v1188 = vunpack.c.l.b16 %v708
    %v1189 = vunpack.c.l.b16 %v709
    %v1190 = vunpack.c.h.b16 %v709
    %v1191 = vunpack.c.l.b16 %v710
    %v1192 = vunpack.c.h.b16 %v710
    %v1193 = vunpack.c.l.b16 %v711
    %v1194 = vunpack.c.l.b16 %v712
    %v1195 = vunpack.c.h.b16 %v712
    %v1196 = vunpack.c.l.b16 %v713
    %v1197 = vunpack.c.h.b16 %v713
    %v1198 = vunpack.c.l.b16 %v714
    %v1199 = vunpack.c.l.b16 %v715
    %v1200 = vunpack.c.h.b16 %v715
    %v1201 = vunpack.c.l.b16 %v716
    %v1202 = vunpack.c.h.b16 %v716
    %v1203 = vunpack.c.l.b16 %v717
    %v1204 = vunpack.c.l.b16 %v718
    %v1205 = vunpack.c.h.b16 %v718
    %v1206 = vunpack.c.l.b16 %v719
    %v1207 = vunpack.c.h.b16 %v719
    %v1208 = vunpack.c.l.b16 %v720
    %v1209 = vunpack.c.l.b16 %v721
    %v1210 = vunpack.c.h.b16 %v721
    %v1211 = vunpack.c.l.b16 %v722
    %v1212 = vunpack.c.h.b16 %v722
    %v1213 = vunpack.c.l.b16 %v723
    %v1214 = vunpack.c.l.b16 %v724
    %v1215 = vunpack.c.h.b16 %v724
    %v1216 = vunpack.c.l.b16 %v725
    %v1217 = vunpack.c.h.b16 %v725
    %v1218 = vunpack.c.l.b16 %v726
    %v1219 = vunpack.c.l.b16 %v727
    %v1220 = vunpack.c.h.b16 %v727
    %v1221 = vunpack.c.l.b16 %v728
    %v1222 = vunpack.c.h.b16 %v728
    %v1223 = vunpack.c.l.b16 %v729
    %v1224 = vunpack.c.l.b16 %v730
    %v1225 = vunpack.c.h.b16 %v730
    %v1226 = vunpack.c.l.b16 %v731
    %v1227 = vunpack.c.h.b16 %v731
    %v1228 = vunpack.c.l.b16 %v732
    %v1229 = vunpack.c.l.b16 %v733
    %v1230 = vunpack.c.h.b16 %v733
    %v1231 = vunpack.c.l.b16 %v734
    %v1232 = vunpack.c.h.b16 %v734
    %v1233 = vunpack.c.l.b16 %v735
    %v1234 = vunpack.c.l.b16 %v736
    %v1235 = vunpack.c.h.b16 %v736
    %v1236 = vunpack.c.l.b16 %v737
    %v1237 = vunpack.c.h.b16 %v737
    %v1238 = vunpack.c.l.b16 %v738
    %v1239 = vunpack.c.l.b16 %v739
    %v1240 = vunpack.c.h.b16 %v739
    %v1241 = vunpack.c.l.b16 %v740
    %v1242 = vunpack.c.h.b16 %v740
    %v1243 = vunpack.c.l.b16 %v741
    %v1244 = vunpack.c.l.b16 %v742
    %v1245 = vunpack.c.h.b16 %v742
    %v1246 = vunpack.c.l.b16 %v743
    %v1247 = vunpack.c.h.b16 %v743
    %v1248 = vunpack.c.l.b16 %v744
    %v1249 = vunpack.c.l.b16 %v745
    %v1250 = vunpack.c.h.b16 %v745
    %v1251 = vunpack.c.l.b16 %v746
    %v1252 = vunpack.c.h.b16 %v746
    %v1253 = vunpack.c.l.b16 %v747
    %v1254 = vunpack.c.l.b16 %v748
    %v1255 = vunpack.c.h.b16 %v748
    %v1256 = vunpack.c.l.b16 %v749
    %v1257 = vunpack.c.h.b16 %v749
    %v1258 = vunpack.c.l.b16 %v750
    %v1259 = vunpack.c.l.b16 %v751
    %v1260 = vunpack.c.h.b16 %v751
    %v1261 = vunpack.c.l.b16 %v752
    %v1262 = vunpack.c.h.b16 %v752
    %v1263 = vunpack.c.l.b16 %v753
    %v1264 = vunpack.c.l.b16 %v754
    %v1265 = vunpack.c.h.b16 %v754
    %v1266 = vunpack.c.l.b16 %v755
    %v1267 = vunpack.c.h.b16 %v755
    %v1268 = vunpack.c.l.b16 %v756
    %v1269 = vunpack.c.l.b16 %v757
    %v1270 = vunpack.c.h.b16 %v757
    %v1271 = vunpack.c.l.b16 %v758
    %v1272 = vunpack.c.h.b16 %v758
    %v1273 = vunpack.c.l.b16 %v759
    %v1274 = vunpack.c.l.b16 %v760
    %v1275 = vunpack.c.h.b16 %v760
    %v1276 = vunpack.c.l.b16 %v761
    %v1277 = vunpack.c.h.b16 %v761
    %v1278 = vunpack.c.l.b16 %v762
    %v1279 = vunpack.c.l.b16 %v763
    %v1280 = vunpack.c.h.b16 %v763
    %v1281 = vunpack.c.l.b16 %v764
    %v1282 = vunpack.c.h.b16 %v764
    %v1283 = vunpack.c.l.b16 %v765
    %v1284 = vunpack.c.l.b16 %v766
    %v1285 = vunpack.c.h.b16 %v766
    %v1286 = vunpack.c.l.b16 %v767
    %v1287 = vunpack.c.h.b16 %v767
    %v1288 = vunpack.c.l.b16 %v768
    %v1289 = vunpack.c.l.b16 %v769
    %v1290 = vunpack.c.h.b16 %v769
    %v1291 = vunpack.c.l.b16 %v770
    %v1292 = vunpack.c.h.b16 %v770
    %v1293 = vunpack.c.l.b16 %v771
    %v1294 = vunpack.c.l.b16 %v772
    %v1295 = vunpack.c.h.b16 %v772
    %v1296 = vunpack.c.l.b16 %v773
    %v1297 = vunpack.c.h.b16 %v773
    %v1298 = vunpack.c.l.b16 %v774
    %v1299 = vunpack.c.l.b16 %v775
    %v1300 = vunpack.c.h.b16 %v775
    %v1301 = vunpack.c.l.b16 %v776
    %v1302 = vunpack.c.h.b16 %v776
    %v1303 = vunpack.c.l.b16 %v777
    %v1304 = vunpack.c.l.b16 %v778
    %v1305 = vunpack.c.h.b16 %v778
    %v1306 = vunpack.c.l.b16 %v779
    %v1307 = vunpack.c.h.b16 %v779
    %v1308 = vunpack.c.l.b16 %v780
    %v1309 = vunpack.c.l.b16 %v781
    %v1310 = vunpack.c.h.b16 %v781
    %v1311 = vunpack.c.l.b16 %v782
    %v1312 = vunpack.c.h.b16 %v782
    %v1313 = vunpack.c.l.b16 %v783
    %v1314 = vunpack.c.l.b16 %v784
    %v1315 = vunpack.c.h.b16 %v784
    %v1316 = vunpack.c.l.b16 %v785
    %v1317 = vunpack.c.h.b16 %v785
    %v1318 = vunpack.c.l.b16 %v786
    %v1319 = vunpack.c.l.b16 %v787
    %v1320 = vunpack.c.h.b16 %v787
    %v1321 = vunpack.c.l.b16 %v788
    %v1322 = vunpack.c.h.b16 %v788
    %v1323 = vunpack.c.l.b16 %v789
    %v1324 = vunpack.c.l.b16 %v790
    %v1325 = vunpack.c.h.b16 %v790
    %v1326 = vunpack.c.l.b16 %v791
    %v1327 = vunpack.c.h.b16 %v791
    %v1328 = vunpack.c.l.b16 %v792
    %v1329 = vunpack.c.l.b16 %v793
    %v1330 = vunpack.c.h.b16 %v793
    %v1331 = vunpack.c.l.b16 %v794
    %v1332 = vunpack.c.h.b16 %v794
    %v1333 = vunpack.c.l.b16 %v795
    %v1334 = vunpack.c.l.b16 %v796
    %v1335 = vunpack.c.h.b16 %v796
    %v1336 = vunpack.c.l.b16 %v797
    %v1337 = vunpack.c.h.b16 %v797
    %v1338 = vunpack.c.l.b16 %v798
    %v1339 = vpack.c.b16 %v1064, %v1059
    %v1340 = vpack.c.b16 %v1065, %v1060
    %v1341 = vpack.c.b16 %v1066, %v1061
    %v1342 = vpack.c.b16 %v1067, %v1062
    %v1343 = vpack.c.b16 %v1068, %v1063
    %v1344 = vpack.c.b16 %v1074, %v1069
    %v1345 = vpack.c.b16 %v1075, %v1070
    %v1346 = vpack.c.b16 %v1076, %v1071
    %v1347 = vpack.c.b16 %v1077, %v1072
    %v1348 = vpack.c.b16 %v1078, %v1073
    %v1349 = vpack.c.b16 %v1084, %v1079
    %v1350 = vpack.c.b16 %v1085, %v1080
    %v1351 = vpack.c.b16 %v1086, %v1081
    %v1352 = vpack.c.b16 %v1087, %v1082
    %v1353 = vpack.c.b16 %v1088, %v1083
    %v1354 = vpack.c.b16 %v1094, %v1089
    %v1355 = vpack.c.b16 %v1095, %v1090
    %v1356 = vpack.c.b16 %v1096, %v1091
    %v1357 = vpack.c.b16 %v1097, %v1092
    %v1358 = vpack.c.b16 %v1098, %v1093
    %v1359 = vpack.c.b16 %v1104, %v1099
    %v1360 = vpack.c.b16 %v1105, %v1100
    %v1361 = vpack.c.b16 %v1106, %v1101
    %v1362 = vpack.c.b16 %v1107, %v1102
    %v1363 = vpack.c.b16 %v1108, %v1103
    %v1364 = vpack.c.b16 %v1114, %v1109
    %v1365 = vpack.c.b16 %v1115, %v1110
    %v1366 = vpack.c.b16 %v1116, %v1111
    %v1367 = vpack.c.b16 %v1117, %v1112
    %v1368 = vpack.c.b16 %v1118, %v1113
    %v1369 = vpack.c.b16 %v1124, %v1119
    %v1370 = vpack.c.b16 %v1125, %v1120
    %v1371 = vpack.c.b16 %v1126, %v1121
    %v1372 = vpack.c.b16 %v1127, %v1122
    %v1373 = vpack.c.b16 %v1128, %v1123
    %v1374 = vpack.c.b16 %v1134, %v1129
    %v1375 = vpack.c.b16 %v1135, %v1130
    %v1376 = vpack.c.b16 %v1136, %v1131
    %v1377 = vpack.c.b16 %v1137, %v1132
    %v1378 = vpack.c.b16 %v1138, %v1133
    %v1379 = vpack.c.b16 %v1144, %v1139
    %v1380 = vpack.c.b16 %v1145, %v1140
    %v1381 = vpack.c.b16 %v1146, %v1141
    %v1382 = vpack.c.b16 %v1147, %v1142
    %v1383 = vpack.c.b16 %v1148, %v1143
    %v1384 = vpack.c.b16 %v1154, %v1149
    %v1385 = vpack.c.b16 %v1155, %v1150
    %v1386 = vpack.c.b16 %v1156, %v1151
    %v1387 = vpack.c.b16 %v1157, %v1152
    %v1388 = vpack.c.b16 %v1158, %v1153
    %v1389 = vpack.c.b16 %v1164, %v1159
    %v1390 = vpack.c.b16 %v1165, %v1160
    %v1391 = vpack.c.b16 %v1166, %v1161
    %v1392 = vpack.c.b16 %v1167, %v1162
    %v1393 = vpack.c.b16 %v1168, %v1163
    %v1394 = vpack.c.b16 %v1174, %v1169
    %v1395 = vpack.c.b16 %v1175, %v1170
    %v1396 = vpack.c.b16 %v1176, %v1171
    %v1397 = vpack.c.b16 %v1177, %v1172
    %v1398 = vpack.c.b16 %v1178, %v1173
    %v1399 = vpack.c.b16 %v1184, %v1179
    %v1400 = vpack.c.b16 %v1185, %v1180
    %v1401 = vpack.c.b16 %v1186, %v1181
    %v1402 = vpack.c.b16 %v1187, %v1182
    %v1403 = vpack.c.b16 %v1188, %v1183
    %v1404 = vpack.c.b16 %v1194, %v1189
    %v1405 = vpack.c.b16 %v1195, %v1190
    %v1406 = vpack.c.b16 %v1196, %v1191
    %v1407 = vpack.c.b16 %v1197, %v1192
    %v1408 = vpack.c.b16 %v1198, %v1193
    %v1409 = vpack.c.b16 %v1204, %v1199
    %v1410 = vpack.c.b16 %v1205, %v1200
    %v1411 = vpack.c.b16 %v1206, %v1201
    %v1412 = vpack.c.b16 %v1207, %v1202
    %v1413 = vpack.c.b16 %v1208, %v1203
    %v1414 = vpack.c.b16 %v1214, %v1209
    %v1415 = vpack.c.b16 %v1215, %v1210
    %v1416 = vpack.c.b16 %v1216, %v1211
    %v1417 = vpack.c.b16 %v1217, %v1212
    %v1418 = vpack.c.b16 %v1218, %v1213
    %v1419 = vpack.c.b16 %v1224, %v1219
    %v1420 = vpack.c.b16 %v1225, %v1220
    %v1421 = vpack.c.b16 %v1226, %v1221
    %v1422 = vpack.c.b16 %v1227, %v1222
    %v1423 = vpack.c.b16 %v1228, %v1223
    %v1424 = vpack.c.b16 %v1234, %v1229
    %v1425 = vpack.c.b16 %v1235, %v1230
    %v1426 = vpack.c.b16 %v1236, %v1231
    %v1427 = vpack.c.b16 %v1237, %v1232
    %v1428 = vpack.c.b16 %v1238, %v1233
    %v1429 = vpack.c.b16 %v1244, %v1239
    %v1430 = vpack.c.b16 %v1245, %v1240
    %v1431 = vpack.c.b16 %v1246, %v1241
    %v1432 = vpack.c.b16 %v1247, %v1242
    %v1433 = vpack.c.b16 %v1248, %v1243
    %v1434 = vpack.c.b16 %v1254, %v1249
    %v1435 = vpack.c.b16 %v1255, %v1250
    %v1436 = vpack.c.b16 %v1256, %v1251
    %v1437 = vpack.c.b16 %v1257, %v1252
    %v1438 = vpack.c.b16 %v1258, %v1253
    %v1439 = vpack.c.b16 %v1264, %v1259
    %v1440 = vpack.c.b16 %v1265, %v1260
    %v1441 = vpack.c.b16 %v1266, %v1261
    %v1442 = vpack.c.b16 %v1267, %v1262
    %v1443 = vpack.c.b16 %v1268, %v1263
    %v1444 = vpack.c.b16 %v1274, %v1269
    %v1445 = vpack.c.b16 %v1275, %v1270
    %v1446 = vpack.c.b16 %v1276, %v1271
    %v1447 = vpack.c.b16 %v1277, %v1272
    %v1448 = vpack.c.b16 %v1278, %v1273
    %v1449 = vpack.c.b16 %v1284, %v1279
    %v1450 = vpack.c.b16 %v1285, %v1280
    %v1451 = vpack.c.b16 %v1286, %v1281
    %v1452 = vpack.c.b16 %v1287, %v1282
    %v1453 = vpack.c.b16 %v1288, %v1283
    %v1454 = vpack.c.b16 %v1294, %v1289
    %v1455 = vpack.c.b16 %v1295, %v1290
    %v1456 = vpack.c.b16 %v1296, %v1291
    %v1457 = vpack.c.b16 %v1297, %v1292
    %v1458 = vpack.c.b16 %v1298, %v1293
    %v1459 = vpack.c.b16 %v1304, %v1299
    %v1460 = vpack.c.b16 %v1305, %v1300
    %v1461 = vpack.c.b16 %v1306, %v1301
    %v1462 = vpack.c.b16 %v1307, %v1302
    %v1463 = vpack.c.b16 %v1308, %v1303
    %v1464 = vpack.c.b16 %v1314, %v1309
    %v1465 = vpack.c.b16 %v1315, %v1310
    %v1466 = vpack.c.b16 %v1316, %v1311
    %v1467 = vpack.c.b16 %v1317, %v1312
    %v1468 = vpack.c.b16 %v1318, %v1313
    %v1469 = vpack.c.b16 %v1324, %v1319
    %v1470 = vpack.c.b16 %v1325, %v1320
    %v1471 = vpack.c.b16 %v1326, %v1321
    %v1472 = vpack.c.b16 %v1327, %v1322
    %v1473 = vpack.c.b16 %v1328, %v1323
    %v1474 = vpack.c.b16 %v1334, %v1329
    %v1475 = vpack.c.b16 %v1335, %v1330
    %v1476 = vpack.c.b16 %v1336, %v1331
    %v1477 = vpack.c.b16 %v1337, %v1332
    %v1478 = vpack.c.b16 %v1338, %v1333
    %v1699 = vunpack.c.l.b16 %v799
    %v1700 = vunpack.c.h.b16 %v799
    %v1701 = vunpack.c.l.b16 %v800
    %v1702 = vunpack.c.h.b16 %v800
    %v1703 = vunpack.c.l.b16 %v801
    %v1704 = vunpack.c.h.b16 %v801
    %v1705 = vunpack.c.l.b16 %v802
    %v1706 = vunpack.c.h.b16 %v802
    %v1707 = vunpack.c.l.b16 %v803
    %v1708 = vunpack.c.h.b16 %v803
    %v1709 = vunpack.c.l.b16 %v804
    %v1710 = vunpack.c.h.b16 %v804
    %v1711 = vunpack.c.l.b16 %v805
    %v1712 = vunpack.c.h.b16 %v805
    %v1713 = vunpack.c.l.b16 %v806
    %v1714 = vunpack.c.h.b16 %v806
    %v1715 = vunpack.c.l.b16 %v807
    %v1716 = vunpack.c.h.b16 %v807
    %v1717 = vunpack.c.l.b16 %v808
    %v1718 = vunpack.c.h.b16 %v808
    %v1719 = vunpack.c.l.b16 %v809
    %v1720 = vunpack.c.h.b16 %v809
    %v1721 = vunpack.c.l.b16 %v810
    %v1722 = vunpack.c.h.b16 %v810
    %v1723 = vunpack.c.l.b16 %v811
    %v1724 = vunpack.c.h.b16 %v811
    %v1725 = vunpack.c.l.b16 %v812
    %v1726 = vunpack.c.h.b16 %v812
    %v1727 = vunpack.c.l.b16 %v813
    %v1728 = vunpack.c.h.b16 %v813
    %v1729 = vunpack.c.l.b16 %v814
    %v1730 = vunpack.c.h.b16 %v814
    %v1731 = vunpack.c.l.b16 %v815
    %v1732 = vunpack.c.h.b16 %v815
    %v1733 = vunpack.c.l.b16 %v816
    %v1734 = vunpack.c.h.b16 %v816
    %v1735 = vunpack.c.l.b16 %v817
    %v1736 = vunpack.c.h.b16 %v817
    %v1737 = vunpack.c.l.b16 %v818
    %v1738 = vunpack.c.h.b16 %v818
    %v1739 = vunpack.c.l.b16 %v819
    %v1740 = vunpack.c.h.b16 %v819
    %v1741 = vunpack.c.l.b16 %v820
    %v1742 = vunpack.c.h.b16 %v820
    %v1743 = vunpack.c.l.b16 %v821
    %v1744 = vunpack.c.h.b16 %v821
    %v1745 = vunpack.c.l.b16 %v822
    %v1746 = vunpack.c.h.b16 %v822
    %v1747 = vunpack.c.l.b16 %v823
    %v1748 = vunpack.c.h.b16 %v823
    %v1749 = vunpack.c.l.b16 %v824
    %v1750 = vunpack.c.h.b16 %v824
    %v1751 = vunpack.c.l.b16 %v825
    %v1752 = vunpack.c.h.b16 %v825
    %v1753 = vunpack.c.l.b16 %v826
    %v1754 = vunpack.c.h.b16 %v826
    %v1755 = vunpack.c.l.b16 %v827
    %v1756 = vunpack.c.h.b16 %v827
    %v1757 = vunpack.c.l.b16 %v828
    %v1758 = vunpack.c.h.b16 %v828
    %v1759 = vunpack.c.l.b16 %v829
    %v1760 = vunpack.c.h.b16 %v829
    %v1761 = vunpack.c.l.b16 %v830
    %v1762 = vunpack.c.h.b16 %v830
    %v1763 = vunpack.c.l.b16 %v831
    %v1764 = vunpack.c.h.b16 %v831
    %v1765 = vunpack.c.l.b16 %v832
    %v1766 = vunpack.c.h.b16 %v832
    %v1767 = vunpack.c.l.b16 %v833
    %v1768 = vunpack.c.h.b16 %v833
    %v1769 = vunpack.c.l.b16 %v834
    %v1770 = vunpack.c.h.b16 %v834
    %v1771 = vunpack.c.l.b16 %v835
    %v1772 = vunpack.c.h.b16 %v835
    %v1773 = vunpack.c.l.b16 %v836
    %v1774 = vunpack.c.h.b16 %v836
    %v1775 = vunpack.c.l.b16 %v837
    %v1776 = vunpack.c.h.b16 %v837
    %v1777 = vunpack.c.l.b16 %v838
    %v1778 = vunpack.c.h.b16 %v838
    %v1779 = vunpack.c.l.b16 %v839
    %v1780 = vunpack.c.h.b16 %v839
    %v1781 = vunpack.c.l.b16 %v840
    %v1782 = vunpack.c.h.b16 %v840
    %v1783 = vunpack.c.l.b16 %v841
    %v1784 = vunpack.c.h.b16 %v841
    %v1785 = vunpack.c.l.b16 %v842
    %v1786 = vunpack.c.h.b16 %v842
    %v1787 = vunpack.c.l.b16 %v843
    %v1788 = vunpack.c.h.b16 %v843
    %v1789 = vunpack.c.l.b16 %v844
    %v1790 = vunpack.c.h.b16 %v844
    %v1791 = vunpack.c.l.b16 %v845
    %v1792 = vunpack.c.h.b16 %v845
    %v1793 = vunpack.c.l.b16 %v846
    %v1794 = vunpack.c.h.b16 %v846
    %v1795 = vunpack.c.l.b16 %v847
    %v1796 = vunpack.c.h.b16 %v847
    %v1797 = vunpack.c.l.b16 %v848
    %v1798 = vunpack.c.h.b16 %v848
    %v1799 = vunpack.c.l.b16 %v849
    %v1800 = vunpack.c.h.b16 %v849
    %v1801 = vunpack.c.l.b16 %v850
    %v1802 = vunpack.c.h.b16 %v850
    %v1803 = vunpack.c.l.b16 %v851
    %v1804 = vunpack.c.h.b16 %v851
    %v1805 = vunpack.c.l.b16 %v852
    %v1806 = vunpack.c.h.b16 %v852
    %v1807 = vunpack.c.l.b16 %v853
    %v1808 = vunpack.c.h.b16 %v853
    %v1809 = vunpack.c.l.b16 %v854
    %v1810 = vunpack.c.h.b16 %v854
    %v1811 = vunpack.c.l.b16 %v855
    %v1812 = vunpack.c.h.b16 %v855
    %v1813 = vunpack.c.l.b16 %v856
    %v1814 = vunpack.c.h.b16 %v856
    %v1815 = vunpack.c.l.b16 %v857
    %v1816 = vunpack.c.h.b16 %v857
    %v1817 = vunpack.c.l.b16 %v858
    %v1818 = vunpack.c.h.b16 %v858
    %v1819 = vunpack.c.l.b16 %v859
    %v1820 = vunpack.c.h.b16 %v859
    %v1821 = vunpack.c.l.b16 %v860
    %v1822 = vunpack.c.h.b16 %v860
    %v1823 = vunpack.c.l.b16 %v861
    %v1824 = vunpack.c.h.b16 %v861
    %v1825 = vunpack.c.l.b16 %v862
    %v1826 = vunpack.c.h.b16 %v862
    %v1827 = vunpack.c.l.b16 %v863
    %v1828 = vunpack.c.h.b16 %v863
    %v1829 = vunpack.c.l.b16 %v864
    %v1830 = vunpack.c.h.b16 %v864
    %v1831 = vunpack.c.l.b16 %v865
    %v1832 = vunpack.c.h.b16 %v865
    %v1833 = vunpack.c.l.b16 %v866
    %v1834 = vunpack.c.h.b16 %v866
    %v1835 = vunpack.c.l.b16 %v867
    %v1836 = vunpack.c.h.b16 %v867
    %v1837 = vunpack.c.l.b16 %v868
    %v1838 = vunpack.c.h.b16 %v868
    %v1839 = vunpack.c.l.b16 %v869
    %v1840 = vunpack.c.h.b16 %v869
    %v1841 = vunpack.c.l.b16 %v870
    %v1842 = vunpack.c.h.b16 %v870
    %v1843 = vunpack.c.l.b16 %v871
    %v1844 = vunpack.c.h.b16 %v871
    %v1845 = vunpack.c.l.b16 %v872
    %v1846 = vunpack.c.h.b16 %v872
    %v1847 = vunpack.c.l.b16 %v873
    %v1848 = vunpack.c.h.b16 %v873
    %v1849 = vunpack.c.l.b16 %v874
    %v1850 = vunpack.c.h.b16 %v874
    %v1851 = vunpack.c.l.b16 %v875
    %v1852 = vunpack.c.h.b16 %v875
    %v1853 = vunpack.c.l.b16 %v876
    %v1854 = vunpack.c.h.b16 %v876
    %v1855 = vunpack.c.l.b16 %v877
    %v1856 = vunpack.c.h.b16 %v877
    %v1857 = vunpack.c.l.b16 %v878
    %v1858 = vunpack.c.h.b16 %v878
    %v1859 = vpack.c.b16 %v1701, %v1699
    %v1860 = vpack.c.b16 %v1702, %v1700
    %v1861 = vpack.c.b16 %v1705, %v1703
    %v1862 = vpack.c.b16 %v1706, %v1704
    %v1863 = vpack.c.b16 %v1709, %v1707
    %v1864 = vpack.c.b16 %v1710, %v1708
    %v1865 = vpack.c.b16 %v1713, %v1711
    %v1866 = vpack.c.b16 %v1714, %v1712
    %v1867 = vpack.c.b16 %v1717, %v1715
    %v1868 = vpack.c.b16 %v1718, %v1716
    %v1869 = vpack.c.b16 %v1721, %v1719
    %v1870 = vpack.c.b16 %v1722, %v1720
    %v1871 = vpack.c.b16 %v1725, %v1723
    %v1872 = vpack.c.b16 %v1726, %v1724
    %v1873 = vpack.c.b16 %v1729, %v1727
    %v1874 = vpack.c.b16 %v1730, %v1728
    %v1875 = vpack.c.b16 %v1733, %v1731
    %v1876 = vpack.c.b16 %v1734, %v1732
    %v1877 = vpack.c.b16 %v1737, %v1735
    %v1878 = vpack.c.b16 %v1738, %v1736
    %v1879 = vpack.c.b16 %v1741, %v1739
    %v1880 = vpack.c.b16 %v1742, %v1740
    %v1881 = vpack.c.b16 %v1745, %v1743
    %v1882 = vpack.c.b16 %v1746, %v1744
    %v1883 = vpack.c.b16 %v1749, %v1747
    %v1884 = vpack.c.b16 %v1750, %v1748
    %v1885 = vpack.c.b16 %v1753, %v1751
    %v1886 = vpack.c.b16 %v1754, %v1752
    %v1887 = vpack.c.b16 %v1757, %v1755
    %v1888 = vpack.c.b16 %v1758, %v1756
    %v1889 = vpack.c.b16 %v1761, %v1759
    %v1890 = vpack.c.b16 %v1762, %v1760
    %v1891 = vpack.c.b16 %v1765, %v1763
    %v1892 = vpack.c.b16 %v1766, %v1764
    %v1893 = vpack.c.b16 %v1769, %v1767
    %v1894 = vpack.c.b16 %v1770, %v1768
    %v1895 = vpack.c.b16 %v1773, %v1771
    %v1896 = vpack.c.b16 %v1774, %v1772
    %v1897 = vpack.c.b16 %v1777, %v1775
    %v1898 = vpack.c.b16 %v1778, %v1776
    %v1899 = vpack.c.b16 %v1781, %v1779
    %v1900 = vpack.c.b16 %v1782, %v1780
    %v1901 = vpack.c.b16 %v1785, %v1783
    %v1902 = vpack.c.b16 %v1786, %v1784
    %v1903 = vpack.c.b16 %v1789, %v1787
    %v1904 = vpack.c.b16 %v1790, %v1788
    %v1905 = vpack.c.b16 %v1793, %v1791
    %v1906 = vpack.c.b16 %v1794, %v1792
    %v1907 = vpack.c.b16 %v1797, %v1795
    %v1908 = vpack.c.b16 %v1798, %v1796
    %v1909 = vpack.c.b16 %v1801, %v1799
    %v1910 = vpack.c.b16 %v1802, %v1800
    %v1911 = vpack.c.b16 %v1805, %v1803
    %v1912 = vpack.c.b16 %v1806, %v1804
    %v1913 = vpack.c.b16 %v1809, %v1807
    %v1914 = vpack.c.b16 %v1810, %v1808
    %v1915 = vpack.c.b16 %v1813, %v1811
    %v1916 = vpack.c.b16 %v1814, %v1812
    %v1917 = vpack.c.b16 %v1817, %v1815
    %v1918 = vpack.c.b16 %v1818, %v1816
    %v1919 = vpack.c.b16 %v1821, %v1819
    %v1920 = vpack.c.b16 %v1822, %v1820
    %v1921 = vpack.c.b16 %v1825, %v1823
    %v1922 = vpack.c.b16 %v1826, %v1824
    %v1923 = vpack.c.b16 %v1829, %v1827
    %v1924 = vpack.c.b16 %v1830, %v1828
    %v1925 = vpack.c.b16 %v1833, %v1831
    %v1926 = vpack.c.b16 %v1834, %v1832
    %v1927 = vpack.c.b16 %v1837, %v1835
    %v1928 = vpack.c.b16 %v1838, %v1836
    %v1929 = vpack.c.b16 %v1841, %v1839
    %v1930 = vpack.c.b16 %v1842, %v1840
    %v1931 = vpack.c.b16 %v1845, %v1843
    %v1932 = vpack.c.b16 %v1846, %v1844
    %v1933 = vpack.c.b16 %v1849, %v1847
    %v1934 = vpack.c.b16 %v1850, %v1848
    %v1935 = vpack.c.b16 %v1853, %v1851
    %v1936 = vpack.c.b16 %v1854, %v1852
    %v1937 = vpack.c.b16 %v1857, %v1855
    %v1938 = vpack.c.b16 %v1858, %v1856
    %2019 = vmatprep.subr.bf16.mxu0 %v1874
    %2020 = vmatpush1.bf16.msra.mxu0 %v1873
    %2021 = vmatprep.subr.bf16.mxu0 %v1872
    %2022 = vmatpush1.bf16.msra.mxu0 %v1871
    %2023 = vmatprep.subr.bf16.mxu0 %v1870
    %2024 = vmatpush1.bf16.msra.mxu0 %v1869
    %2025 = vmatprep.subr.bf16.mxu0 %v1868
    %2026 = vmatpush1.bf16.msra.mxu0 %v1867
    %2027 = vmatprep.subr.bf16.mxu0 %v1866
    %2028 = vmatpush1.bf16.msra.mxu0 %v1865
    %2029 = vmatprep.subr.bf16.mxu0 %v1864
    %2030 = vmatpush1.bf16.msra.mxu0 %v1863
    %2031 = vmatprep.subr.bf16.mxu0 %v1862
    %2032 = vmatpush1.bf16.msra.mxu0 %v1861
    %2033 = vmatprep.subr.bf16.mxu0 %v1860
    %2034 = vmatpush1.bf16.msra.mxu0 %v1859
    %2035 = vmatprep.subr.bf16.mxu0 %v1890
    %2036 = vmatpush2.bf16.msra.mxu0 %v1889
    %2037 = vmatprep.subr.bf16.mxu0 %v1888
    %2038 = vmatpush2.bf16.msra.mxu0 %v1887
    %2039 = vmatprep.subr.bf16.mxu0 %v1886
    %2040 = vmatpush2.bf16.msra.mxu0 %v1885
    %2041 = vmatprep.subr.bf16.mxu0 %v1884
    %2042 = vmatpush2.bf16.msra.mxu0 %v1883
    %2043 = vmatprep.subr.bf16.mxu0 %v1882
    %2044 = vmatpush2.bf16.msra.mxu0 %v1881
    %2045 = vmatprep.subr.bf16.mxu0 %v1880
    %2046 = vmatpush2.bf16.msra.mxu0 %v1879
    %2047 = vmatprep.subr.bf16.mxu0 %v1878
    %2048 = vmatpush2.bf16.msra.mxu0 %v1877
    %2049 = vmatprep.subr.bf16.mxu0 %v1876
    %2050 = vmatpush2.bf16.msra.mxu0 %v1875
    %2051 = vmatprep.mubr.bf16.mxu0 %v1340
    %2052 = vmatmul.mubr.bf16.gmra.mxu0 %v1339
    %v2053 = vpop.f32.mrf.mxu0
    %v2054 = vadd.f32 %v884, %v2053
    %v2055 = vpop.f32.mrf.mxu0
    %v2056 = vadd.f32 %v888, %v2055
    %v2057 = vpop.f32.mrf.mxu0
    %v2058 = vadd.f32 %v884, %v2057
    %v2059 = vpop.f32.mrf.mxu0
    %v2060 = vadd.f32 %v888, %v2059
    %2061 = vmatprep.mubr.bf16.mxu0 %v1345
    %2062 = vmatmul.mubr.bf16.gmra.mxu0 %v1344
    %v2063 = vpop.f32.mrf.mxu0
    %v2064 = vadd.f32 %v884, %v2063
    %v2065 = vpop.f32.mrf.mxu0
    %v2066 = vadd.f32 %v888, %v2065
    %v2067 = vpop.f32.mrf.mxu0
    %v2068 = vadd.f32 %v884, %v2067
    %v2069 = vpop.f32.mrf.mxu0
    %v2070 = vadd.f32 %v888, %v2069
    %2071 = vmatprep.mubr.bf16.mxu0 %v1350
    %2072 = vmatmul.mubr.bf16.gmra.mxu0 %v1349
    %v2073 = vpop.f32.mrf.mxu0
    %v2074 = vadd.f32 %v884, %v2073
    %v2075 = vpop.f32.mrf.mxu0
    %v2076 = vadd.f32 %v888, %v2075
    %v2077 = vpop.f32.mrf.mxu0
    %v2078 = vadd.f32 %v884, %v2077
    %v2079 = vpop.f32.mrf.mxu0
    %v2080 = vadd.f32 %v888, %v2079
    %2081 = vmatprep.mubr.bf16.mxu0 %v1355
    %2082 = vmatmul.mubr.bf16.gmra.mxu0 %v1354
    %v2083 = vpop.f32.mrf.mxu0
    %v2084 = vadd.f32 %v884, %v2083
    %v2085 = vpop.f32.mrf.mxu0
    %v2086 = vadd.f32 %v888, %v2085
    %v2087 = vpop.f32.mrf.mxu0
    %v2088 = vadd.f32 %v884, %v2087
    %v2089 = vpop.f32.mrf.mxu0
    %v2090 = vadd.f32 %v888, %v2089
    %2091 = vmatprep.mubr.bf16.mxu0 %v1360
    %2092 = vmatmul.mubr.bf16.gmra.mxu0 %v1359
    %v2093 = vpop.f32.mrf.mxu0
    %v2094 = vadd.f32 %v884, %v2093
    %v2095 = vpop.f32.mrf.mxu0
    %v2096 = vadd.f32 %v888, %v2095
    %v2097 = vpop.f32.mrf.mxu0
    %v2098 = vadd.f32 %v884, %v2097
    %v2099 = vpop.f32.mrf.mxu0
    %v2100 = vadd.f32 %v888, %v2099
    %2101 = vmatprep.mubr.bf16.mxu0 %v1365
    %2102 = vmatmul.mubr.bf16.gmra.mxu0 %v1364
    %v2103 = vpop.f32.mrf.mxu0
    %v2104 = vadd.f32 %v884, %v2103
    %v2105 = vpop.f32.mrf.mxu0
    %v2106 = vadd.f32 %v888, %v2105
    %v2107 = vpop.f32.mrf.mxu0
    %v2108 = vadd.f32 %v884, %v2107
    %v2109 = vpop.f32.mrf.mxu0
    %v2110 = vadd.f32 %v888, %v2109
    %2111 = vmatprep.mubr.bf16.mxu0 %v1370
    %2112 = vmatmul.mubr.bf16.gmra.mxu0 %v1369
    %v2113 = vpop.f32.mrf.mxu0
    %v2114 = vadd.f32 %v884, %v2113
    %v2115 = vpop.f32.mrf.mxu0
    %v2116 = vadd.f32 %v888, %v2115
    %v2117 = vpop.f32.mrf.mxu0
    %v2118 = vadd.f32 %v884, %v2117
    %v2119 = vpop.f32.mrf.mxu0
    %v2120 = vadd.f32 %v888, %v2119
    %2121 = vmatprep.mubr.bf16.mxu0 %v1375
    %2122 = vmatmul.mubr.bf16.gmra.mxu0 %v1374
    %v2123 = vpop.f32.mrf.mxu0
    %v2124 = vadd.f32 %v884, %v2123
    %v2125 = vpop.f32.mrf.mxu0
    %v2126 = vadd.f32 %v888, %v2125
    %v2127 = vpop.f32.mrf.mxu0
    %v2128 = vadd.f32 %v884, %v2127
    %v2129 = vpop.f32.mrf.mxu0
    %v2130 = vadd.f32 %v888, %v2129
    %2131 = vmatprep.mubr.bf16.mxu0 %v1380
    %2132 = vmatmul.mubr.bf16.gmra.mxu0 %v1379
    %v2133 = vpop.f32.mrf.mxu0
    %v2134 = vadd.f32 %v884, %v2133
    %v2135 = vpop.f32.mrf.mxu0
    %v2136 = vadd.f32 %v888, %v2135
    %v2137 = vpop.f32.mrf.mxu0
    %v2138 = vadd.f32 %v884, %v2137
    %v2139 = vpop.f32.mrf.mxu0
    %v2140 = vadd.f32 %v888, %v2139
    %2141 = vmatprep.mubr.bf16.mxu0 %v1385
    %2142 = vmatmul.mubr.bf16.gmra.mxu0 %v1384
    %v2143 = vpop.f32.mrf.mxu0
    %v2144 = vadd.f32 %v884, %v2143
    %v2145 = vpop.f32.mrf.mxu0
    %v2146 = vadd.f32 %v888, %v2145
    %v2147 = vpop.f32.mrf.mxu0
    %v2148 = vadd.f32 %v884, %v2147
    %v2149 = vpop.f32.mrf.mxu0
    %v2150 = vadd.f32 %v888, %v2149
    %2151 = vmatprep.mubr.bf16.mxu0 %v1390
    %2152 = vmatmul.mubr.bf16.gmra.mxu0 %v1389
    %v2153 = vpop.f32.mrf.mxu0
    %v2154 = vadd.f32 %v884, %v2153
    %v2155 = vpop.f32.mrf.mxu0
    %v2156 = vadd.f32 %v888, %v2155
    %v2157 = vpop.f32.mrf.mxu0
    %v2158 = vadd.f32 %v884, %v2157
    %v2159 = vpop.f32.mrf.mxu0
    %v2160 = vadd.f32 %v888, %v2159
    %2161 = vmatprep.mubr.bf16.mxu0 %v1395
    %2162 = vmatmul.mubr.bf16.gmra.mxu0 %v1394
    %v2163 = vpop.f32.mrf.mxu0
    %v2164 = vadd.f32 %v884, %v2163
    %v2165 = vpop.f32.mrf.mxu0
    %v2166 = vadd.f32 %v888, %v2165
    %v2167 = vpop.f32.mrf.mxu0
    %v2168 = vadd.f32 %v884, %v2167
    %v2169 = vpop.f32.mrf.mxu0
    %v2170 = vadd.f32 %v888, %v2169
    %2171 = vmatprep.mubr.bf16.mxu0 %v1400
    %2172 = vmatmul.mubr.bf16.gmra.mxu0 %v1399
    %v2173 = vpop.f32.mrf.mxu0
    %v2174 = vadd.f32 %v884, %v2173
    %v2175 = vpop.f32.mrf.mxu0
    %v2176 = vadd.f32 %v888, %v2175
    %v2177 = vpop.f32.mrf.mxu0
    %v2178 = vadd.f32 %v884, %v2177
    %v2179 = vpop.f32.mrf.mxu0
    %v2180 = vadd.f32 %v888, %v2179
    %2181 = vmatprep.mubr.bf16.mxu0 %v1405
    %2182 = vmatmul.mubr.bf16.gmra.mxu0 %v1404
    %v2183 = vpop.f32.mrf.mxu0
    %v2184 = vadd.f32 %v884, %v2183
    %v2185 = vpop.f32.mrf.mxu0
    %v2186 = vadd.f32 %v888, %v2185
    %v2187 = vpop.f32.mrf.mxu0
    %v2188 = vadd.f32 %v884, %v2187
    %v2189 = vpop.f32.mrf.mxu0
    %v2190 = vadd.f32 %v888, %v2189
    %2191 = vmatprep.mubr.bf16.mxu0 %v1410
    %2192 = vmatmul.mubr.bf16.gmra.mxu0 %v1409
    %v2193 = vpop.f32.mrf.mxu0
    %v2194 = vadd.f32 %v884, %v2193
    %v2195 = vpop.f32.mrf.mxu0
    %v2196 = vadd.f32 %v888, %v2195
    %v2197 = vpop.f32.mrf.mxu0
    %v2198 = vadd.f32 %v884, %v2197
    %v2199 = vpop.f32.mrf.mxu0
    %v2200 = vadd.f32 %v888, %v2199
    %2201 = vmatprep.mubr.bf16.mxu0 %v1415
    %2202 = vmatmul.mubr.bf16.gmra.mxu0 %v1414
    %v2203 = vpop.f32.mrf.mxu0
    %v2204 = vadd.f32 %v884, %v2203
    %v2205 = vpop.f32.mrf.mxu0
    %v2206 = vadd.f32 %v888, %v2205
    %v2207 = vpop.f32.mrf.mxu0
    %v2208 = vadd.f32 %v884, %v2207
    %v2209 = vpop.f32.mrf.mxu0
    %v2210 = vadd.f32 %v888, %v2209
    %2211 = vmatprep.mubr.bf16.mxu0 %v1420
    %2212 = vmatmul.mubr.bf16.gmra.mxu0 %v1419
    %v2213 = vpop.f32.mrf.mxu0
    %v2214 = vadd.f32 %v884, %v2213
    %v2215 = vpop.f32.mrf.mxu0
    %v2216 = vadd.f32 %v888, %v2215
    %v2217 = vpop.f32.mrf.mxu0
    %v2218 = vadd.f32 %v884, %v2217
    %v2219 = vpop.f32.mrf.mxu0
    %v2220 = vadd.f32 %v888, %v2219
    %2221 = vmatprep.mubr.bf16.mxu0 %v1425
    %2222 = vmatmul.mubr.bf16.gmra.mxu0 %v1424
    %v2223 = vpop.f32.mrf.mxu0
    %v2224 = vadd.f32 %v884, %v2223
    %v2225 = vpop.f32.mrf.mxu0
    %v2226 = vadd.f32 %v888, %v2225
    %v2227 = vpop.f32.mrf.mxu0
    %v2228 = vadd.f32 %v884, %v2227
    %v2229 = vpop.f32.mrf.mxu0
    %v2230 = vadd.f32 %v888, %v2229
    %2231 = vmatprep.mubr.bf16.mxu0 %v1430
    %2232 = vmatmul.mubr.bf16.gmra.mxu0 %v1429
    %v2233 = vpop.f32.mrf.mxu0
    %v2234 = vadd.f32 %v884, %v2233
    %v2235 = vpop.f32.mrf.mxu0
    %v2236 = vadd.f32 %v888, %v2235
    %v2237 = vpop.f32.mrf.mxu0
    %v2238 = vadd.f32 %v884, %v2237
    %v2239 = vpop.f32.mrf.mxu0
    %v2240 = vadd.f32 %v888, %v2239
    %2241 = vmatprep.mubr.bf16.mxu0 %v1435
    %2242 = vmatmul.mubr.bf16.gmra.mxu0 %v1434
    %v2243 = vpop.f32.mrf.mxu0
    %v2244 = vadd.f32 %v884, %v2243
    %v2245 = vpop.f32.mrf.mxu0
    %v2246 = vadd.f32 %v888, %v2245
    %v2247 = vpop.f32.mrf.mxu0
    %v2248 = vadd.f32 %v884, %v2247
    %v2249 = vpop.f32.mrf.mxu0
    %v2250 = vadd.f32 %v888, %v2249
    %2251 = vmatprep.mubr.bf16.mxu0 %v1440
    %2252 = vmatmul.mubr.bf16.gmra.mxu0 %v1439
    %v2253 = vpop.f32.mrf.mxu0
    %v2254 = vadd.f32 %v884, %v2253
    %v2255 = vpop.f32.mrf.mxu0
    %v2256 = vadd.f32 %v888, %v2255
    %v2257 = vpop.f32.mrf.mxu0
    %v2258 = vadd.f32 %v884, %v2257
    %v2259 = vpop.f32.mrf.mxu0
    %v2260 = vadd.f32 %v888, %v2259
    %2261 = vmatprep.mubr.bf16.mxu0 %v1445
    %2262 = vmatmul.mubr.bf16.gmra.mxu0 %v1444
    %v2263 = vpop.f32.mrf.mxu0
    %v2264 = vadd.f32 %v884, %v2263
    %v2265 = vpop.f32.mrf.mxu0
    %v2266 = vadd.f32 %v888, %v2265
    %v2267 = vpop.f32.mrf.mxu0
    %v2268 = vadd.f32 %v884, %v2267
    %v2269 = vpop.f32.mrf.mxu0
    %v2270 = vadd.f32 %v888, %v2269
    %2271 = vmatprep.mubr.bf16.mxu0 %v1450
    %2272 = vmatmul.mubr.bf16.gmra.mxu0 %v1449
    %v2273 = vpop.f32.mrf.mxu0
    %v2274 = vadd.f32 %v884, %v2273
    %v2275 = vpop.f32.mrf.mxu0
    %v2276 = vadd.f32 %v888, %v2275
    %v2277 = vpop.f32.mrf.mxu0
    %v2278 = vadd.f32 %v884, %v2277
    %v2279 = vpop.f32.mrf.mxu0
    %v2280 = vadd.f32 %v888, %v2279
    %2281 = vmatprep.mubr.bf16.mxu0 %v1455
    %2282 = vmatmul.mubr.bf16.gmra.mxu0 %v1454
    %v2283 = vpop.f32.mrf.mxu0
    %v2284 = vadd.f32 %v884, %v2283
    %v2285 = vpop.f32.mrf.mxu0
    %v2286 = vadd.f32 %v888, %v2285
    %v2287 = vpop.f32.mrf.mxu0
    %v2288 = vadd.f32 %v884, %v2287
    %v2289 = vpop.f32.mrf.mxu0
    %v2290 = vadd.f32 %v888, %v2289
    %2291 = vmatprep.mubr.bf16.mxu0 %v1460
    %2292 = vmatmul.mubr.bf16.gmra.mxu0 %v1459
    %v2293 = vpop.f32.mrf.mxu0
    %v2294 = vadd.f32 %v884, %v2293
    %v2295 = vpop.f32.mrf.mxu0
    %v2296 = vadd.f32 %v888, %v2295
    %v2297 = vpop.f32.mrf.mxu0
    %v2298 = vadd.f32 %v884, %v2297
    %v2299 = vpop.f32.mrf.mxu0
    %v2300 = vadd.f32 %v888, %v2299
    %2301 = vmatprep.mubr.bf16.mxu0 %v1465
    %2302 = vmatmul.mubr.bf16.gmra.mxu0 %v1464
    %v2303 = vpop.f32.mrf.mxu0
    %v2304 = vadd.f32 %v884, %v2303
    %v2305 = vpop.f32.mrf.mxu0
    %v2306 = vadd.f32 %v888, %v2305
    %v2307 = vpop.f32.mrf.mxu0
    %v2308 = vadd.f32 %v884, %v2307
    %v2309 = vpop.f32.mrf.mxu0
    %v2310 = vadd.f32 %v888, %v2309
    %2311 = vmatprep.mubr.bf16.mxu0 %v1470
    %2312 = vmatmul.mubr.bf16.gmra.mxu0 %v1469
    %v2313 = vpop.f32.mrf.mxu0
    %v2314 = vadd.f32 %v884, %v2313
    %v2315 = vpop.f32.mrf.mxu0
    %v2316 = vadd.f32 %v888, %v2315
    %v2317 = vpop.f32.mrf.mxu0
    %v2318 = vadd.f32 %v884, %v2317
    %v2319 = vpop.f32.mrf.mxu0
    %v2320 = vadd.f32 %v888, %v2319
    %2321 = vmatprep.mubr.bf16.mxu0 %v1475
    %2322 = vmatmul.mubr.bf16.gmra.mxu0 %v1474
    %v2323 = vpop.f32.mrf.mxu0
    %v2324 = vadd.f32 %v884, %v2323
    %v2325 = vpop.f32.mrf.mxu0
    %v2326 = vadd.f32 %v888, %v2325
    %v2327 = vpop.f32.mrf.mxu0
    %v2328 = vadd.f32 %v884, %v2327
    %v2329 = vpop.f32.mrf.mxu0
    %v2330 = vadd.f32 %v888, %v2329
    %2331 = vdwg.mxu0
    %2332 = vmatprep.subr.bf16.mxu0 %v1906
    %2333 = vmatpush1.bf16.msra.mxu0 %v1905
    %2334 = vmatprep.subr.bf16.mxu0 %v1904
    %2335 = vmatpush1.bf16.msra.mxu0 %v1903
    %2336 = vmatprep.subr.bf16.mxu0 %v1902
    %2337 = vmatpush1.bf16.msra.mxu0 %v1901
    %2338 = vmatprep.subr.bf16.mxu0 %v1900
    %2339 = vmatpush1.bf16.msra.mxu0 %v1899
    %2340 = vmatprep.subr.bf16.mxu0 %v1898
    %2341 = vmatpush1.bf16.msra.mxu0 %v1897
    %2342 = vmatprep.subr.bf16.mxu0 %v1896
    %2343 = vmatpush1.bf16.msra.mxu0 %v1895
    %2344 = vmatprep.subr.bf16.mxu0 %v1894
    %2345 = vmatpush1.bf16.msra.mxu0 %v1893
    %2346 = vmatprep.subr.bf16.mxu0 %v1892
    %2347 = vmatpush1.bf16.msra.mxu0 %v1891
    %2348 = vmatprep.subr.bf16.mxu0 %v1922
    %2349 = vmatpush2.bf16.msra.mxu0 %v1921
    %2350 = vmatprep.subr.bf16.mxu0 %v1920
    %2351 = vmatpush2.bf16.msra.mxu0 %v1919
    %2352 = vmatprep.subr.bf16.mxu0 %v1918
    %2353 = vmatpush2.bf16.msra.mxu0 %v1917
    %2354 = vmatprep.subr.bf16.mxu0 %v1916
    %2355 = vmatpush2.bf16.msra.mxu0 %v1915
    %2356 = vmatprep.subr.bf16.mxu0 %v1914
    %2357 = vmatpush2.bf16.msra.mxu0 %v1913
    %2358 = vmatprep.subr.bf16.mxu0 %v1912
    %2359 = vmatpush2.bf16.msra.mxu0 %v1911
    %2360 = vmatprep.subr.bf16.mxu0 %v1910
    %2361 = vmatpush2.bf16.msra.mxu0 %v1909
    %2362 = vmatprep.subr.bf16.mxu0 %v1908
    %2363 = vmatpush2.bf16.msra.mxu0 %v1907
    %2364 = vmatprep.mubr.bf16.mxu0 %v1342
    %2365 = vmatmul.mubr.bf16.gmra.mxu0 %v1341
    %v2366 = vpop.f32.mrf.mxu0
    %v2367 = vadd.f32 %v2054, %v2366
    %v2368 = vpop.f32.mrf.mxu0
    %v2369 = vadd.f32 %v2056, %v2368
    %v2370 = vpop.f32.mrf.mxu0
    %v2371 = vadd.f32 %v2058, %v2370
    %v2372 = vpop.f32.mrf.mxu0
    %v2373 = vadd.f32 %v2060, %v2372
    %2374 = vmatprep.mubr.bf16.mxu0 %v1347
    %2375 = vmatmul.mubr.bf16.gmra.mxu0 %v1346
    %v2376 = vpop.f32.mrf.mxu0
    %v2377 = vadd.f32 %v2064, %v2376
    %v2378 = vpop.f32.mrf.mxu0
    %v2379 = vadd.f32 %v2066, %v2378
    %v2380 = vpop.f32.mrf.mxu0
    %v2381 = vadd.f32 %v2068, %v2380
    %v2382 = vpop.f32.mrf.mxu0
    %v2383 = vadd.f32 %v2070, %v2382
    %2384 = vmatprep.mubr.bf16.mxu0 %v1352
    %2385 = vmatmul.mubr.bf16.gmra.mxu0 %v1351
    %v2386 = vpop.f32.mrf.mxu0
    %v2387 = vadd.f32 %v2074, %v2386
    %v2388 = vpop.f32.mrf.mxu0
    %v2389 = vadd.f32 %v2076, %v2388
    %v2390 = vpop.f32.mrf.mxu0
    %v2391 = vadd.f32 %v2078, %v2390
    %v2392 = vpop.f32.mrf.mxu0
    %v2393 = vadd.f32 %v2080, %v2392
    %2394 = vmatprep.mubr.bf16.mxu0 %v1357
    %2395 = vmatmul.mubr.bf16.gmra.mxu0 %v1356
    %v2396 = vpop.f32.mrf.mxu0
    %v2397 = vadd.f32 %v2084, %v2396
    %v2398 = vpop.f32.mrf.mxu0
    %v2399 = vadd.f32 %v2086, %v2398
    %v2400 = vpop.f32.mrf.mxu0
    %v2401 = vadd.f32 %v2088, %v2400
    %v2402 = vpop.f32.mrf.mxu0
    %v2403 = vadd.f32 %v2090, %v2402
    %2404 = vmatprep.mubr.bf16.mxu0 %v1362
    %2405 = vmatmul.mubr.bf16.gmra.mxu0 %v1361
    %v2406 = vpop.f32.mrf.mxu0
    %v2407 = vadd.f32 %v2094, %v2406
    %v2408 = vpop.f32.mrf.mxu0
    %v2409 = vadd.f32 %v2096, %v2408
    %v2410 = vpop.f32.mrf.mxu0
    %v2411 = vadd.f32 %v2098, %v2410
    %v2412 = vpop.f32.mrf.mxu0
    %v2413 = vadd.f32 %v2100, %v2412
    %2414 = vmatprep.mubr.bf16.mxu0 %v1367
    %2415 = vmatmul.mubr.bf16.gmra.mxu0 %v1366
    %v2416 = vpop.f32.mrf.mxu0
    %v2417 = vadd.f32 %v2104, %v2416
    %v2418 = vpop.f32.mrf.mxu0
    %v2419 = vadd.f32 %v2106, %v2418
    %v2420 = vpop.f32.mrf.mxu0
    %v2421 = vadd.f32 %v2108, %v2420
    %v2422 = vpop.f32.mrf.mxu0
    %v2423 = vadd.f32 %v2110, %v2422
    %2424 = vmatprep.mubr.bf16.mxu0 %v1372
    %2425 = vmatmul.mubr.bf16.gmra.mxu0 %v1371
    %v2426 = vpop.f32.mrf.mxu0
    %v2427 = vadd.f32 %v2114, %v2426
    %v2428 = vpop.f32.mrf.mxu0
    %v2429 = vadd.f32 %v2116, %v2428
    %v2430 = vpop.f32.mrf.mxu0
    %v2431 = vadd.f32 %v2118, %v2430
    %v2432 = vpop.f32.mrf.mxu0
    %v2433 = vadd.f32 %v2120, %v2432
    %2434 = vmatprep.mubr.bf16.mxu0 %v1377
    %2435 = vmatmul.mubr.bf16.gmra.mxu0 %v1376
    %v2436 = vpop.f32.mrf.mxu0
    %v2437 = vadd.f32 %v2124, %v2436
    %v2438 = vpop.f32.mrf.mxu0
    %v2439 = vadd.f32 %v2126, %v2438
    %v2440 = vpop.f32.mrf.mxu0
    %v2441 = vadd.f32 %v2128, %v2440
    %v2442 = vpop.f32.mrf.mxu0
    %v2443 = vadd.f32 %v2130, %v2442
    %2444 = vmatprep.mubr.bf16.mxu0 %v1382
    %2445 = vmatmul.mubr.bf16.gmra.mxu0 %v1381
    %v2446 = vpop.f32.mrf.mxu0
    %v2447 = vadd.f32 %v2134, %v2446
    %v2448 = vpop.f32.mrf.mxu0
    %v2449 = vadd.f32 %v2136, %v2448
    %v2450 = vpop.f32.mrf.mxu0
    %v2451 = vadd.f32 %v2138, %v2450
    %v2452 = vpop.f32.mrf.mxu0
    %v2453 = vadd.f32 %v2140, %v2452
    %2454 = vmatprep.mubr.bf16.mxu0 %v1387
    %2455 = vmatmul.mubr.bf16.gmra.mxu0 %v1386
    %v2456 = vpop.f32.mrf.mxu0
    %v2457 = vadd.f32 %v2144, %v2456
    %v2458 = vpop.f32.mrf.mxu0
    %v2459 = vadd.f32 %v2146, %v2458
    %v2460 = vpop.f32.mrf.mxu0
    %v2461 = vadd.f32 %v2148, %v2460
    %v2462 = vpop.f32.mrf.mxu0
    %v2463 = vadd.f32 %v2150, %v2462
    %2464 = vmatprep.mubr.bf16.mxu0 %v1392
    %2465 = vmatmul.mubr.bf16.gmra.mxu0 %v1391
    %v2466 = vpop.f32.mrf.mxu0
    %v2467 = vadd.f32 %v2154, %v2466
    %v2468 = vpop.f32.mrf.mxu0
    %v2469 = vadd.f32 %v2156, %v2468
    %v2470 = vpop.f32.mrf.mxu0
    %v2471 = vadd.f32 %v2158, %v2470
    %v2472 = vpop.f32.mrf.mxu0
    %v2473 = vadd.f32 %v2160, %v2472
    %2474 = vmatprep.mubr.bf16.mxu0 %v1397
    %2475 = vmatmul.mubr.bf16.gmra.mxu0 %v1396
    %v2476 = vpop.f32.mrf.mxu0
    %v2477 = vadd.f32 %v2164, %v2476
    %v2478 = vpop.f32.mrf.mxu0
    %v2479 = vadd.f32 %v2166, %v2478
    %v2480 = vpop.f32.mrf.mxu0
    %v2481 = vadd.f32 %v2168, %v2480
    %v2482 = vpop.f32.mrf.mxu0
    %v2483 = vadd.f32 %v2170, %v2482
    %2484 = vmatprep.mubr.bf16.mxu0 %v1402
    %2485 = vmatmul.mubr.bf16.gmra.mxu0 %v1401
    %v2486 = vpop.f32.mrf.mxu0
    %v2487 = vadd.f32 %v2174, %v2486
    %v2488 = vpop.f32.mrf.mxu0
    %v2489 = vadd.f32 %v2176, %v2488
    %v2490 = vpop.f32.mrf.mxu0
    %v2491 = vadd.f32 %v2178, %v2490
    %v2492 = vpop.f32.mrf.mxu0
    %v2493 = vadd.f32 %v2180, %v2492
    %2494 = vmatprep.mubr.bf16.mxu0 %v1407
    %2495 = vmatmul.mubr.bf16.gmra.mxu0 %v1406
    %v2496 = vpop.f32.mrf.mxu0
    %v2497 = vadd.f32 %v2184, %v2496
    %v2498 = vpop.f32.mrf.mxu0
    %v2499 = vadd.f32 %v2186, %v2498
    %v2500 = vpop.f32.mrf.mxu0
    %v2501 = vadd.f32 %v2188, %v2500
    %v2502 = vpop.f32.mrf.mxu0
    %v2503 = vadd.f32 %v2190, %v2502
    %2504 = vmatprep.mubr.bf16.mxu0 %v1412
    %2505 = vmatmul.mubr.bf16.gmra.mxu0 %v1411
    %v2506 = vpop.f32.mrf.mxu0
    %v2507 = vadd.f32 %v2194, %v2506
    %v2508 = vpop.f32.mrf.mxu0
    %v2509 = vadd.f32 %v2196, %v2508
    %v2510 = vpop.f32.mrf.mxu0
    %v2511 = vadd.f32 %v2198, %v2510
    %v2512 = vpop.f32.mrf.mxu0
    %v2513 = vadd.f32 %v2200, %v2512
    %2514 = vmatprep.mubr.bf16.mxu0 %v1417
    %2515 = vmatmul.mubr.bf16.gmra.mxu0 %v1416
    %v2516 = vpop.f32.mrf.mxu0
    %v2517 = vadd.f32 %v2204, %v2516
    %v2518 = vpop.f32.mrf.mxu0
    %v2519 = vadd.f32 %v2206, %v2518
    %v2520 = vpop.f32.mrf.mxu0
    %v2521 = vadd.f32 %v2208, %v2520
    %v2522 = vpop.f32.mrf.mxu0
    %v2523 = vadd.f32 %v2210, %v2522
    %2524 = vmatprep.mubr.bf16.mxu0 %v1422
    %2525 = vmatmul.mubr.bf16.gmra.mxu0 %v1421
    %v2526 = vpop.f32.mrf.mxu0
    %v2527 = vadd.f32 %v2214, %v2526
    %v2528 = vpop.f32.mrf.mxu0
    %v2529 = vadd.f32 %v2216, %v2528
    %v2530 = vpop.f32.mrf.mxu0
    %v2531 = vadd.f32 %v2218, %v2530
    %v2532 = vpop.f32.mrf.mxu0
    %v2533 = vadd.f32 %v2220, %v2532
    %2534 = vmatprep.mubr.bf16.mxu0 %v1427
    %2535 = vmatmul.mubr.bf16.gmra.mxu0 %v1426
    %v2536 = vpop.f32.mrf.mxu0
    %v2537 = vadd.f32 %v2224, %v2536
    %v2538 = vpop.f32.mrf.mxu0
    %v2539 = vadd.f32 %v2226, %v2538
    %v2540 = vpop.f32.mrf.mxu0
    %v2541 = vadd.f32 %v2228, %v2540
    %v2542 = vpop.f32.mrf.mxu0
    %v2543 = vadd.f32 %v2230, %v2542
    %2544 = vmatprep.mubr.bf16.mxu0 %v1432
    %2545 = vmatmul.mubr.bf16.gmra.mxu0 %v1431
    %v2546 = vpop.f32.mrf.mxu0
    %v2547 = vadd.f32 %v2234, %v2546
    %v2548 = vpop.f32.mrf.mxu0
    %v2549 = vadd.f32 %v2236, %v2548
    %v2550 = vpop.f32.mrf.mxu0
    %v2551 = vadd.f32 %v2238, %v2550
    %v2552 = vpop.f32.mrf.mxu0
    %v2553 = vadd.f32 %v2240, %v2552
    %2554 = vmatprep.mubr.bf16.mxu0 %v1437
    %2555 = vmatmul.mubr.bf16.gmra.mxu0 %v1436
    %v2556 = vpop.f32.mrf.mxu0
    %v2557 = vadd.f32 %v2244, %v2556
    %v2558 = vpop.f32.mrf.mxu0
    %v2559 = vadd.f32 %v2246, %v2558
    %v2560 = vpop.f32.mrf.mxu0
    %v2561 = vadd.f32 %v2248, %v2560
    %v2562 = vpop.f32.mrf.mxu0
    %v2563 = vadd.f32 %v2250, %v2562
    %2564 = vmatprep.mubr.bf16.mxu0 %v1442
    %2565 = vmatmul.mubr.bf16.gmra.mxu0 %v1441
    %v2566 = vpop.f32.mrf.mxu0
    %v2567 = vadd.f32 %v2254, %v2566
    %v2568 = vpop.f32.mrf.mxu0
    %v2569 = vadd.f32 %v2256, %v2568
    %v2570 = vpop.f32.mrf.mxu0
    %v2571 = vadd.f32 %v2258, %v2570
    %v2572 = vpop.f32.mrf.mxu0
    %v2573 = vadd.f32 %v2260, %v2572
    %2574 = vmatprep.mubr.bf16.mxu0 %v1447
    %2575 = vmatmul.mubr.bf16.gmra.mxu0 %v1446
    %v2576 = vpop.f32.mrf.mxu0
    %v2577 = vadd.f32 %v2264, %v2576
    %v2578 = vpop.f32.mrf.mxu0
    %v2579 = vadd.f32 %v2266, %v2578
    %v2580 = vpop.f32.mrf.mxu0
    %v2581 = vadd.f32 %v2268, %v2580
    %v2582 = vpop.f32.mrf.mxu0
    %v2583 = vadd.f32 %v2270, %v2582
    %2584 = vmatprep.mubr.bf16.mxu0 %v1452
    %2585 = vmatmul.mubr.bf16.gmra.mxu0 %v1451
    %v2586 = vpop.f32.mrf.mxu0
    %v2587 = vadd.f32 %v2274, %v2586
    %v2588 = vpop.f32.mrf.mxu0
    %v2589 = vadd.f32 %v2276, %v2588
    %v2590 = vpop.f32.mrf.mxu0
    %v2591 = vadd.f32 %v2278, %v2590
    %v2592 = vpop.f32.mrf.mxu0
    %v2593 = vadd.f32 %v2280, %v2592
    %2594 = vmatprep.mubr.bf16.mxu0 %v1457
    %2595 = vmatmul.mubr.bf16.gmra.mxu0 %v1456
    %v2596 = vpop.f32.mrf.mxu0
    %v2597 = vadd.f32 %v2284, %v2596
    %v2598 = vpop.f32.mrf.mxu0
    %v2599 = vadd.f32 %v2286, %v2598
    %v2600 = vpop.f32.mrf.mxu0
    %v2601 = vadd.f32 %v2288, %v2600
    %v2602 = vpop.f32.mrf.mxu0
    %v2603 = vadd.f32 %v2290, %v2602
    %2604 = vmatprep.mubr.bf16.mxu0 %v1462
    %2605 = vmatmul.mubr.bf16.gmra.mxu0 %v1461
    %v2606 = vpop.f32.mrf.mxu0
    %v2607 = vadd.f32 %v2294, %v2606
    %v2608 = vpop.f32.mrf.mxu0
    %v2609 = vadd.f32 %v2296, %v2608
    %v2610 = vpop.f32.mrf.mxu0
    %v2611 = vadd.f32 %v2298, %v2610
    %v2612 = vpop.f32.mrf.mxu0
    %v2613 = vadd.f32 %v2300, %v2612
    %2614 = vmatprep.mubr.bf16.mxu0 %v1467
    %2615 = vmatmul.mubr.bf16.gmra.mxu0 %v1466
    %v2616 = vpop.f32.mrf.mxu0
    %v2617 = vadd.f32 %v2304, %v2616
    %v2618 = vpop.f32.mrf.mxu0
    %v2619 = vadd.f32 %v2306, %v2618
    %v2620 = vpop.f32.mrf.mxu0
    %v2621 = vadd.f32 %v2308, %v2620
    %v2622 = vpop.f32.mrf.mxu0
    %v2623 = vadd.f32 %v2310, %v2622
    %2624 = vmatprep.mubr.bf16.mxu0 %v1472
    %2625 = vmatmul.mubr.bf16.gmra.mxu0 %v1471
    %v2626 = vpop.f32.mrf.mxu0
    %v2627 = vadd.f32 %v2314, %v2626
    %v2628 = vpop.f32.mrf.mxu0
    %v2629 = vadd.f32 %v2316, %v2628
    %v2630 = vpop.f32.mrf.mxu0
    %v2631 = vadd.f32 %v2318, %v2630
    %v2632 = vpop.f32.mrf.mxu0
    %v2633 = vadd.f32 %v2320, %v2632
    %2634 = vmatprep.mubr.bf16.mxu0 %v1477
    %2635 = vmatmul.mubr.bf16.gmra.mxu0 %v1476
    %v2636 = vpop.f32.mrf.mxu0
    %v2637 = vadd.f32 %v2324, %v2636
    %v2638 = vpop.f32.mrf.mxu0
    %v2639 = vadd.f32 %v2326, %v2638
    %v2640 = vpop.f32.mrf.mxu0
    %v2641 = vadd.f32 %v2328, %v2640
    %v2642 = vpop.f32.mrf.mxu0
    %v2643 = vadd.f32 %v2330, %v2642
    %2644 = vdwg.mxu0
    %2645 = vmatprep.subr.bf16.mxu0 %v1938
    %2646 = vmatpush1.bf16.msra.mxu0 %v1937
    %2647 = vmatprep.subr.bf16.mxu0 %v1936
    %2648 = vmatpush1.bf16.msra.mxu0 %v1935
    %2649 = vmatprep.subr.bf16.mxu0 %v1934
    %2650 = vmatpush1.bf16.msra.mxu0 %v1933
    %2651 = vmatprep.subr.bf16.mxu0 %v1932
    %2652 = vmatpush1.bf16.msra.mxu0 %v1931
    %2653 = vmatprep.subr.bf16.mxu0 %v1930
    %2654 = vmatpush1.bf16.msra.mxu0 %v1929
    %2655 = vmatprep.subr.bf16.mxu0 %v1928
    %2656 = vmatpush1.bf16.msra.mxu0 %v1927
    %2657 = vmatprep.subr.bf16.mxu0 %v1926
    %2658 = vmatpush1.bf16.msra.mxu0 %v1925
    %2659 = vmatprep.subr.bf16.mxu0 %v1924
    %2660 = vmatpush1.bf16.msra.mxu0 %v1923
    %2661 = vmatprep.subr.bf16.mxu0 0
    %2662 = vmatpush2.bf16.msra.mxu0 0
    %2663 = vmatprep.subr.bf16.mxu0 0
    %2664 = vmatpush2.bf16.msra.mxu0 0
    %2665 = vmatprep.subr.bf16.mxu0 0
    %2666 = vmatpush2.bf16.msra.mxu0 0
    %2667 = vmatprep.subr.bf16.mxu0 0
    %2668 = vmatpush2.bf16.msra.mxu0 0
    %2669 = vmatprep.subr.bf16.mxu0 0
    %2670 = vmatpush2.bf16.msra.mxu0 0
    %2671 = vmatprep.subr.bf16.mxu0 0
    %2672 = vmatpush2.bf16.msra.mxu0 0
    %2673 = vmatprep.subr.bf16.mxu0 0
    %2674 = vmatpush2.bf16.msra.mxu0 0
    %2675 = vmatprep.subr.bf16.mxu0 0
    %2676 = vmatpush2.bf16.msra.mxu0 0
    %2677 = vmatprep.mubr.bf16.mxu0 0
    %2678 = vmatmul.mubr.bf16.gmra.mxu0 %v1343
    %v2679 = vpop.f32.mrf.mxu0
    %v2680 = vadd.f32 %v2367, %v2679
    %v2681 = vpop.f32.mrf.mxu0
    %v2682 = vadd.f32 %v2369, %v2681
    %v2683 = vpop.f32.mrf.mxu0
    %v2684 = vadd.f32 %v2371, %v2683
    %v2685 = vpop.f32.mrf.mxu0
    %v2686 = vadd.f32 %v2373, %v2685
    %2687 = vmatprep.mubr.bf16.mxu0 0
    %2688 = vmatmul.mubr.bf16.gmra.mxu0 %v1348
    %v2689 = vpop.f32.mrf.mxu0
    %v2690 = vadd.f32 %v2377, %v2689
    %v2691 = vpop.f32.mrf.mxu0
    %v2692 = vadd.f32 %v2379, %v2691
    %v2693 = vpop.f32.mrf.mxu0
    %v2694 = vadd.f32 %v2381, %v2693
    %v2695 = vpop.f32.mrf.mxu0
    %v2696 = vadd.f32 %v2383, %v2695
    %2697 = vmatprep.mubr.bf16.mxu0 0
    %2698 = vmatmul.mubr.bf16.gmra.mxu0 %v1353
    %v2699 = vpop.f32.mrf.mxu0
    %v2700 = vadd.f32 %v2387, %v2699
    %v2701 = vpop.f32.mrf.mxu0
    %v2702 = vadd.f32 %v2389, %v2701
    %v2703 = vpop.f32.mrf.mxu0
    %v2704 = vadd.f32 %v2391, %v2703
    %v2705 = vpop.f32.mrf.mxu0
    %v2706 = vadd.f32 %v2393, %v2705
    %2707 = vmatprep.mubr.bf16.mxu0 0
    %2708 = vmatmul.mubr.bf16.gmra.mxu0 %v1358
    %v2709 = vpop.f32.mrf.mxu0
    %v2710 = vadd.f32 %v2397, %v2709
    %v2711 = vpop.f32.mrf.mxu0
    %v2712 = vadd.f32 %v2399, %v2711
    %v2713 = vpop.f32.mrf.mxu0
    %v2714 = vadd.f32 %v2401, %v2713
    %v2715 = vpop.f32.mrf.mxu0
    %v2716 = vadd.f32 %v2403, %v2715
    %2717 = vmatprep.mubr.bf16.mxu0 0
    %2718 = vmatmul.mubr.bf16.gmra.mxu0 %v1363
    %v2719 = vpop.f32.mrf.mxu0
    %v2720 = vadd.f32 %v2407, %v2719
    %v2721 = vpop.f32.mrf.mxu0
    %v2722 = vadd.f32 %v2409, %v2721
    %v2723 = vpop.f32.mrf.mxu0
    %v2724 = vadd.f32 %v2411, %v2723
    %v2725 = vpop.f32.mrf.mxu0
    %v2726 = vadd.f32 %v2413, %v2725
    %2727 = vmatprep.mubr.bf16.mxu0 0
    %2728 = vmatmul.mubr.bf16.gmra.mxu0 %v1368
    %v2729 = vpop.f32.mrf.mxu0
    %v2730 = vadd.f32 %v2417, %v2729
    %v2731 = vpop.f32.mrf.mxu0
    %v2732 = vadd.f32 %v2419, %v2731
    %v2733 = vpop.f32.mrf.mxu0
    %v2734 = vadd.f32 %v2421, %v2733
    %v2735 = vpop.f32.mrf.mxu0
    %v2736 = vadd.f32 %v2423, %v2735
    %2737 = vmatprep.mubr.bf16.mxu0 0
    %2738 = vmatmul.mubr.bf16.gmra.mxu0 %v1373
    %v2739 = vpop.f32.mrf.mxu0
    %v2740 = vadd.f32 %v2427, %v2739
    %v2741 = vpop.f32.mrf.mxu0
    %v2742 = vadd.f32 %v2429, %v2741
    %v2743 = vpop.f32.mrf.mxu0
    %v2744 = vadd.f32 %v2431, %v2743
    %v2745 = vpop.f32.mrf.mxu0
    %v2746 = vadd.f32 %v2433, %v2745
    %2747 = vmatprep.mubr.bf16.mxu0 0
    %2748 = vmatmul.mubr.bf16.gmra.mxu0 %v1378
    %v2749 = vpop.f32.mrf.mxu0
    %v2750 = vadd.f32 %v2437, %v2749
    %v2751 = vpop.f32.mrf.mxu0
    %v2752 = vadd.f32 %v2439, %v2751
    %v2753 = vpop.f32.mrf.mxu0
    %v2754 = vadd.f32 %v2441, %v2753
    %v2755 = vpop.f32.mrf.mxu0
    %v2756 = vadd.f32 %v2443, %v2755
    %2757 = vmatprep.mubr.bf16.mxu0 0
    %2758 = vmatmul.mubr.bf16.gmra.mxu0 %v1383
    %v2759 = vpop.f32.mrf.mxu0
    %v2760 = vadd.f32 %v2447, %v2759
    %v2761 = vpop.f32.mrf.mxu0
    %v2762 = vadd.f32 %v2449, %v2761
    %v2763 = vpop.f32.mrf.mxu0
    %v2764 = vadd.f32 %v2451, %v2763
    %v2765 = vpop.f32.mrf.mxu0
    %v2766 = vadd.f32 %v2453, %v2765
    %2767 = vmatprep.mubr.bf16.mxu0 0
    %2768 = vmatmul.mubr.bf16.gmra.mxu0 %v1388
    %v2769 = vpop.f32.mrf.mxu0
    %v2770 = vadd.f32 %v2457, %v2769
    %v2771 = vpop.f32.mrf.mxu0
    %v2772 = vadd.f32 %v2459, %v2771
    %v2773 = vpop.f32.mrf.mxu0
    %v2774 = vadd.f32 %v2461, %v2773
    %v2775 = vpop.f32.mrf.mxu0
    %v2776 = vadd.f32 %v2463, %v2775
    %2777 = vmatprep.mubr.bf16.mxu0 0
    %2778 = vmatmul.mubr.bf16.gmra.mxu0 %v1393
    %v2779 = vpop.f32.mrf.mxu0
    %v2780 = vadd.f32 %v2467, %v2779
    %v2781 = vpop.f32.mrf.mxu0
    %v2782 = vadd.f32 %v2469, %v2781
    %v2783 = vpop.f32.mrf.mxu0
    %v2784 = vadd.f32 %v2471, %v2783
    %v2785 = vpop.f32.mrf.mxu0
    %v2786 = vadd.f32 %v2473, %v2785
    %2787 = vmatprep.mubr.bf16.mxu0 0
    %2788 = vmatmul.mubr.bf16.gmra.mxu0 %v1398
    %v2789 = vpop.f32.mrf.mxu0
    %v2790 = vadd.f32 %v2477, %v2789
    %v2791 = vpop.f32.mrf.mxu0
    %v2792 = vadd.f32 %v2479, %v2791
    %v2793 = vpop.f32.mrf.mxu0
    %v2794 = vadd.f32 %v2481, %v2793
    %v2795 = vpop.f32.mrf.mxu0
    %v2796 = vadd.f32 %v2483, %v2795
    %2797 = vmatprep.mubr.bf16.mxu0 0
    %2798 = vmatmul.mubr.bf16.gmra.mxu0 %v1403
    %v2799 = vpop.f32.mrf.mxu0
    %v2800 = vadd.f32 %v2487, %v2799
    %v2801 = vpop.f32.mrf.mxu0
    %v2802 = vadd.f32 %v2489, %v2801
    %v2803 = vpop.f32.mrf.mxu0
    %v2804 = vadd.f32 %v2491, %v2803
    %v2805 = vpop.f32.mrf.mxu0
    %v2806 = vadd.f32 %v2493, %v2805
    %2807 = vmatprep.mubr.bf16.mxu0 0
    %2808 = vmatmul.mubr.bf16.gmra.mxu0 %v1408
    %v2809 = vpop.f32.mrf.mxu0
    %v2810 = vadd.f32 %v2497, %v2809
    %v2811 = vpop.f32.mrf.mxu0
    %v2812 = vadd.f32 %v2499, %v2811
    %v2813 = vpop.f32.mrf.mxu0
    %v2814 = vadd.f32 %v2501, %v2813
    %v2815 = vpop.f32.mrf.mxu0
    %v2816 = vadd.f32 %v2503, %v2815
    %2817 = vmatprep.mubr.bf16.mxu0 0
    %2818 = vmatmul.mubr.bf16.gmra.mxu0 %v1413
    %v2819 = vpop.f32.mrf.mxu0
    %v2820 = vadd.f32 %v2507, %v2819
    %v2821 = vpop.f32.mrf.mxu0
    %v2822 = vadd.f32 %v2509, %v2821
    %v2823 = vpop.f32.mrf.mxu0
    %v2824 = vadd.f32 %v2511, %v2823
    %v2825 = vpop.f32.mrf.mxu0
    %v2826 = vadd.f32 %v2513, %v2825
    %2827 = vmatprep.mubr.bf16.mxu0 0
    %2828 = vmatmul.mubr.bf16.gmra.mxu0 %v1418
    %v2829 = vpop.f32.mrf.mxu0
    %v2830 = vadd.f32 %v2517, %v2829
    %v2831 = vpop.f32.mrf.mxu0
    %v2832 = vadd.f32 %v2519, %v2831
    %v2833 = vpop.f32.mrf.mxu0
    %v2834 = vadd.f32 %v2521, %v2833
    %v2835 = vpop.f32.mrf.mxu0
    %v2836 = vadd.f32 %v2523, %v2835
    %2837 = vmatprep.mubr.bf16.mxu0 0
    %2838 = vmatmul.mubr.bf16.gmra.mxu0 %v1423
    %v2839 = vpop.f32.mrf.mxu0
    %v2840 = vadd.f32 %v2527, %v2839
    %v2841 = vpop.f32.mrf.mxu0
    %v2842 = vadd.f32 %v2529, %v2841
    %v2843 = vpop.f32.mrf.mxu0
    %v2844 = vadd.f32 %v2531, %v2843
    %v2845 = vpop.f32.mrf.mxu0
    %v2846 = vadd.f32 %v2533, %v2845
    %2847 = vmatprep.mubr.bf16.mxu0 0
    %2848 = vmatmul.mubr.bf16.gmra.mxu0 %v1428
    %v2849 = vpop.f32.mrf.mxu0
    %v2850 = vadd.f32 %v2537, %v2849
    %v2851 = vpop.f32.mrf.mxu0
    %v2852 = vadd.f32 %v2539, %v2851
    %v2853 = vpop.f32.mrf.mxu0
    %v2854 = vadd.f32 %v2541, %v2853
    %v2855 = vpop.f32.mrf.mxu0
    %v2856 = vadd.f32 %v2543, %v2855
    %2857 = vmatprep.mubr.bf16.mxu0 0
    %2858 = vmatmul.mubr.bf16.gmra.mxu0 %v1433
    %v2859 = vpop.f32.mrf.mxu0
    %v2860 = vadd.f32 %v2547, %v2859
    %v2861 = vpop.f32.mrf.mxu0
    %v2862 = vadd.f32 %v2549, %v2861
    %v2863 = vpop.f32.mrf.mxu0
    %v2864 = vadd.f32 %v2551, %v2863
    %v2865 = vpop.f32.mrf.mxu0
    %v2866 = vadd.f32 %v2553, %v2865
    %2867 = vmatprep.mubr.bf16.mxu0 0
    %2868 = vmatmul.mubr.bf16.gmra.mxu0 %v1438
    %v2869 = vpop.f32.mrf.mxu0
    %v2870 = vadd.f32 %v2557, %v2869
    %v2871 = vpop.f32.mrf.mxu0
    %v2872 = vadd.f32 %v2559, %v2871
    %v2873 = vpop.f32.mrf.mxu0
    %v2874 = vadd.f32 %v2561, %v2873
    %v2875 = vpop.f32.mrf.mxu0
    %v2876 = vadd.f32 %v2563, %v2875
    %2877 = vmatprep.mubr.bf16.mxu0 0
    %2878 = vmatmul.mubr.bf16.gmra.mxu0 %v1443
    %v2879 = vpop.f32.mrf.mxu0
    %v2880 = vadd.f32 %v2567, %v2879
    %v2881 = vpop.f32.mrf.mxu0
    %v2882 = vadd.f32 %v2569, %v2881
    %v2883 = vpop.f32.mrf.mxu0
    %v2884 = vadd.f32 %v2571, %v2883
    %v2885 = vpop.f32.mrf.mxu0
    %v2886 = vadd.f32 %v2573, %v2885
    %2887 = vmatprep.mubr.bf16.mxu0 0
    %2888 = vmatmul.mubr.bf16.gmra.mxu0 %v1448
    %v2889 = vpop.f32.mrf.mxu0
    %v2890 = vadd.f32 %v2577, %v2889
    %v2891 = vpop.f32.mrf.mxu0
    %v2892 = vadd.f32 %v2579, %v2891
    %v2893 = vpop.f32.mrf.mxu0
    %v2894 = vadd.f32 %v2581, %v2893
    %v2895 = vpop.f32.mrf.mxu0
    %v2896 = vadd.f32 %v2583, %v2895
    %2897 = vmatprep.mubr.bf16.mxu0 0
    %2898 = vmatmul.mubr.bf16.gmra.mxu0 %v1453
    %v2899 = vpop.f32.mrf.mxu0
    %v2900 = vadd.f32 %v2587, %v2899
    %v2901 = vpop.f32.mrf.mxu0
    %v2902 = vadd.f32 %v2589, %v2901
    %v2903 = vpop.f32.mrf.mxu0
    %v2904 = vadd.f32 %v2591, %v2903
    %v2905 = vpop.f32.mrf.mxu0
    %v2906 = vadd.f32 %v2593, %v2905
    %2907 = vmatprep.mubr.bf16.mxu0 0
    %2908 = vmatmul.mubr.bf16.gmra.mxu0 %v1458
    %v2909 = vpop.f32.mrf.mxu0
    %v2910 = vadd.f32 %v2597, %v2909
    %v2911 = vpop.f32.mrf.mxu0
    %v2912 = vadd.f32 %v2599, %v2911
    %v2913 = vpop.f32.mrf.mxu0
    %v2914 = vadd.f32 %v2601, %v2913
    %v2915 = vpop.f32.mrf.mxu0
    %v2916 = vadd.f32 %v2603, %v2915
    %2917 = vmatprep.mubr.bf16.mxu0 0
    %2918 = vmatmul.mubr.bf16.gmra.mxu0 %v1463
    %v2919 = vpop.f32.mrf.mxu0
    %v2920 = vadd.f32 %v2607, %v2919
    %v2921 = vpop.f32.mrf.mxu0
    %v2922 = vadd.f32 %v2609, %v2921
    %v2923 = vpop.f32.mrf.mxu0
    %v2924 = vadd.f32 %v2611, %v2923
    %v2925 = vpop.f32.mrf.mxu0
    %v2926 = vadd.f32 %v2613, %v2925
    %2927 = vmatprep.mubr.bf16.mxu0 0
    %2928 = vmatmul.mubr.bf16.gmra.mxu0 %v1468
    %v2929 = vpop.f32.mrf.mxu0
    %v2930 = vadd.f32 %v2617, %v2929
    %v2931 = vpop.f32.mrf.mxu0
    %v2932 = vadd.f32 %v2619, %v2931
    %v2933 = vpop.f32.mrf.mxu0
    %v2934 = vadd.f32 %v2621, %v2933
    %v2935 = vpop.f32.mrf.mxu0
    %v2936 = vadd.f32 %v2623, %v2935
    %2937 = vmatprep.mubr.bf16.mxu0 0
    %2938 = vmatmul.mubr.bf16.gmra.mxu0 %v1473
    %v2939 = vpop.f32.mrf.mxu0
    %v2940 = vadd.f32 %v2627, %v2939
    %v2941 = vpop.f32.mrf.mxu0
    %v2942 = vadd.f32 %v2629, %v2941
    %v2943 = vpop.f32.mrf.mxu0
    %v2944 = vadd.f32 %v2631, %v2943
    %v2945 = vpop.f32.mrf.mxu0
    %v2946 = vadd.f32 %v2633, %v2945
    %2947 = vmatprep.mubr.bf16.mxu0 0
    %2948 = vmatmul.mubr.bf16.gmra.mxu0 %v1478
    %v2949 = vpop.f32.mrf.mxu0
    %v2950 = vadd.f32 %v2637, %v2949
    %v2951 = vpop.f32.mrf.mxu0
    %v2952 = vadd.f32 %v2639, %v2951
    %v2953 = vpop.f32.mrf.mxu0
    %v2954 = vadd.f32 %v2641, %v2953
    %v2955 = vpop.f32.mrf.mxu0
    %v2956 = vadd.f32 %v2643, %v2955
    %2957 = vdwg.mxu0
    %v2958 = vmax.f32 %v2680, 0.0
    %v2959 = vmax.f32 %v2682, 0.0
    %v2960 = vmax.f32 %v2684, 0.0
    %v2961 = vmax.f32 %v2686, 0.0
    %v2962 = vmax.f32 %v2690, 0.0
    %v2963 = vmax.f32 %v2692, 0.0
    %v2964 = vmax.f32 %v2694, 0.0
    %v2965 = vmax.f32 %v2696, 0.0
    %v2966 = vmax.f32 %v2700, 0.0
    %v2967 = vmax.f32 %v2702, 0.0
    %v2968 = vmax.f32 %v2704, 0.0
    %v2969 = vmax.f32 %v2706, 0.0
    %v2970 = vmax.f32 %v2710, 0.0
    %v2971 = vmax.f32 %v2712, 0.0
    %v2972 = vmax.f32 %v2714, 0.0
    %v2973 = vmax.f32 %v2716, 0.0
    %v2974 = vmax.f32 %v2720, 0.0
    %v2975 = vmax.f32 %v2722, 0.0
    %v2976 = vmax.f32 %v2724, 0.0
    %v2977 = vmax.f32 %v2726, 0.0
    %v2978 = vmax.f32 %v2730, 0.0
    %v2979 = vmax.f32 %v2732, 0.0
    %v2980 = vmax.f32 %v2734, 0.0
    %v2981 = vmax.f32 %v2736, 0.0
    %v2982 = vmax.f32 %v2740, 0.0
    %v2983 = vmax.f32 %v2742, 0.0
    %v2984 = vmax.f32 %v2744, 0.0
    %v2985 = vmax.f32 %v2746, 0.0
    %v2986 = vmax.f32 %v2750, 0.0
    %v2987 = vmax.f32 %v2752, 0.0
    %v2988 = vmax.f32 %v2754, 0.0
    %v2989 = vmax.f32 %v2756, 0.0
    %v2990 = vmax.f32 %v2760, 0.0
    %v2991 = vmax.f32 %v2762, 0.0
    %v2992 = vmax.f32 %v2764, 0.0
    %v2993 = vmax.f32 %v2766, 0.0
    %v2994 = vmax.f32 %v2770, 0.0
    %v2995 = vmax.f32 %v2772, 0.0
    %v2996 = vmax.f32 %v2774, 0.0
    %v2997 = vmax.f32 %v2776, 0.0
    %v2998 = vmax.f32 %v2780, 0.0
    %v2999 = vmax.f32 %v2782, 0.0
    %v3000 = vmax.f32 %v2784, 0.0
    %v3001 = vmax.f32 %v2786, 0.0
    %v3002 = vmax.f32 %v2790, 0.0
    %v3003 = vmax.f32 %v2792, 0.0
    %v3004 = vmax.f32 %v2794, 0.0
    %v3005 = vmax.f32 %v2796, 0.0
    %v3006 = vmax.f32 %v2800, 0.0
    %v3007 = vmax.f32 %v2802, 0.0
    %v3008 = vmax.f32 %v2804, 0.0
    %v3009 = vmax.f32 %v2806, 0.0
    %v3010 = vmax.f32 %v2810, 0.0
    %v3011 = vmax.f32 %v2812, 0.0
    %v3012 = vmax.f32 %v2814, 0.0
    %v3013 = vmax.f32 %v2816, 0.0
    %v3014 = vmax.f32 %v2820, 0.0
    %v3015 = vmax.f32 %v2822, 0.0
    %v3016 = vmax.f32 %v2824, 0.0
    %v3017 = vmax.f32 %v2826, 0.0
    %v3018 = vmax.f32 %v2830, 0.0
    %v3019 = vmax.f32 %v2832, 0.0
    %v3020 = vmax.f32 %v2834, 0.0
    %v3021 = vmax.f32 %v2836, 0.0
    %v3022 = vmax.f32 %v2840, 0.0
    %v3023 = vmax.f32 %v2842, 0.0
    %v3024 = vmax.f32 %v2844, 0.0
    %v3025 = vmax.f32 %v2846, 0.0
    %v3026 = vmax.f32 %v2850, 0.0
    %v3027 = vmax.f32 %v2852, 0.0
    %v3028 = vmax.f32 %v2854, 0.0
    %v3029 = vmax.f32 %v2856, 0.0
    %v3030 = vmax.f32 %v2860, 0.0
    %v3031 = vmax.f32 %v2862, 0.0
    %v3032 = vmax.f32 %v2864, 0.0
    %v3033 = vmax.f32 %v2866, 0.0
    %v3034 = vmax.f32 %v2870, 0.0
    %v3035 = vmax.f32 %v2872, 0.0
    %v3036 = vmax.f32 %v2874, 0.0
    %v3037 = vmax.f32 %v2876, 0.0
    %v3038 = vmax.f32 %v2880, 0.0
    %v3039 = vmax.f32 %v2882, 0.0
    %v3040 = vmax.f32 %v2884, 0.0
    %v3041 = vmax.f32 %v2886, 0.0
    %v3042 = vmax.f32 %v2890, 0.0
    %v3043 = vmax.f32 %v2892, 0.0
    %v3044 = vmax.f32 %v2894, 0.0
    %v3045 = vmax.f32 %v2896, 0.0
    %v3046 = vmax.f32 %v2900, 0.0
    %v3047 = vmax.f32 %v2902, 0.0
    %v3048 = vmax.f32 %v2904, 0.0
    %v3049 = vmax.f32 %v2906, 0.0
    %v3050 = vmax.f32 %v2910, 0.0
    %v3051 = vmax.f32 %v2912, 0.0
    %v3052 = vmax.f32 %v2914, 0.0
    %v3053 = vmax.f32 %v2916, 0.0
    %v3054 = vmax.f32 %v2920, 0.0
    %v3055 = vmax.f32 %v2922, 0.0
    %v3056 = vmax.f32 %v2924, 0.0
    %v3057 = vmax.f32 %v2926, 0.0
    %v3058 = vmax.f32 %v2930, 0.0
    %v3059 = vmax.f32 %v2932, 0.0
    %v3060 = vmax.f32 %v2934, 0.0
    %v3061 = vmax.f32 %v2936, 0.0
    %v3062 = vmax.f32 %v2940, 0.0
    %v3063 = vmax.f32 %v2942, 0.0
    %v3064 = vmax.f32 %v2944, 0.0
    %v3065 = vmax.f32 %v2946, 0.0
    %v3066 = vmax.f32 %v2950, 0.0
    %v3067 = vmax.f32 %v2952, 0.0
    %v3068 = vmax.f32 %v2954, 0.0
    %v3069 = vmax.f32 %v2956, 0.0
    %v3070 = vmax.f32 %v2958, %v2959
    %v3071 = vmax.f32 %v2960, %v2961
    %v3072 = vmax.f32 %v2962, %v2963
    %v3073 = vmax.f32 %v2964, %v2965
    %v3074 = vmax.f32 %v2966, %v2967
    %v3075 = vmax.f32 %v2968, %v2969
    %v3076 = vmax.f32 %v2970, %v2971
    %v3077 = vmax.f32 %v2972, %v2973
    %v3078 = vmax.f32 %v2974, %v2975
    %v3079 = vmax.f32 %v2976, %v2977
    %v3080 = vmax.f32 %v2978, %v2979
    %v3081 = vmax.f32 %v2980, %v2981
    %v3082 = vmax.f32 %v2982, %v2983
    %v3083 = vmax.f32 %v2984, %v2985
    %v3084 = vmax.f32 %v2986, %v2987
    %v3085 = vmax.f32 %v2988, %v2989
    %v3086 = vmax.f32 %v2990, %v2991
    %v3087 = vmax.f32 %v2992, %v2993
    %v3088 = vmax.f32 %v2994, %v2995
    %v3089 = vmax.f32 %v2996, %v2997
    %v3090 = vmax.f32 %v2998, %v2999
    %v3091 = vmax.f32 %v3000, %v3001
    %v3092 = vmax.f32 %v3002, %v3003
    %v3093 = vmax.f32 %v3004, %v3005
    %v3094 = vmax.f32 %v3006, %v3007
    %v3095 = vmax.f32 %v3008, %v3009
    %v3096 = vmax.f32 %v3010, %v3011
    %v3097 = vmax.f32 %v3012, %v3013
    %v3098 = vmax.f32 %v3014, %v3015
    %v3099 = vmax.f32 %v3016, %v3017
    %v3100 = vmax.f32 %v3018, %v3019
    %v3101 = vmax.f32 %v3020, %v3021
    %v3102 = vmax.f32 %v3022, %v3023
    %v3103 = vmax.f32 %v3024, %v3025
    %v3104 = vmax.f32 %v3026, %v3027
    %v3105 = vmax.f32 %v3028, %v3029
    %v3106 = vmax.f32 %v3030, %v3031
    %v3107 = vmax.f32 %v3032, %v3033
    %v3108 = vmax.f32 %v3034, %v3035
    %v3109 = vmax.f32 %v3036, %v3037
    %v3110 = vmax.f32 %v3038, %v3039
    %v3111 = vmax.f32 %v3040, %v3041
    %v3112 = vmax.f32 %v3042, %v3043
    %v3113 = vmax.f32 %v3044, %v3045
    %v3114 = vmax.f32 %v3046, %v3047
    %v3115 = vmax.f32 %v3048, %v3049
    %v3116 = vmax.f32 %v3050, %v3051
    %v3117 = vmax.f32 %v3052, %v3053
    %v3118 = vmax.f32 %v3054, %v3055
    %v3119 = vmax.f32 %v3056, %v3057
    %v3120 = vmax.f32 %v3058, %v3059
    %v3121 = vmax.f32 %v3060, %v3061
    %v3122 = vmax.f32 %v3062, %v3063
    %v3123 = vmax.f32 %v3064, %v3065
    %v3124 = vmax.f32 %v3066, %v3067
    %v3125 = vmax.f32 %v3068, %v3069
    %v3126 = vmax.f32 %v3070, %v3072
    %v3127 = vmax.f32 %v3071, %v3073
    %v3128 = vmax.f32 %v3074, %v3076
    %v3129 = vmax.f32 %v3075, %v3077
    %v3130 = vmax.f32 %v3078, %v3080
    %v3131 = vmax.f32 %v3079, %v3081
    %v3132 = vmax.f32 %v3082, %v3084
    %v3133 = vmax.f32 %v3083, %v3085
    %v3134 = vmax.f32 %v3086, %v3088
    %v3135 = vmax.f32 %v3087, %v3089
    %v3136 = vmax.f32 %v3090, %v3092
    %v3137 = vmax.f32 %v3091, %v3093
    %v3138 = vmax.f32 %v3094, %v3096
    %v3139 = vmax.f32 %v3095, %v3097
    %v3140 = vmax.f32 %v3098, %v3100
    %v3141 = vmax.f32 %v3099, %v3101
    %v3142 = vmax.f32 %v3102, %v3104
    %v3143 = vmax.f32 %v3103, %v3105
    %v3144 = vmax.f32 %v3106, %v3108
    %v3145 = vmax.f32 %v3107, %v3109
    %v3146 = vmax.f32 %v3110, %v3112
    %v3147 = vmax.f32 %v3111, %v3113
    %v3148 = vmax.f32 %v3114, %v3116
    %v3149 = vmax.f32 %v3115, %v3117
    %v3150 = vmax.f32 %v3118, %v3120
    %v3151 = vmax.f32 %v3119, %v3121
    %v3152 = vmax.f32 %v3122, %v3124
    %v3153 = vmax.f32 %v3123, %v3125
    %v3154 = vpack.c.bf16 %v3127, %v3126
    %v3155 = vpack.c.bf16 %v3129, %v3128
    %v3156 = vpack.c.bf16 %v3131, %v3130
    %v3157 = vpack.c.bf16 %v3133, %v3132
    %v3158 = vpack.c.bf16 %v3135, %v3134
    %v3159 = vpack.c.bf16 %v3137, %v3136
    %v3160 = vpack.c.bf16 %v3139, %v3138
    %v3161 = vpack.c.bf16 %v3141, %v3140
    %v3162 = vpack.c.bf16 %v3143, %v3142
    %v3163 = vpack.c.bf16 %v3145, %v3144
    %v3164 = vpack.c.bf16 %v3147, %v3146
    %v3165 = vpack.c.bf16 %v3149, %v3148
    %v3166 = vpack.c.bf16 %v3151, %v3150
    %v3167 = vpack.c.bf16 %v3153, %v3152
    %v3182 = vunpack.c.l.b16 %v3154
    %v3183 = vunpack.c.h.b16 %v3154
    %v3184 = vunpack.c.l.b16 %v3155
    %v3185 = vunpack.c.h.b16 %v3155
    %v3186 = vunpack.c.l.b16 %v3156
    %v3187 = vunpack.c.h.b16 %v3156
    %v3188 = vunpack.c.l.b16 %v3157
    %v3189 = vunpack.c.h.b16 %v3157
    %v3190 = vunpack.c.l.b16 %v3158
    %v3191 = vunpack.c.h.b16 %v3158
    %v3192 = vunpack.c.l.b16 %v3159
    %v3193 = vunpack.c.h.b16 %v3159
    %v3194 = vunpack.c.l.b16 %v3160
    %v3195 = vunpack.c.h.b16 %v3160
    %v3196 = vunpack.c.l.b16 %v3161
    %v3197 = vunpack.c.h.b16 %v3161
    %v3198 = vunpack.c.l.b16 %v3162
    %v3199 = vunpack.c.h.b16 %v3162
    %v3200 = vunpack.c.l.b16 %v3163
    %v3201 = vunpack.c.h.b16 %v3163
    %v3202 = vunpack.c.l.b16 %v3164
    %v3203 = vunpack.c.h.b16 %v3164
    %v3204 = vunpack.c.l.b16 %v3165
    %v3205 = vunpack.c.h.b16 %v3165
    %v3206 = vunpack.c.l.b16 %v3166
    %v3207 = vunpack.c.h.b16 %v3166
    %v3208 = vunpack.c.l.b16 %v3167
    %v3209 = vunpack.c.h.b16 %v3167
    %v3210 = vpack.c.b16 %v3182, %v3182
    %v3211 = vpack.c.b16 %v3183, %v3183
    %v3212 = vpack.c.b16 %v3184, %v3184
    %v3213 = vpack.c.b16 %v3185, %v3185
    %v3214 = vpack.c.b16 %v3186, %v3186
    %v3215 = vpack.c.b16 %v3187, %v3187
    %v3216 = vpack.c.b16 %v3188, %v3188
    %v3217 = vpack.c.b16 %v3189, %v3189
    %v3218 = vpack.c.b16 %v3190, %v3190
    %v3219 = vpack.c.b16 %v3191, %v3191
    %v3220 = vpack.c.b16 %v3192, %v3192
    %v3221 = vpack.c.b16 %v3193, %v3193
    %v3222 = vpack.c.b16 %v3194, %v3194
    %v3223 = vpack.c.b16 %v3195, %v3195
    %v3224 = vpack.c.b16 %v3196, %v3196
    %v3225 = vpack.c.b16 %v3197, %v3197
    %v3226 = vpack.c.b16 %v3198, %v3198
    %v3227 = vpack.c.b16 %v3199, %v3199
    %v3228 = vpack.c.b16 %v3200, %v3200
    %v3229 = vpack.c.b16 %v3201, %v3201
    %v3230 = vpack.c.b16 %v3202, %v3202
    %v3231 = vpack.c.b16 %v3203, %v3203
    %v3232 = vpack.c.b16 %v3204, %v3204
    %v3233 = vpack.c.b16 %v3205, %v3205
    %v3234 = vpack.c.b16 %v3206, %v3206
    %v3235 = vpack.c.b16 %v3207, %v3207
    %v3236 = vpack.c.b16 %v3208, %v3208
    %v3237 = vpack.c.b16 %v3209, %v3209
    %3266 = vst [vmem:[#allocation3] sm:$0xf] %v3210
    %3267 = vst [vmem:[#allocation3 + $0x4] sm:$0xf] %v3211
    %3268 = vst [vmem:[#allocation3 + $0x8] sm:$0xf] %v3212
    %3269 = vst [vmem:[#allocation3 + $0xc] sm:$0xf] %v3213
    %3270 = vst [vmem:[#allocation3 + $0x10] sm:$0xf] %v3214
    %3271 = vst [vmem:[#allocation3 + $0x14] sm:$0xf] %v3215
    %3272 = vst [vmem:[#allocation3 + $0x18] sm:$0xf] %v3216
    %3273 = vst [vmem:[#allocation3 + $0x1c] sm:$0xf] %v3217
    %3274 = vst [vmem:[#allocation3 + $0x20] sm:$0xf] %v3218
    %3275 = vst [vmem:[#allocation3 + $0x24] sm:$0xf] %v3219
    %3276 = vst [vmem:[#allocation3 + $0x28] sm:$0xf] %v3220
    %3277 = vst [vmem:[#allocation3 + $0x2c] sm:$0xf] %v3221
    %3278 = vst [vmem:[#allocation3 + $0x30] sm:$0xf] %v3222
    %3279 = vst [vmem:[#allocation3 + $0x34] sm:$0xf] %v3223
    %3280 = vst [vmem:[#allocation3 + $0x38] sm:$0xf] %v3224
    %3281 = vst [vmem:[#allocation3 + $0x3c] sm:$0xf] %v3225
    %3282 = vst [vmem:[#allocation3 + $0x40] sm:$0xf] %v3226
    %3283 = vst [vmem:[#allocation3 + $0x44] sm:$0xf] %v3227
    %3284 = vst [vmem:[#allocation3 + $0x48] sm:$0xf] %v3228
    %3285 = vst [vmem:[#allocation3 + $0x4c] sm:$0xf] %v3229
    %3286 = vst [vmem:[#allocation3 + $0x50] sm:$0xf] %v3230
    %3287 = vst [vmem:[#allocation3 + $0x54] sm:$0xf] %v3231
    %3288 = vst [vmem:[#allocation3 + $0x58] sm:$0xf] %v3232
    %3289 = vst [vmem:[#allocation3 + $0x5c] sm:$0xf] %v3233
    %3290 = vst [vmem:[#allocation3 + $0x60] sm:$0xf] %v3234
    %3291 = vst [vmem:[#allocation3 + $0x64] sm:$0xf] %v3235
    %3292 = vst [vmem:[#allocation3 + $0x68] sm:$0xf] %v3236
    %3293 = vst [vmem:[#allocation3 + $0x6c] sm:$0xf] %v3237
    %v3294 = vld [vmem:[#allocation3] sm:$0xf]
    %v3295 = vld [vmem:[#allocation3 + $0x4] sm:$0xf]
    %v3296 = vld [vmem:[#allocation3 + $0x8] sm:$0xf]
    %v3297 = vld [vmem:[#allocation3 + $0xc] sm:$0xf]
    %v3298 = vld [vmem:[#allocation3 + $0x10] sm:$0xf]
    %v3299 = vld [vmem:[#allocation3 + $0x14] sm:$0xf]
    %v3300 = vld [vmem:[#allocation3 + $0x18] sm:$0xf]
    %v3301 = vld [vmem:[#allocation3 + $0x1c] sm:$0xf]
    %v3302 = vld [vmem:[#allocation3 + $0x20] sm:$0xf]
    %v3303 = vld [vmem:[#allocation3 + $0x24] sm:$0xf]
    %v3304 = vld [vmem:[#allocation3 + $0x28] sm:$0xf]
    %v3305 = vld [vmem:[#allocation3 + $0x2c] sm:$0xf]
    %v3306 = vld [vmem:[#allocation3 + $0x30] sm:$0xf]
    %v3307 = vld [vmem:[#allocation3 + $0x34] sm:$0xf]
    %v3308 = vld [vmem:[#allocation3 + $0x38] sm:$0xf]
    %v3309 = vld [vmem:[#allocation3 + $0x3c] sm:$0xf]
    %v3310 = vld [vmem:[#allocation3 + $0x40] sm:$0xf]
    %v3311 = vld [vmem:[#allocation3 + $0x44] sm:$0xf]
    %v3312 = vld [vmem:[#allocation3 + $0x48] sm:$0xf]
    %v3313 = vld [vmem:[#allocation3 + $0x4c] sm:$0xf]
    %3314 = vst [vmem:[#allocation2] sm:$0xf] %v3294
    %3315 = vst [vmem:[#allocation2 + $0x14] sm:$0xf] %v3295
    %3316 = vst [vmem:[#allocation2 + $0x28] sm:$0xf] %v3296
    %3317 = vst [vmem:[#allocation2 + $0x3c] sm:$0xf] %v3297
    %3318 = vst [vmem:[#allocation2 + $0x50] sm:$0xf] %v3298
    %3319 = vst [vmem:[#allocation2 + $0x64] sm:$0xf] %v3299
    %3320 = vst [vmem:[#allocation2 + $0x78] sm:$0xf] %v3300
    %3321 = vst [vmem:[#allocation2 + $0x8c] sm:$0xf] %v3301
    %3322 = vst [vmem:[#allocation2 + $0xa0] sm:$0xf] %v3302
    %3323 = vst [vmem:[#allocation2 + $0xb4] sm:$0xf] %v3303
    %3324 = vst [vmem:[#allocation2 + $0xc8] sm:$0xf] %v3304
    %3325 = vst [vmem:[#allocation2 + $0xdc] sm:$0xf] %v3305
    %3326 = vst [vmem:[#allocation2 + $0xf0] sm:$0xf] %v3306
    %3327 = vst [vmem:[#allocation2 + $0x104] sm:$0xf] %v3307
    %3328 = vst [vmem:[#allocation2 + $0x118] sm:$0xf] %v3308
    %3329 = vst [vmem:[#allocation2 + $0x12c] sm:$0xf] %v3309
    %3330 = vst [vmem:[#allocation2 + $0x140] sm:$0xf] %v3310
    %3331 = vst [vmem:[#allocation2 + $0x154] sm:$0xf] %v3311
    %3332 = vst [vmem:[#allocation2 + $0x168] sm:$0xf] %v3312
    %3333 = vst [vmem:[#allocation2 + $0x17c] sm:$0xf] %v3313
    %s3334 = scalar_lea.vmem [#allocation3], 8
    %v3335 = vld [vmem:[%s3334] sm:$0xf]
    %v3336 = vld [vmem:[%s3334 + $0x4] sm:$0xf]
    %v3337 = vld [vmem:[%s3334 + $0x8] sm:$0xf]
    %v3338 = vld [vmem:[%s3334 + $0xc] sm:$0xf]
    %v3339 = vld [vmem:[%s3334 + $0x10] sm:$0xf]
    %v3340 = vld [vmem:[%s3334 + $0x14] sm:$0xf]
    %v3341 = vld [vmem:[%s3334 + $0x18] sm:$0xf]
    %v3342 = vld [vmem:[%s3334 + $0x1c] sm:$0xf]
    %v3343 = vld [vmem:[%s3334 + $0x20] sm:$0xf]
    %v3344 = vld [vmem:[%s3334 + $0x24] sm:$0xf]
    %v3345 = vld [vmem:[%s3334 + $0x28] sm:$0xf]
    %v3346 = vld [vmem:[%s3334 + $0x2c] sm:$0xf]
    %v3347 = vld [vmem:[%s3334 + $0x30] sm:$0xf]
    %v3348 = vld [vmem:[%s3334 + $0x34] sm:$0xf]
    %v3349 = vld [vmem:[%s3334 + $0x38] sm:$0xf]
    %v3350 = vld [vmem:[%s3334 + $0x3c] sm:$0xf]
    %v3351 = vld [vmem:[%s3334 + $0x40] sm:$0xf]
    %v3352 = vld [vmem:[%s3334 + $0x44] sm:$0xf]
    %v3353 = vld [vmem:[%s3334 + $0x48] sm:$0xf]
    %v3354 = vld [vmem:[%s3334 + $0x4c] sm:$0xf]
    %3355 = vst [vmem:[#allocation2 + $0x4] sm:$0xf] %v3335
    %3356 = vst [vmem:[#allocation2 + $0x18] sm:$0xf] %v3336
    %3357 = vst [vmem:[#allocation2 + $0x2c] sm:$0xf] %v3337
    %3358 = vst [vmem:[#allocation2 + $0x40] sm:$0xf] %v3338
    %3359 = vst [vmem:[#allocation2 + $0x54] sm:$0xf] %v3339
    %3360 = vst [vmem:[#allocation2 + $0x68] sm:$0xf] %v3340
    %3361 = vst [vmem:[#allocation2 + $0x7c] sm:$0xf] %v3341
    %3362 = vst [vmem:[#allocation2 + $0x90] sm:$0xf] %v3342
    %3363 = vst [vmem:[#allocation2 + $0xa4] sm:$0xf] %v3343
    %3364 = vst [vmem:[#allocation2 + $0xb8] sm:$0xf] %v3344
    %3365 = vst [vmem:[#allocation2 + $0xcc] sm:$0xf] %v3345
    %3366 = vst [vmem:[#allocation2 + $0xe0] sm:$0xf] %v3346
    %3367 = vst [vmem:[#allocation2 + $0xf4] sm:$0xf] %v3347
    %3368 = vst [vmem:[#allocation2 + $0x108] sm:$0xf] %v3348
    %3369 = vst [vmem:[#allocation2 + $0x11c] sm:$0xf] %v3349
    %3370 = vst [vmem:[#allocation2 + $0x130] sm:$0xf] %v3350
    %3371 = vst [vmem:[#allocation2 + $0x144] sm:$0xf] %v3351
    %3372 = vst [vmem:[#allocation2 + $0x158] sm:$0xf] %v3352
    %3373 = vst [vmem:[#allocation2 + $0x16c] sm:$0xf] %v3353
    %3374 = vst [vmem:[#allocation2 + $0x180] sm:$0xf] %v3354
    %s3375 = scalar_lea.vmem [#allocation3], 16
    %v3376 = vld [vmem:[%s3375] sm:$0xf]
    %v3377 = vld [vmem:[%s3375 + $0x4] sm:$0xf]
    %v3378 = vld [vmem:[%s3375 + $0x8] sm:$0xf]
    %v3379 = vld [vmem:[%s3375 + $0xc] sm:$0xf]
    %v3380 = vld [vmem:[%s3375 + $0x10] sm:$0xf]
    %v3381 = vld [vmem:[%s3375 + $0x14] sm:$0xf]
    %v3382 = vld [vmem:[%s3375 + $0x18] sm:$0xf]
    %v3383 = vld [vmem:[%s3375 + $0x1c] sm:$0xf]
    %v3384 = vld [vmem:[%s3375 + $0x20] sm:$0xf]
    %v3385 = vld [vmem:[%s3375 + $0x24] sm:$0xf]
    %v3386 = vld [vmem:[%s3375 + $0x28] sm:$0xf]
    %v3387 = vld [vmem:[%s3375 + $0x2c] sm:$0xf]
    %v3388 = vld [vmem:[%s3375 + $0x30] sm:$0xf]
    %v3389 = vld [vmem:[%s3375 + $0x34] sm:$0xf]
    %v3390 = vld [vmem:[%s3375 + $0x38] sm:$0xf]
    %v3391 = vld [vmem:[%s3375 + $0x3c] sm:$0xf]
    %v3392 = vld [vmem:[%s3375 + $0x40] sm:$0xf]
    %v3393 = vld [vmem:[%s3375 + $0x44] sm:$0xf]
    %v3394 = vld [vmem:[%s3375 + $0x48] sm:$0xf]
    %v3395 = vld [vmem:[%s3375 + $0x4c] sm:$0xf]
    %3396 = vst [vmem:[#allocation2 + $0x8] sm:$0xf] %v3376
    %3397 = vst [vmem:[#allocation2 + $0x1c] sm:$0xf] %v3377
    %3398 = vst [vmem:[#allocation2 + $0x30] sm:$0xf] %v3378
    %3399 = vst [vmem:[#allocation2 + $0x44] sm:$0xf] %v3379
    %3400 = vst [vmem:[#allocation2 + $0x58] sm:$0xf] %v3380
    %3401 = vst [vmem:[#allocation2 + $0x6c] sm:$0xf] %v3381
    %3402 = vst [vmem:[#allocation2 + $0x80] sm:$0xf] %v3382
    %3403 = vst [vmem:[#allocation2 + $0x94] sm:$0xf] %v3383
    %3404 = vst [vmem:[#allocation2 + $0xa8] sm:$0xf] %v3384
    %3405 = vst [vmem:[#allocation2 + $0xbc] sm:$0xf] %v3385
    %3406 = vst [vmem:[#allocation2 + $0xd0] sm:$0xf] %v3386
    %3407 = vst [vmem:[#allocation2 + $0xe4] sm:$0xf] %v3387
    %3408 = vst [vmem:[#allocation2 + $0xf8] sm:$0xf] %v3388
    %3409 = vst [vmem:[#allocation2 + $0x10c] sm:$0xf] %v3389
    %3410 = vst [vmem:[#allocation2 + $0x120] sm:$0xf] %v3390
    %3411 = vst [vmem:[#allocation2 + $0x134] sm:$0xf] %v3391
    %3412 = vst [vmem:[#allocation2 + $0x148] sm:$0xf] %v3392
    %3413 = vst [vmem:[#allocation2 + $0x15c] sm:$0xf] %v3393
    %3414 = vst [vmem:[#allocation2 + $0x170] sm:$0xf] %v3394
    %3415 = vst [vmem:[#allocation2 + $0x184] sm:$0xf] %v3395
    %s3416 = scalar_lea.vmem [#allocation3], 24
    %v3417 = vld [vmem:[%s3416] sm:$0xf]
    %v3418 = vld [vmem:[%s3416 + $0x4] sm:$0xf]
    %v3419 = vld [vmem:[%s3416 + $0x8] sm:$0xf]
    %v3420 = vld [vmem:[%s3416 + $0xc] sm:$0xf]
    %v3421 = vld [vmem:[%s3416 + $0x10] sm:$0xf]
    %v3422 = vld [vmem:[%s3416 + $0x14] sm:$0xf]
    %v3423 = vld [vmem:[%s3416 + $0x18] sm:$0xf]
    %v3424 = vld [vmem:[%s3416 + $0x1c] sm:$0xf]
    %v3425 = vld [vmem:[%s3416 + $0x20] sm:$0xf]
    %v3426 = vld [vmem:[%s3416 + $0x24] sm:$0xf]
    %v3427 = vld [vmem:[%s3416 + $0x28] sm:$0xf]
    %v3428 = vld [vmem:[%s3416 + $0x2c] sm:$0xf]
    %v3429 = vld [vmem:[%s3416 + $0x30] sm:$0xf]
    %v3430 = vld [vmem:[%s3416 + $0x34] sm:$0xf]
    %v3431 = vld [vmem:[%s3416 + $0x38] sm:$0xf]
    %v3432 = vld [vmem:[%s3416 + $0x3c] sm:$0xf]
    %v3433 = vld [vmem:[%s3416 + $0x40] sm:$0xf]
    %v3434 = vld [vmem:[%s3416 + $0x44] sm:$0xf]
    %v3435 = vld [vmem:[%s3416 + $0x48] sm:$0xf]
    %v3436 = vld [vmem:[%s3416 + $0x4c] sm:$0xf]
    %3437 = vst [vmem:[#allocation2 + $0xc] sm:$0xf] %v3417
    %3438 = vst [vmem:[#allocation2 + $0x20] sm:$0xf] %v3418
    %3439 = vst [vmem:[#allocation2 + $0x34] sm:$0xf] %v3419
    %3440 = vst [vmem:[#allocation2 + $0x48] sm:$0xf] %v3420
    %3441 = vst [vmem:[#allocation2 + $0x5c] sm:$0xf] %v3421
    %3442 = vst [vmem:[#allocation2 + $0x70] sm:$0xf] %v3422
    %3443 = vst [vmem:[#allocation2 + $0x84] sm:$0xf] %v3423
    %3444 = vst [vmem:[#allocation2 + $0x98] sm:$0xf] %v3424
    %3445 = vst [vmem:[#allocation2 + $0xac] sm:$0xf] %v3425
    %3446 = vst [vmem:[#allocation2 + $0xc0] sm:$0xf] %v3426
    %3447 = vst [vmem:[#allocation2 + $0xd4] sm:$0xf] %v3427
    %3448 = vst [vmem:[#allocation2 + $0xe8] sm:$0xf] %v3428
    %3449 = vst [vmem:[#allocation2 + $0xfc] sm:$0xf] %v3429
    %3450 = vst [vmem:[#allocation2 + $0x110] sm:$0xf] %v3430
    %3451 = vst [vmem:[#allocation2 + $0x124] sm:$0xf] %v3431
    %3452 = vst [vmem:[#allocation2 + $0x138] sm:$0xf] %v3432
    %3453 = vst [vmem:[#allocation2 + $0x14c] sm:$0xf] %v3433
    %3454 = vst [vmem:[#allocation2 + $0x160] sm:$0xf] %v3434
    %3455 = vst [vmem:[#allocation2 + $0x174] sm:$0xf] %v3435
    %3456 = vst [vmem:[#allocation2 + $0x188] sm:$0xf] %v3436
    %s3457 = scalar_lea.vmem [#allocation3], 32
    %v3458 = vld [vmem:[%s3457] sm:$0xf]
    %v3459 = vld [vmem:[%s3457 + $0x4] sm:$0xf]
    %v3460 = vld [vmem:[%s3457 + $0x8] sm:$0xf]
    %v3461 = vld [vmem:[%s3457 + $0xc] sm:$0xf]
    %v3462 = vld [vmem:[%s3457 + $0x10] sm:$0xf]
    %v3463 = vld [vmem:[%s3457 + $0x14] sm:$0xf]
    %v3464 = vld [vmem:[%s3457 + $0x18] sm:$0xf]
    %v3465 = vld [vmem:[%s3457 + $0x1c] sm:$0xf]
    %v3466 = vld [vmem:[%s3457 + $0x20] sm:$0xf]
    %v3467 = vld [vmem:[%s3457 + $0x24] sm:$0xf]
    %v3468 = vld [vmem:[%s3457 + $0x28] sm:$0xf]
    %v3469 = vld [vmem:[%s3457 + $0x2c] sm:$0xf]
    %v3470 = vld [vmem:[%s3457 + $0x30] sm:$0xf]
    %v3471 = vld [vmem:[%s3457 + $0x34] sm:$0xf]
    %v3472 = vld [vmem:[%s3457 + $0x38] sm:$0xf]
    %v3473 = vld [vmem:[%s3457 + $0x3c] sm:$0xf]
    %v3474 = vld [vmem:[%s3457 + $0x40] sm:$0xf]
    %v3475 = vld [vmem:[%s3457 + $0x44] sm:$0xf]
    %v3476 = vld [vmem:[%s3457 + $0x48] sm:$0xf]
    %v3477 = vld [vmem:[%s3457 + $0x4c] sm:$0xf]
    %3478 = vst [vmem:[#allocation2 + $0x10] sm:$0xf] %v3458
    %3479 = vst [vmem:[#allocation2 + $0x24] sm:$0xf] %v3459
    %3480 = vst [vmem:[#allocation2 + $0x38] sm:$0xf] %v3460
    %3481 = vst [vmem:[#allocation2 + $0x4c] sm:$0xf] %v3461
    %3482 = vst [vmem:[#allocation2 + $0x60] sm:$0xf] %v3462
    %3483 = vst [vmem:[#allocation2 + $0x74] sm:$0xf] %v3463
    %3484 = vst [vmem:[#allocation2 + $0x88] sm:$0xf] %v3464
    %3485 = vst [vmem:[#allocation2 + $0x9c] sm:$0xf] %v3465
    %3486 = vst [vmem:[#allocation2 + $0xb0] sm:$0xf] %v3466
    %3487 = vst [vmem:[#allocation2 + $0xc4] sm:$0xf] %v3467
    %3488 = vst [vmem:[#allocation2 + $0xd8] sm:$0xf] %v3468
    %3489 = vst [vmem:[#allocation2 + $0xec] sm:$0xf] %v3469
    %3490 = vst [vmem:[#allocation2 + $0x100] sm:$0xf] %v3470
    %3491 = vst [vmem:[#allocation2 + $0x114] sm:$0xf] %v3471
    %3492 = vst [vmem:[#allocation2 + $0x128] sm:$0xf] %v3472
    %3493 = vst [vmem:[#allocation2 + $0x13c] sm:$0xf] %v3473
    %3494 = vst [vmem:[#allocation2 + $0x150] sm:$0xf] %v3474
    %3495 = vst [vmem:[#allocation2 + $0x164] sm:$0xf] %v3475
    %3496 = vst [vmem:[#allocation2 + $0x178] sm:$0xf] %v3476
    %3497 = vst [vmem:[#allocation2 + $0x18c] sm:$0xf] %v3477
    %v3498 = vld [vmem:[#allocation2] sm:$0xff]
    %v3499 = vld [vmem:[#allocation2 + $0x8] sm:$0xff]
    %v3500 = vld [vmem:[#allocation2 + $0x10] sm:$0xf]
    %v3501 = vld [vmem:[#allocation2 + $0x14] sm:$0xff]
    %v3502 = vld [vmem:[#allocation2 + $0x1c] sm:$0xff]
    %v3503 = vld [vmem:[#allocation2 + $0x24] sm:$0xf]
    %v3504 = vld [vmem:[#allocation2 + $0x28] sm:$0xff]
    %v3505 = vld [vmem:[#allocation2 + $0x30] sm:$0xff]
    %v3506 = vld [vmem:[#allocation2 + $0x38] sm:$0xf]
    %v3507 = vld [vmem:[#allocation2 + $0x3c] sm:$0xff]
    %v3508 = vld [vmem:[#allocation2 + $0x44] sm:$0xff]
    %v3509 = vld [vmem:[#allocation2 + $0x4c] sm:$0xf]
    %v3510 = vld [vmem:[#allocation2 + $0x50] sm:$0xff]
    %v3511 = vld [vmem:[#allocation2 + $0x58] sm:$0xff]
    %v3512 = vld [vmem:[#allocation2 + $0x60] sm:$0xf]
    %v3513 = vld [vmem:[#allocation2 + $0x64] sm:$0xff]
    %v3514 = vld [vmem:[#allocation2 + $0x6c] sm:$0xff]
    %v3515 = vld [vmem:[#allocation2 + $0x74] sm:$0xf]
    %v3516 = vld [vmem:[#allocation2 + $0x78] sm:$0xff]
    %v3517 = vld [vmem:[#allocation2 + $0x80] sm:$0xff]
    %v3518 = vld [vmem:[#allocation2 + $0x88] sm:$0xf]
    %v3519 = vld [vmem:[#allocation2 + $0x8c] sm:$0xff]
    %v3520 = vld [vmem:[#allocation2 + $0x94] sm:$0xff]
    %v3521 = vld [vmem:[#allocation2 + $0x9c] sm:$0xf]
    %v3522 = vld [vmem:[#allocation2 + $0xa0] sm:$0xff]
    %v3523 = vld [vmem:[#allocation2 + $0xa8] sm:$0xff]
    %v3524 = vld [vmem:[#allocation2 + $0xb0] sm:$0xf]
    %v3525 = vld [vmem:[#allocation2 + $0xb4] sm:$0xff]
    %v3526 = vld [vmem:[#allocation2 + $0xbc] sm:$0xff]
    %v3527 = vld [vmem:[#allocation2 + $0xc4] sm:$0xf]
    %v3528 = vld [vmem:[#allocation2 + $0xc8] sm:$0xff]
    %v3529 = vld [vmem:[#allocation2 + $0xd0] sm:$0xff]
    %v3530 = vld [vmem:[#allocation2 + $0xd8] sm:$0xf]
    %v3531 = vld [vmem:[#allocation2 + $0xdc] sm:$0xff]
    %v3532 = vld [vmem:[#allocation2 + $0xe4] sm:$0xff]
    %v3533 = vld [vmem:[#allocation2 + $0xec] sm:$0xf]
    %v3534 = vld [vmem:[#allocation2 + $0xf0] sm:$0xff]
    %v3535 = vld [vmem:[#allocation2 + $0xf8] sm:$0xff]
    %v3536 = vld [vmem:[#allocation2 + $0x100] sm:$0xf]
    %v3537 = vld [vmem:[#allocation2 + $0x104] sm:$0xff]
    %v3538 = vld [vmem:[#allocation2 + $0x10c] sm:$0xff]
    %v3539 = vld [vmem:[#allocation2 + $0x114] sm:$0xf]
    %v3540 = vld [vmem:[#allocation2 + $0x118] sm:$0xff]
    %v3541 = vld [vmem:[#allocation2 + $0x120] sm:$0xff]
    %v3542 = vld [vmem:[#allocation2 + $0x128] sm:$0xf]
    %v3543 = vld [vmem:[#allocation2 + $0x12c] sm:$0xff]
    %v3544 = vld [vmem:[#allocation2 + $0x134] sm:$0xff]
    %v3545 = vld [vmem:[#allocation2 + $0x13c] sm:$0xf]
    %v3546 = vld [vmem:[#allocation2 + $0x140] sm:$0xff]
    %v3547 = vld [vmem:[#allocation2 + $0x148] sm:$0xff]
    %v3548 = vld [vmem:[#allocation2 + $0x150] sm:$0xf]
    %v3549 = vld [vmem:[#allocation2 + $0x154] sm:$0xff]
    %v3550 = vld [vmem:[#allocation2 + $0x15c] sm:$0xff]
    %v3551 = vld [vmem:[#allocation2 + $0x164] sm:$0xf]
    %v3552 = vld [vmem:[#allocation2 + $0x168] sm:$0xff]
    %v3553 = vld [vmem:[#allocation2 + $0x170] sm:$0xff]
    %v3554 = vld [vmem:[#allocation2 + $0x178] sm:$0xf]
    %v3555 = vld [vmem:[#allocation2 + $0x17c] sm:$0xff]
    %v3556 = vld [vmem:[#allocation2 + $0x184] sm:$0xff]
    %v3557 = vld [vmem:[#allocation2 + $0x18c] sm:$0xf]
    %v3558 = vld [vmem:[#allocation4] sm:$0xff]
    %v3559 = vld [vmem:[#allocation4 + $0x8] sm:$0xff]
    %v3560 = vld [vmem:[#allocation4 + $0x10] sm:$0xff]
    %v3561 = vld [vmem:[#allocation4 + $0x18] sm:$0xff]
    %v3562 = vld [vmem:[#allocation4 + $0x20] sm:$0xff]
    %v3563 = vld [vmem:[#allocation4 + $0x28] sm:$0xff]
    %v3564 = vld [vmem:[#allocation4 + $0x30] sm:$0xff]
    %v3565 = vld [vmem:[#allocation4 + $0x38] sm:$0xff]
    %v3566 = vld [vmem:[#allocation4 + $0x40] sm:$0xff]
    %v3567 = vld [vmem:[#allocation4 + $0x48] sm:$0xff]
    %v3568 = vld [vmem:[#allocation4 + $0x50] sm:$0xff]
    %v3569 = vld [vmem:[#allocation4 + $0x58] sm:$0xff]
    %v3570 = vld [vmem:[#allocation4 + $0x60] sm:$0xff]
    %v3571 = vld [vmem:[#allocation4 + $0x68] sm:$0xff]
    %v3572 = vld [vmem:[#allocation4 + $0x70] sm:$0xff]
    %v3573 = vld [vmem:[#allocation4 + $0x78] sm:$0xff]
    %v3574 = vld [vmem:[#allocation4 + $0x80] sm:$0xff]
    %v3575 = vld [vmem:[#allocation4 + $0x88] sm:$0xff]
    %v3576 = vld [vmem:[#allocation4 + $0x90] sm:$0xff]
    %v3577 = vld [vmem:[#allocation4 + $0x98] sm:$0xff]
    %v3578 = vld [vmem:[#allocation4 + $0xa0] sm:$0xff]
    %v3579 = vld [vmem:[#allocation4 + $0xa8] sm:$0xff]
    %v3580 = vld [vmem:[#allocation4 + $0xb0] sm:$0xff]
    %v3581 = vld [vmem:[#allocation4 + $0xb8] sm:$0xff]
    %v3582 = vld [vmem:[#allocation4 + $0xc0] sm:$0xff]
    %v3583 = vld [vmem:[#allocation4 + $0xc8] sm:$0xff]
    %v3584 = vld [vmem:[#allocation4 + $0xd0] sm:$0xff]
    %v3585 = vld [vmem:[#allocation4 + $0xd8] sm:$0xff]
    %v3586 = vld [vmem:[#allocation4 + $0xe0] sm:$0xff]
    %v3587 = vld [vmem:[#allocation4 + $0xe8] sm:$0xff]
    %v3588 = vld [vmem:[#allocation4 + $0xf0] sm:$0xff]
    %v3589 = vld [vmem:[#allocation4 + $0xf8] sm:$0xff]
    %v3590 = vld [vmem:[#allocation4 + $0x100] sm:$0xff]
    %v3591 = vld [vmem:[#allocation4 + $0x108] sm:$0xff]
    %v3592 = vld [vmem:[#allocation4 + $0x110] sm:$0xff]
    %v3593 = vld [vmem:[#allocation4 + $0x118] sm:$0xff]
    %v3594 = vld [vmem:[#allocation4 + $0x120] sm:$0xff]
    %v3595 = vld [vmem:[#allocation4 + $0x128] sm:$0xff]
    %v3596 = vld [vmem:[#allocation4 + $0x130] sm:$0xff]
    %v3597 = vld [vmem:[#allocation4 + $0x138] sm:$0xff]
    %v3598 = vld [vmem:[#allocation4 + $0x140] sm:$0xff]
    %v3599 = vld [vmem:[#allocation4 + $0x148] sm:$0xff]
    %v3600 = vld [vmem:[#allocation4 + $0x150] sm:$0xff]
    %v3601 = vld [vmem:[#allocation4 + $0x158] sm:$0xff]
    %v3602 = vld [vmem:[#allocation4 + $0x160] sm:$0xff]
    %v3603 = vld [vmem:[#allocation4 + $0x168] sm:$0xff]
    %v3604 = vld [vmem:[#allocation4 + $0x170] sm:$0xff]
    %v3605 = vld [vmem:[#allocation4 + $0x178] sm:$0xff]
    %v3606 = vld [vmem:[#allocation4 + $0x180] sm:$0xff]
    %v3607 = vld [vmem:[#allocation4 + $0x188] sm:$0xff]
    %v3608 = vld [vmem:[#allocation4 + $0x190] sm:$0xff]
    %v3609 = vld [vmem:[#allocation4 + $0x198] sm:$0xff]
    %v3610 = vld [vmem:[#allocation4 + $0x1a0] sm:$0xff]
    %v3611 = vld [vmem:[#allocation4 + $0x1a8] sm:$0xff]
    %v3612 = vld [vmem:[#allocation4 + $0x1b0] sm:$0xff]
    %v3613 = vld [vmem:[#allocation4 + $0x1b8] sm:$0xff]
    %v3614 = vld [vmem:[#allocation4 + $0x1c0] sm:$0xff]
    %v3615 = vld [vmem:[#allocation4 + $0x1c8] sm:$0xff]
    %v3616 = vld [vmem:[#allocation4 + $0x1d0] sm:$0xff]
    %v3617 = vld [vmem:[#allocation4 + $0x1d8] sm:$0xff]
    %v3618 = vld [vmem:[#allocation4 + $0x1e0] sm:$0xff]
    %v3619 = vld [vmem:[#allocation4 + $0x1e8] sm:$0xff]
    %v3620 = vld [vmem:[#allocation4 + $0x1f0] sm:$0xff]
    %v3621 = vld [vmem:[#allocation4 + $0x1f8] sm:$0xff]
    %v3622 = vld [vmem:[#allocation4 + $0x200] sm:$0xff]
    %v3623 = vld [vmem:[#allocation4 + $0x208] sm:$0xff]
    %v3624 = vld [vmem:[#allocation4 + $0x210] sm:$0xff]
    %v3625 = vld [vmem:[#allocation4 + $0x218] sm:$0xff]
    %v3626 = vld [vmem:[#allocation4 + $0x220] sm:$0xff]
    %v3627 = vld [vmem:[#allocation4 + $0x228] sm:$0xff]
    %v3628 = vld [vmem:[#allocation4 + $0x230] sm:$0xff]
    %v3629 = vld [vmem:[#allocation4 + $0x238] sm:$0xff]
    %v3630 = vld [vmem:[#allocation4 + $0x240] sm:$0xff]
    %v3631 = vld [vmem:[#allocation4 + $0x248] sm:$0xff]
    %v3632 = vld [vmem:[#allocation4 + $0x250] sm:$0xff]
    %v3633 = vld [vmem:[#allocation4 + $0x258] sm:$0xff]
    %v3634 = vld [vmem:[#allocation4 + $0x260] sm:$0xff]
    %v3635 = vld [vmem:[#allocation4 + $0x268] sm:$0xff]
    %v3636 = vld [vmem:[#allocation4 + $0x270] sm:$0xff]
    %v3637 = vld [vmem:[#allocation4 + $0x278] sm:$0xff]
    %v3638 = vld [vmem:[%s4] sm:$0x3]
    %v3640 = vlaneseq
    %v3641 = vshrl.u32 %v3640, 7
    %v3642 = vsub.s32 0, %v3641
    %v3643 = vrot.slane %v3638, %v3642
    %v3644 = vlaneseq
    %v3645 = vshrl.u32 %v3644, 7
    %v3646 = vsub.s32 1, %v3645
    %v3647 = vrot.slane %v3638, %v3646
    %v3710 = vunpack.c.l.b16 %v3498
    %v3711 = vunpack.c.h.b16 %v3498
    %v3712 = vunpack.c.l.b16 %v3499
    %v3713 = vunpack.c.h.b16 %v3499
    %v3714 = vunpack.c.l.b16 %v3500
    %v3715 = vunpack.c.l.b16 %v3501
    %v3716 = vunpack.c.h.b16 %v3501
    %v3717 = vunpack.c.l.b16 %v3502
    %v3718 = vunpack.c.h.b16 %v3502
    %v3719 = vunpack.c.l.b16 %v3503
    %v3720 = vunpack.c.l.b16 %v3504
    %v3721 = vunpack.c.h.b16 %v3504
    %v3722 = vunpack.c.l.b16 %v3505
    %v3723 = vunpack.c.h.b16 %v3505
    %v3724 = vunpack.c.l.b16 %v3506
    %v3725 = vunpack.c.l.b16 %v3507
    %v3726 = vunpack.c.h.b16 %v3507
    %v3727 = vunpack.c.l.b16 %v3508
    %v3728 = vunpack.c.h.b16 %v3508
    %v3729 = vunpack.c.l.b16 %v3509
    %v3730 = vunpack.c.l.b16 %v3510
    %v3731 = vunpack.c.h.b16 %v3510
    %v3732 = vunpack.c.l.b16 %v3511
    %v3733 = vunpack.c.h.b16 %v3511
    %v3734 = vunpack.c.l.b16 %v3512
    %v3735 = vunpack.c.l.b16 %v3513
    %v3736 = vunpack.c.h.b16 %v3513
    %v3737 = vunpack.c.l.b16 %v3514
    %v3738 = vunpack.c.h.b16 %v3514
    %v3739 = vunpack.c.l.b16 %v3515
    %v3740 = vunpack.c.l.b16 %v3516
    %v3741 = vunpack.c.h.b16 %v3516
    %v3742 = vunpack.c.l.b16 %v3517
    %v3743 = vunpack.c.h.b16 %v3517
    %v3744 = vunpack.c.l.b16 %v3518
    %v3745 = vunpack.c.l.b16 %v3519
    %v3746 = vunpack.c.h.b16 %v3519
    %v3747 = vunpack.c.l.b16 %v3520
    %v3748 = vunpack.c.h.b16 %v3520
    %v3749 = vunpack.c.l.b16 %v3521
    %v3750 = vunpack.c.l.b16 %v3522
    %v3751 = vunpack.c.h.b16 %v3522
    %v3752 = vunpack.c.l.b16 %v3523
    %v3753 = vunpack.c.h.b16 %v3523
    %v3754 = vunpack.c.l.b16 %v3524
    %v3755 = vunpack.c.l.b16 %v3525
    %v3756 = vunpack.c.h.b16 %v3525
    %v3757 = vunpack.c.l.b16 %v3526
    %v3758 = vunpack.c.h.b16 %v3526
    %v3759 = vunpack.c.l.b16 %v3527
    %v3760 = vunpack.c.l.b16 %v3528
    %v3761 = vunpack.c.h.b16 %v3528
    %v3762 = vunpack.c.l.b16 %v3529
    %v3763 = vunpack.c.h.b16 %v3529
    %v3764 = vunpack.c.l.b16 %v3530
    %v3765 = vunpack.c.l.b16 %v3531
    %v3766 = vunpack.c.h.b16 %v3531
    %v3767 = vunpack.c.l.b16 %v3532
    %v3768 = vunpack.c.h.b16 %v3532
    %v3769 = vunpack.c.l.b16 %v3533
    %v3770 = vunpack.c.l.b16 %v3534
    %v3771 = vunpack.c.h.b16 %v3534
    %v3772 = vunpack.c.l.b16 %v3535
    %v3773 = vunpack.c.h.b16 %v3535
    %v3774 = vunpack.c.l.b16 %v3536
    %v3775 = vunpack.c.l.b16 %v3537
    %v3776 = vunpack.c.h.b16 %v3537
    %v3777 = vunpack.c.l.b16 %v3538
    %v3778 = vunpack.c.h.b16 %v3538
    %v3779 = vunpack.c.l.b16 %v3539
    %v3780 = vunpack.c.l.b16 %v3540
    %v3781 = vunpack.c.h.b16 %v3540
    %v3782 = vunpack.c.l.b16 %v3541
    %v3783 = vunpack.c.h.b16 %v3541
    %v3784 = vunpack.c.l.b16 %v3542
    %v3785 = vunpack.c.l.b16 %v3543
    %v3786 = vunpack.c.h.b16 %v3543
    %v3787 = vunpack.c.l.b16 %v3544
    %v3788 = vunpack.c.h.b16 %v3544
    %v3789 = vunpack.c.l.b16 %v3545
    %v3790 = vunpack.c.l.b16 %v3546
    %v3791 = vunpack.c.h.b16 %v3546
    %v3792 = vunpack.c.l.b16 %v3547
    %v3793 = vunpack.c.h.b16 %v3547
    %v3794 = vunpack.c.l.b16 %v3548
    %v3795 = vunpack.c.l.b16 %v3549
    %v3796 = vunpack.c.h.b16 %v3549
    %v3797 = vunpack.c.l.b16 %v3550
    %v3798 = vunpack.c.h.b16 %v3550
    %v3799 = vunpack.c.l.b16 %v3551
    %v3800 = vunpack.c.l.b16 %v3552
    %v3801 = vunpack.c.h.b16 %v3552
    %v3802 = vunpack.c.l.b16 %v3553
    %v3803 = vunpack.c.h.b16 %v3553
    %v3804 = vunpack.c.l.b16 %v3554
    %v3805 = vunpack.c.l.b16 %v3555
    %v3806 = vunpack.c.h.b16 %v3555
    %v3807 = vunpack.c.l.b16 %v3556
    %v3808 = vunpack.c.h.b16 %v3556
    %v3809 = vunpack.c.l.b16 %v3557
    %v3810 = vpack.c.b16 %v3715, %v3710
    %v3811 = vpack.c.b16 %v3716, %v3711
    %v3812 = vpack.c.b16 %v3717, %v3712
    %v3813 = vpack.c.b16 %v3718, %v3713
    %v3814 = vpack.c.b16 %v3719, %v3714
    %v3815 = vpack.c.b16 %v3725, %v3720
    %v3816 = vpack.c.b16 %v3726, %v3721
    %v3817 = vpack.c.b16 %v3727, %v3722
    %v3818 = vpack.c.b16 %v3728, %v3723
    %v3819 = vpack.c.b16 %v3729, %v3724
    %v3820 = vpack.c.b16 %v3735, %v3730
    %v3821 = vpack.c.b16 %v3736, %v3731
    %v3822 = vpack.c.b16 %v3737, %v3732
    %v3823 = vpack.c.b16 %v3738, %v3733
    %v3824 = vpack.c.b16 %v3739, %v3734
    %v3825 = vpack.c.b16 %v3745, %v3740
    %v3826 = vpack.c.b16 %v3746, %v3741
    %v3827 = vpack.c.b16 %v3747, %v3742
    %v3828 = vpack.c.b16 %v3748, %v3743
    %v3829 = vpack.c.b16 %v3749, %v3744
    %v3830 = vpack.c.b16 %v3755, %v3750
    %v3831 = vpack.c.b16 %v3756, %v3751
    %v3832 = vpack.c.b16 %v3757, %v3752
    %v3833 = vpack.c.b16 %v3758, %v3753
    %v3834 = vpack.c.b16 %v3759, %v3754
    %v3835 = vpack.c.b16 %v3765, %v3760
    %v3836 = vpack.c.b16 %v3766, %v3761
    %v3837 = vpack.c.b16 %v3767, %v3762
    %v3838 = vpack.c.b16 %v3768, %v3763
    %v3839 = vpack.c.b16 %v3769, %v3764
    %v3840 = vpack.c.b16 %v3775, %v3770
    %v3841 = vpack.c.b16 %v3776, %v3771
    %v3842 = vpack.c.b16 %v3777, %v3772
    %v3843 = vpack.c.b16 %v3778, %v3773
    %v3844 = vpack.c.b16 %v3779, %v3774
    %v3845 = vpack.c.b16 %v3785, %v3780
    %v3846 = vpack.c.b16 %v3786, %v3781
    %v3847 = vpack.c.b16 %v3787, %v3782
    %v3848 = vpack.c.b16 %v3788, %v3783
    %v3849 = vpack.c.b16 %v3789, %v3784
    %v3850 = vpack.c.b16 %v3795, %v3790
    %v3851 = vpack.c.b16 %v3796, %v3791
    %v3852 = vpack.c.b16 %v3797, %v3792
    %v3853 = vpack.c.b16 %v3798, %v3793
    %v3854 = vpack.c.b16 %v3799, %v3794
    %v3855 = vpack.c.b16 %v3805, %v3800
    %v3856 = vpack.c.b16 %v3806, %v3801
    %v3857 = vpack.c.b16 %v3807, %v3802
    %v3858 = vpack.c.b16 %v3808, %v3803
    %v3859 = vpack.c.b16 %v3809, %v3804
    %v3990 = vunpack.c.l.b16 %v3558
    %v3991 = vunpack.c.h.b16 %v3558
    %v3992 = vunpack.c.l.b16 %v3559
    %v3993 = vunpack.c.h.b16 %v3559
    %v3994 = vunpack.c.l.b16 %v3560
    %v3995 = vunpack.c.h.b16 %v3560
    %v3996 = vunpack.c.l.b16 %v3561
    %v3997 = vunpack.c.h.b16 %v3561
    %v3998 = vunpack.c.l.b16 %v3562
    %v3999 = vunpack.c.h.b16 %v3562
    %v4000 = vunpack.c.l.b16 %v3563
    %v4001 = vunpack.c.h.b16 %v3563
    %v4002 = vunpack.c.l.b16 %v3564
    %v4003 = vunpack.c.h.b16 %v3564
    %v4004 = vunpack.c.l.b16 %v3565
    %v4005 = vunpack.c.h.b16 %v3565
    %v4006 = vunpack.c.l.b16 %v3566
    %v4007 = vunpack.c.h.b16 %v3566
    %v4008 = vunpack.c.l.b16 %v3567
    %v4009 = vunpack.c.h.b16 %v3567
    %v4010 = vunpack.c.l.b16 %v3568
    %v4011 = vunpack.c.h.b16 %v3568
    %v4012 = vunpack.c.l.b16 %v3569
    %v4013 = vunpack.c.h.b16 %v3569
    %v4014 = vunpack.c.l.b16 %v3570
    %v4015 = vunpack.c.h.b16 %v3570
    %v4016 = vunpack.c.l.b16 %v3571
    %v4017 = vunpack.c.h.b16 %v3571
    %v4018 = vunpack.c.l.b16 %v3572
    %v4019 = vunpack.c.h.b16 %v3572
    %v4020 = vunpack.c.l.b16 %v3573
    %v4021 = vunpack.c.h.b16 %v3573
    %v4022 = vunpack.c.l.b16 %v3574
    %v4023 = vunpack.c.h.b16 %v3574
    %v4024 = vunpack.c.l.b16 %v3575
    %v4025 = vunpack.c.h.b16 %v3575
    %v4026 = vunpack.c.l.b16 %v3576
    %v4027 = vunpack.c.h.b16 %v3576
    %v4028 = vunpack.c.l.b16 %v3577
    %v4029 = vunpack.c.h.b16 %v3577
    %v4030 = vunpack.c.l.b16 %v3578
    %v4031 = vunpack.c.h.b16 %v3578
    %v4032 = vunpack.c.l.b16 %v3579
    %v4033 = vunpack.c.h.b16 %v3579
    %v4034 = vunpack.c.l.b16 %v3580
    %v4035 = vunpack.c.h.b16 %v3580
    %v4036 = vunpack.c.l.b16 %v3581
    %v4037 = vunpack.c.h.b16 %v3581
    %v4038 = vunpack.c.l.b16 %v3582
    %v4039 = vunpack.c.h.b16 %v3582
    %v4040 = vunpack.c.l.b16 %v3583
    %v4041 = vunpack.c.h.b16 %v3583
    %v4042 = vunpack.c.l.b16 %v3584
    %v4043 = vunpack.c.h.b16 %v3584
    %v4044 = vunpack.c.l.b16 %v3585
    %v4045 = vunpack.c.h.b16 %v3585
    %v4046 = vunpack.c.l.b16 %v3586
    %v4047 = vunpack.c.h.b16 %v3586
    %v4048 = vunpack.c.l.b16 %v3587
    %v4049 = vunpack.c.h.b16 %v3587
    %v4050 = vunpack.c.l.b16 %v3588
    %v4051 = vunpack.c.h.b16 %v3588
    %v4052 = vunpack.c.l.b16 %v3589
    %v4053 = vunpack.c.h.b16 %v3589
    %v4054 = vunpack.c.l.b16 %v3590
    %v4055 = vunpack.c.h.b16 %v3590
    %v4056 = vunpack.c.l.b16 %v3591
    %v4057 = vunpack.c.h.b16 %v3591
    %v4058 = vunpack.c.l.b16 %v3592
    %v4059 = vunpack.c.h.b16 %v3592
    %v4060 = vunpack.c.l.b16 %v3593
    %v4061 = vunpack.c.h.b16 %v3593
    %v4062 = vunpack.c.l.b16 %v3594
    %v4063 = vunpack.c.h.b16 %v3594
    %v4064 = vunpack.c.l.b16 %v3595
    %v4065 = vunpack.c.h.b16 %v3595
    %v4066 = vunpack.c.l.b16 %v3596
    %v4067 = vunpack.c.h.b16 %v3596
    %v4068 = vunpack.c.l.b16 %v3597
    %v4069 = vunpack.c.h.b16 %v3597
    %v4070 = vunpack.c.l.b16 %v3598
    %v4071 = vunpack.c.h.b16 %v3598
    %v4072 = vunpack.c.l.b16 %v3599
    %v4073 = vunpack.c.h.b16 %v3599
    %v4074 = vunpack.c.l.b16 %v3600
    %v4075 = vunpack.c.h.b16 %v3600
    %v4076 = vunpack.c.l.b16 %v3601
    %v4077 = vunpack.c.h.b16 %v3601
    %v4078 = vunpack.c.l.b16 %v3602
    %v4079 = vunpack.c.h.b16 %v3602
    %v4080 = vunpack.c.l.b16 %v3603
    %v4081 = vunpack.c.h.b16 %v3603
    %v4082 = vunpack.c.l.b16 %v3604
    %v4083 = vunpack.c.h.b16 %v3604
    %v4084 = vunpack.c.l.b16 %v3605
    %v4085 = vunpack.c.h.b16 %v3605
    %v4086 = vunpack.c.l.b16 %v3606
    %v4087 = vunpack.c.h.b16 %v3606
    %v4088 = vunpack.c.l.b16 %v3607
    %v4089 = vunpack.c.h.b16 %v3607
    %v4090 = vunpack.c.l.b16 %v3608
    %v4091 = vunpack.c.h.b16 %v3608
    %v4092 = vunpack.c.l.b16 %v3609
    %v4093 = vunpack.c.h.b16 %v3609
    %v4094 = vunpack.c.l.b16 %v3610
    %v4095 = vunpack.c.h.b16 %v3610
    %v4096 = vunpack.c.l.b16 %v3611
    %v4097 = vunpack.c.h.b16 %v3611
    %v4098 = vunpack.c.l.b16 %v3612
    %v4099 = vunpack.c.h.b16 %v3612
    %v4100 = vunpack.c.l.b16 %v3613
    %v4101 = vunpack.c.h.b16 %v3613
    %v4102 = vunpack.c.l.b16 %v3614
    %v4103 = vunpack.c.h.b16 %v3614
    %v4104 = vunpack.c.l.b16 %v3615
    %v4105 = vunpack.c.h.b16 %v3615
    %v4106 = vunpack.c.l.b16 %v3616
    %v4107 = vunpack.c.h.b16 %v3616
    %v4108 = vunpack.c.l.b16 %v3617
    %v4109 = vunpack.c.h.b16 %v3617
    %v4110 = vunpack.c.l.b16 %v3618
    %v4111 = vunpack.c.h.b16 %v3618
    %v4112 = vunpack.c.l.b16 %v3619
    %v4113 = vunpack.c.h.b16 %v3619
    %v4114 = vunpack.c.l.b16 %v3620
    %v4115 = vunpack.c.h.b16 %v3620
    %v4116 = vunpack.c.l.b16 %v3621
    %v4117 = vunpack.c.h.b16 %v3621
    %v4118 = vunpack.c.l.b16 %v3622
    %v4119 = vunpack.c.h.b16 %v3622
    %v4120 = vunpack.c.l.b16 %v3623
    %v4121 = vunpack.c.h.b16 %v3623
    %v4122 = vunpack.c.l.b16 %v3624
    %v4123 = vunpack.c.h.b16 %v3624
    %v4124 = vunpack.c.l.b16 %v3625
    %v4125 = vunpack.c.h.b16 %v3625
    %v4126 = vunpack.c.l.b16 %v3626
    %v4127 = vunpack.c.h.b16 %v3626
    %v4128 = vunpack.c.l.b16 %v3627
    %v4129 = vunpack.c.h.b16 %v3627
    %v4130 = vunpack.c.l.b16 %v3628
    %v4131 = vunpack.c.h.b16 %v3628
    %v4132 = vunpack.c.l.b16 %v3629
    %v4133 = vunpack.c.h.b16 %v3629
    %v4134 = vunpack.c.l.b16 %v3630
    %v4135 = vunpack.c.h.b16 %v3630
    %v4136 = vunpack.c.l.b16 %v3631
    %v4137 = vunpack.c.h.b16 %v3631
    %v4138 = vunpack.c.l.b16 %v3632
    %v4139 = vunpack.c.h.b16 %v3632
    %v4140 = vunpack.c.l.b16 %v3633
    %v4141 = vunpack.c.h.b16 %v3633
    %v4142 = vunpack.c.l.b16 %v3634
    %v4143 = vunpack.c.h.b16 %v3634
    %v4144 = vunpack.c.l.b16 %v3635
    %v4145 = vunpack.c.h.b16 %v3635
    %v4146 = vunpack.c.l.b16 %v3636
    %v4147 = vunpack.c.h.b16 %v3636
    %v4148 = vunpack.c.l.b16 %v3637
    %v4149 = vunpack.c.h.b16 %v3637
    %v4150 = vpack.c.b16 %v3992, %v3990
    %v4151 = vpack.c.b16 %v3993, %v3991
    %v4152 = vpack.c.b16 %v3996, %v3994
    %v4153 = vpack.c.b16 %v3997, %v3995
    %v4154 = vpack.c.b16 %v4000, %v3998
    %v4155 = vpack.c.b16 %v4001, %v3999
    %v4156 = vpack.c.b16 %v4004, %v4002
    %v4157 = vpack.c.b16 %v4005, %v4003
    %v4158 = vpack.c.b16 %v4008, %v4006
    %v4159 = vpack.c.b16 %v4009, %v4007
    %v4160 = vpack.c.b16 %v4012, %v4010
    %v4161 = vpack.c.b16 %v4013, %v4011
    %v4162 = vpack.c.b16 %v4016, %v4014
    %v4163 = vpack.c.b16 %v4017, %v4015
    %v4164 = vpack.c.b16 %v4020, %v4018
    %v4165 = vpack.c.b16 %v4021, %v4019
    %v4166 = vpack.c.b16 %v4024, %v4022
    %v4167 = vpack.c.b16 %v4025, %v4023
    %v4168 = vpack.c.b16 %v4028, %v4026
    %v4169 = vpack.c.b16 %v4029, %v4027
    %v4170 = vpack.c.b16 %v4032, %v4030
    %v4171 = vpack.c.b16 %v4033, %v4031
    %v4172 = vpack.c.b16 %v4036, %v4034
    %v4173 = vpack.c.b16 %v4037, %v4035
    %v4174 = vpack.c.b16 %v4040, %v4038
    %v4175 = vpack.c.b16 %v4041, %v4039
    %v4176 = vpack.c.b16 %v4044, %v4042
    %v4177 = vpack.c.b16 %v4045, %v4043
    %v4178 = vpack.c.b16 %v4048, %v4046
    %v4179 = vpack.c.b16 %v4049, %v4047
    %v4180 = vpack.c.b16 %v4052, %v4050
    %v4181 = vpack.c.b16 %v4053, %v4051
    %v4182 = vpack.c.b16 %v4056, %v4054
    %v4183 = vpack.c.b16 %v4057, %v4055
    %v4184 = vpack.c.b16 %v4060, %v4058
    %v4185 = vpack.c.b16 %v4061, %v4059
    %v4186 = vpack.c.b16 %v4064, %v4062
    %v4187 = vpack.c.b16 %v4065, %v4063
    %v4188 = vpack.c.b16 %v4068, %v4066
    %v4189 = vpack.c.b16 %v4069, %v4067
    %v4190 = vpack.c.b16 %v4072, %v4070
    %v4191 = vpack.c.b16 %v4073, %v4071
    %v4192 = vpack.c.b16 %v4076, %v4074
    %v4193 = vpack.c.b16 %v4077, %v4075
    %v4194 = vpack.c.b16 %v4080, %v4078
    %v4195 = vpack.c.b16 %v4081, %v4079
    %v4196 = vpack.c.b16 %v4084, %v4082
    %v4197 = vpack.c.b16 %v4085, %v4083
    %v4198 = vpack.c.b16 %v4088, %v4086
    %v4199 = vpack.c.b16 %v4089, %v4087
    %v4200 = vpack.c.b16 %v4092, %v4090
    %v4201 = vpack.c.b16 %v4093, %v4091
    %v4202 = vpack.c.b16 %v4096, %v4094
    %v4203 = vpack.c.b16 %v4097, %v4095
    %v4204 = vpack.c.b16 %v4100, %v4098
    %v4205 = vpack.c.b16 %v4101, %v4099
    %v4206 = vpack.c.b16 %v4104, %v4102
    %v4207 = vpack.c.b16 %v4105, %v4103
    %v4208 = vpack.c.b16 %v4108, %v4106
    %v4209 = vpack.c.b16 %v4109, %v4107
    %v4210 = vpack.c.b16 %v4112, %v4110
    %v4211 = vpack.c.b16 %v4113, %v4111
    %v4212 = vpack.c.b16 %v4116, %v4114
    %v4213 = vpack.c.b16 %v4117, %v4115
    %v4214 = vpack.c.b16 %v4120, %v4118
    %v4215 = vpack.c.b16 %v4121, %v4119
    %v4216 = vpack.c.b16 %v4124, %v4122
    %v4217 = vpack.c.b16 %v4125, %v4123
    %v4218 = vpack.c.b16 %v4128, %v4126
    %v4219 = vpack.c.b16 %v4129, %v4127
    %v4220 = vpack.c.b16 %v4132, %v4130
    %v4221 = vpack.c.b16 %v4133, %v4131
    %v4222 = vpack.c.b16 %v4136, %v4134
    %v4223 = vpack.c.b16 %v4137, %v4135
    %v4224 = vpack.c.b16 %v4140, %v4138
    %v4225 = vpack.c.b16 %v4141, %v4139
    %v4226 = vpack.c.b16 %v4144, %v4142
    %v4227 = vpack.c.b16 %v4145, %v4143
    %v4228 = vpack.c.b16 %v4148, %v4146
    %v4229 = vpack.c.b16 %v4149, %v4147
    %4310 = vmatprep.subr.bf16.mxu0 %v4165
    %4311 = vmatpush1.bf16.msra.mxu0 %v4164
    %4312 = vmatprep.subr.bf16.mxu0 %v4163
    %4313 = vmatpush1.bf16.msra.mxu0 %v4162
    %4314 = vmatprep.subr.bf16.mxu0 %v4161
    %4315 = vmatpush1.bf16.msra.mxu0 %v4160
    %4316 = vmatprep.subr.bf16.mxu0 %v4159
    %4317 = vmatpush1.bf16.msra.mxu0 %v4158
    %4318 = vmatprep.subr.bf16.mxu0 %v4157
    %4319 = vmatpush1.bf16.msra.mxu0 %v4156
    %4320 = vmatprep.subr.bf16.mxu0 %v4155
    %4321 = vmatpush1.bf16.msra.mxu0 %v4154
    %4322 = vmatprep.subr.bf16.mxu0 %v4153
    %4323 = vmatpush1.bf16.msra.mxu0 %v4152
    %4324 = vmatprep.subr.bf16.mxu0 %v4151
    %4325 = vmatpush1.bf16.msra.mxu0 %v4150
    %4326 = vmatprep.subr.bf16.mxu0 %v4181
    %4327 = vmatpush2.bf16.msra.mxu0 %v4180
    %4328 = vmatprep.subr.bf16.mxu0 %v4179
    %4329 = vmatpush2.bf16.msra.mxu0 %v4178
    %4330 = vmatprep.subr.bf16.mxu0 %v4177
    %4331 = vmatpush2.bf16.msra.mxu0 %v4176
    %4332 = vmatprep.subr.bf16.mxu0 %v4175
    %4333 = vmatpush2.bf16.msra.mxu0 %v4174
    %4334 = vmatprep.subr.bf16.mxu0 %v4173
    %4335 = vmatpush2.bf16.msra.mxu0 %v4172
    %4336 = vmatprep.subr.bf16.mxu0 %v4171
    %4337 = vmatpush2.bf16.msra.mxu0 %v4170
    %4338 = vmatprep.subr.bf16.mxu0 %v4169
    %4339 = vmatpush2.bf16.msra.mxu0 %v4168
    %4340 = vmatprep.subr.bf16.mxu0 %v4167
    %4341 = vmatpush2.bf16.msra.mxu0 %v4166
    %4342 = vmatprep.mubr.bf16.mxu0 %v3811
    %4343 = vmatmul.mubr.bf16.gmra.mxu0 %v3810
    %v4344 = vpop.f32.mrf.mxu0
    %v4345 = vadd.f32 %v3643, %v4344
    %v4346 = vpop.f32.mrf.mxu0
    %v4347 = vadd.f32 %v3647, %v4346
    %v4348 = vpop.f32.mrf.mxu0
    %v4349 = vadd.f32 %v3643, %v4348
    %v4350 = vpop.f32.mrf.mxu0
    %v4351 = vadd.f32 %v3647, %v4350
    %4352 = vmatprep.mubr.bf16.mxu0 %v3816
    %4353 = vmatmul.mubr.bf16.gmra.mxu0 %v3815
    %v4354 = vpop.f32.mrf.mxu0
    %v4355 = vadd.f32 %v3643, %v4354
    %v4356 = vpop.f32.mrf.mxu0
    %v4357 = vadd.f32 %v3647, %v4356
    %v4358 = vpop.f32.mrf.mxu0
    %v4359 = vadd.f32 %v3643, %v4358
    %v4360 = vpop.f32.mrf.mxu0
    %v4361 = vadd.f32 %v3647, %v4360
    %4362 = vmatprep.mubr.bf16.mxu0 %v3821
    %4363 = vmatmul.mubr.bf16.gmra.mxu0 %v3820
    %v4364 = vpop.f32.mrf.mxu0
    %v4365 = vadd.f32 %v3643, %v4364
    %v4366 = vpop.f32.mrf.mxu0
    %v4367 = vadd.f32 %v3647, %v4366
    %v4368 = vpop.f32.mrf.mxu0
    %v4369 = vadd.f32 %v3643, %v4368
    %v4370 = vpop.f32.mrf.mxu0
    %v4371 = vadd.f32 %v3647, %v4370
    %4372 = vmatprep.mubr.bf16.mxu0 %v3826
    %4373 = vmatmul.mubr.bf16.gmra.mxu0 %v3825
    %v4374 = vpop.f32.mrf.mxu0
    %v4375 = vadd.f32 %v3643, %v4374
    %v4376 = vpop.f32.mrf.mxu0
    %v4377 = vadd.f32 %v3647, %v4376
    %v4378 = vpop.f32.mrf.mxu0
    %v4379 = vadd.f32 %v3643, %v4378
    %v4380 = vpop.f32.mrf.mxu0
    %v4381 = vadd.f32 %v3647, %v4380
    %4382 = vmatprep.mubr.bf16.mxu0 %v3831
    %4383 = vmatmul.mubr.bf16.gmra.mxu0 %v3830
    %v4384 = vpop.f32.mrf.mxu0
    %v4385 = vadd.f32 %v3643, %v4384
    %v4386 = vpop.f32.mrf.mxu0
    %v4387 = vadd.f32 %v3647, %v4386
    %v4388 = vpop.f32.mrf.mxu0
    %v4389 = vadd.f32 %v3643, %v4388
    %v4390 = vpop.f32.mrf.mxu0
    %v4391 = vadd.f32 %v3647, %v4390
    %4392 = vmatprep.mubr.bf16.mxu0 %v3836
    %4393 = vmatmul.mubr.bf16.gmra.mxu0 %v3835
    %v4394 = vpop.f32.mrf.mxu0
    %v4395 = vadd.f32 %v3643, %v4394
    %v4396 = vpop.f32.mrf.mxu0
    %v4397 = vadd.f32 %v3647, %v4396
    %v4398 = vpop.f32.mrf.mxu0
    %v4399 = vadd.f32 %v3643, %v4398
    %v4400 = vpop.f32.mrf.mxu0
    %v4401 = vadd.f32 %v3647, %v4400
    %4402 = vmatprep.mubr.bf16.mxu0 %v3841
    %4403 = vmatmul.mubr.bf16.gmra.mxu0 %v3840
    %v4404 = vpop.f32.mrf.mxu0
    %v4405 = vadd.f32 %v3643, %v4404
    %v4406 = vpop.f32.mrf.mxu0
    %v4407 = vadd.f32 %v3647, %v4406
    %v4408 = vpop.f32.mrf.mxu0
    %v4409 = vadd.f32 %v3643, %v4408
    %v4410 = vpop.f32.mrf.mxu0
    %v4411 = vadd.f32 %v3647, %v4410
    %4412 = vmatprep.mubr.bf16.mxu0 %v3846
    %4413 = vmatmul.mubr.bf16.gmra.mxu0 %v3845
    %v4414 = vpop.f32.mrf.mxu0
    %v4415 = vadd.f32 %v3643, %v4414
    %v4416 = vpop.f32.mrf.mxu0
    %v4417 = vadd.f32 %v3647, %v4416
    %v4418 = vpop.f32.mrf.mxu0
    %v4419 = vadd.f32 %v3643, %v4418
    %v4420 = vpop.f32.mrf.mxu0
    %v4421 = vadd.f32 %v3647, %v4420
    %4422 = vmatprep.mubr.bf16.mxu0 %v3851
    %4423 = vmatmul.mubr.bf16.gmra.mxu0 %v3850
    %v4424 = vpop.f32.mrf.mxu0
    %v4425 = vadd.f32 %v3643, %v4424
    %v4426 = vpop.f32.mrf.mxu0
    %v4427 = vadd.f32 %v3647, %v4426
    %v4428 = vpop.f32.mrf.mxu0
    %v4429 = vadd.f32 %v3643, %v4428
    %v4430 = vpop.f32.mrf.mxu0
    %v4431 = vadd.f32 %v3647, %v4430
    %4432 = vmatprep.mubr.bf16.mxu0 %v3856
    %4433 = vmatmul.mubr.bf16.gmra.mxu0 %v3855
    %v4434 = vpop.f32.mrf.mxu0
    %v4435 = vadd.f32 %v3643, %v4434
    %v4436 = vpop.f32.mrf.mxu0
    %v4437 = vadd.f32 %v3647, %v4436
    %v4438 = vpop.f32.mrf.mxu0
    %v4439 = vadd.f32 %v3643, %v4438
    %v4440 = vpop.f32.mrf.mxu0
    %v4441 = vadd.f32 %v3647, %v4440
    %4442 = vdwg.mxu0
    %4443 = vmatprep.subr.bf16.mxu0 %v4197
    %4444 = vmatpush1.bf16.msra.mxu0 %v4196
    %4445 = vmatprep.subr.bf16.mxu0 %v4195
    %4446 = vmatpush1.bf16.msra.mxu0 %v4194
    %4447 = vmatprep.subr.bf16.mxu0 %v4193
    %4448 = vmatpush1.bf16.msra.mxu0 %v4192
    %4449 = vmatprep.subr.bf16.mxu0 %v4191
    %4450 = vmatpush1.bf16.msra.mxu0 %v4190
    %4451 = vmatprep.subr.bf16.mxu0 %v4189
    %4452 = vmatpush1.bf16.msra.mxu0 %v4188
    %4453 = vmatprep.subr.bf16.mxu0 %v4187
    %4454 = vmatpush1.bf16.msra.mxu0 %v4186
    %4455 = vmatprep.subr.bf16.mxu0 %v4185
    %4456 = vmatpush1.bf16.msra.mxu0 %v4184
    %4457 = vmatprep.subr.bf16.mxu0 %v4183
    %4458 = vmatpush1.bf16.msra.mxu0 %v4182
    %4459 = vmatprep.subr.bf16.mxu0 %v4213
    %4460 = vmatpush2.bf16.msra.mxu0 %v4212
    %4461 = vmatprep.subr.bf16.mxu0 %v4211
    %4462 = vmatpush2.bf16.msra.mxu0 %v4210
    %4463 = vmatprep.subr.bf16.mxu0 %v4209
    %4464 = vmatpush2.bf16.msra.mxu0 %v4208
    %4465 = vmatprep.subr.bf16.mxu0 %v4207
    %4466 = vmatpush2.bf16.msra.mxu0 %v4206
    %4467 = vmatprep.subr.bf16.mxu0 %v4205
    %4468 = vmatpush2.bf16.msra.mxu0 %v4204
    %4469 = vmatprep.subr.bf16.mxu0 %v4203
    %4470 = vmatpush2.bf16.msra.mxu0 %v4202
    %4471 = vmatprep.subr.bf16.mxu0 %v4201
    %4472 = vmatpush2.bf16.msra.mxu0 %v4200
    %4473 = vmatprep.subr.bf16.mxu0 %v4199
    %4474 = vmatpush2.bf16.msra.mxu0 %v4198
    %4475 = vmatprep.mubr.bf16.mxu0 %v3813
    %4476 = vmatmul.mubr.bf16.gmra.mxu0 %v3812
    %v4477 = vpop.f32.mrf.mxu0
    %v4478 = vadd.f32 %v4345, %v4477
    %v4479 = vpop.f32.mrf.mxu0
    %v4480 = vadd.f32 %v4347, %v4479
    %v4481 = vpop.f32.mrf.mxu0
    %v4482 = vadd.f32 %v4349, %v4481
    %v4483 = vpop.f32.mrf.mxu0
    %v4484 = vadd.f32 %v4351, %v4483
    %4485 = vmatprep.mubr.bf16.mxu0 %v3818
    %4486 = vmatmul.mubr.bf16.gmra.mxu0 %v3817
    %v4487 = vpop.f32.mrf.mxu0
    %v4488 = vadd.f32 %v4355, %v4487
    %v4489 = vpop.f32.mrf.mxu0
    %v4490 = vadd.f32 %v4357, %v4489
    %v4491 = vpop.f32.mrf.mxu0
    %v4492 = vadd.f32 %v4359, %v4491
    %v4493 = vpop.f32.mrf.mxu0
    %v4494 = vadd.f32 %v4361, %v4493
    %4495 = vmatprep.mubr.bf16.mxu0 %v3823
    %4496 = vmatmul.mubr.bf16.gmra.mxu0 %v3822
    %v4497 = vpop.f32.mrf.mxu0
    %v4498 = vadd.f32 %v4365, %v4497
    %v4499 = vpop.f32.mrf.mxu0
    %v4500 = vadd.f32 %v4367, %v4499
    %v4501 = vpop.f32.mrf.mxu0
    %v4502 = vadd.f32 %v4369, %v4501
    %v4503 = vpop.f32.mrf.mxu0
    %v4504 = vadd.f32 %v4371, %v4503
    %4505 = vmatprep.mubr.bf16.mxu0 %v3828
    %4506 = vmatmul.mubr.bf16.gmra.mxu0 %v3827
    %v4507 = vpop.f32.mrf.mxu0
    %v4508 = vadd.f32 %v4375, %v4507
    %v4509 = vpop.f32.mrf.mxu0
    %v4510 = vadd.f32 %v4377, %v4509
    %v4511 = vpop.f32.mrf.mxu0
    %v4512 = vadd.f32 %v4379, %v4511
    %v4513 = vpop.f32.mrf.mxu0
    %v4514 = vadd.f32 %v4381, %v4513
    %4515 = vmatprep.mubr.bf16.mxu0 %v3833
    %4516 = vmatmul.mubr.bf16.gmra.mxu0 %v3832
    %v4517 = vpop.f32.mrf.mxu0
    %v4518 = vadd.f32 %v4385, %v4517
    %v4519 = vpop.f32.mrf.mxu0
    %v4520 = vadd.f32 %v4387, %v4519
    %v4521 = vpop.f32.mrf.mxu0
    %v4522 = vadd.f32 %v4389, %v4521
    %v4523 = vpop.f32.mrf.mxu0
    %v4524 = vadd.f32 %v4391, %v4523
    %4525 = vmatprep.mubr.bf16.mxu0 %v3838
    %4526 = vmatmul.mubr.bf16.gmra.mxu0 %v3837
    %v4527 = vpop.f32.mrf.mxu0
    %v4528 = vadd.f32 %v4395, %v4527
    %v4529 = vpop.f32.mrf.mxu0
    %v4530 = vadd.f32 %v4397, %v4529
    %v4531 = vpop.f32.mrf.mxu0
    %v4532 = vadd.f32 %v4399, %v4531
    %v4533 = vpop.f32.mrf.mxu0
    %v4534 = vadd.f32 %v4401, %v4533
    %4535 = vmatprep.mubr.bf16.mxu0 %v3843
    %4536 = vmatmul.mubr.bf16.gmra.mxu0 %v3842
    %v4537 = vpop.f32.mrf.mxu0
    %v4538 = vadd.f32 %v4405, %v4537
    %v4539 = vpop.f32.mrf.mxu0
    %v4540 = vadd.f32 %v4407, %v4539
    %v4541 = vpop.f32.mrf.mxu0
    %v4542 = vadd.f32 %v4409, %v4541
    %v4543 = vpop.f32.mrf.mxu0
    %v4544 = vadd.f32 %v4411, %v4543
    %4545 = vmatprep.mubr.bf16.mxu0 %v3848
    %4546 = vmatmul.mubr.bf16.gmra.mxu0 %v3847
    %v4547 = vpop.f32.mrf.mxu0
    %v4548 = vadd.f32 %v4415, %v4547
    %v4549 = vpop.f32.mrf.mxu0
    %v4550 = vadd.f32 %v4417, %v4549
    %v4551 = vpop.f32.mrf.mxu0
    %v4552 = vadd.f32 %v4419, %v4551
    %v4553 = vpop.f32.mrf.mxu0
    %v4554 = vadd.f32 %v4421, %v4553
    %4555 = vmatprep.mubr.bf16.mxu0 %v3853
    %4556 = vmatmul.mubr.bf16.gmra.mxu0 %v3852
    %v4557 = vpop.f32.mrf.mxu0
    %v4558 = vadd.f32 %v4425, %v4557
    %v4559 = vpop.f32.mrf.mxu0
    %v4560 = vadd.f32 %v4427, %v4559
    %v4561 = vpop.f32.mrf.mxu0
    %v4562 = vadd.f32 %v4429, %v4561
    %v4563 = vpop.f32.mrf.mxu0
    %v4564 = vadd.f32 %v4431, %v4563
    %4565 = vmatprep.mubr.bf16.mxu0 %v3858
    %4566 = vmatmul.mubr.bf16.gmra.mxu0 %v3857
    %v4567 = vpop.f32.mrf.mxu0
    %v4568 = vadd.f32 %v4435, %v4567
    %v4569 = vpop.f32.mrf.mxu0
    %v4570 = vadd.f32 %v4437, %v4569
    %v4571 = vpop.f32.mrf.mxu0
    %v4572 = vadd.f32 %v4439, %v4571
    %v4573 = vpop.f32.mrf.mxu0
    %v4574 = vadd.f32 %v4441, %v4573
    %4575 = vdwg.mxu0
    %4576 = vmatprep.subr.bf16.mxu0 %v4229
    %4577 = vmatpush1.bf16.msra.mxu0 %v4228
    %4578 = vmatprep.subr.bf16.mxu0 %v4227
    %4579 = vmatpush1.bf16.msra.mxu0 %v4226
    %4580 = vmatprep.subr.bf16.mxu0 %v4225
    %4581 = vmatpush1.bf16.msra.mxu0 %v4224
    %4582 = vmatprep.subr.bf16.mxu0 %v4223
    %4583 = vmatpush1.bf16.msra.mxu0 %v4222
    %4584 = vmatprep.subr.bf16.mxu0 %v4221
    %4585 = vmatpush1.bf16.msra.mxu0 %v4220
    %4586 = vmatprep.subr.bf16.mxu0 %v4219
    %4587 = vmatpush1.bf16.msra.mxu0 %v4218
    %4588 = vmatprep.subr.bf16.mxu0 %v4217
    %4589 = vmatpush1.bf16.msra.mxu0 %v4216
    %4590 = vmatprep.subr.bf16.mxu0 %v4215
    %4591 = vmatpush1.bf16.msra.mxu0 %v4214
    %4592 = vmatprep.subr.bf16.mxu0 0
    %4593 = vmatpush2.bf16.msra.mxu0 0
    %4594 = vmatprep.subr.bf16.mxu0 0
    %4595 = vmatpush2.bf16.msra.mxu0 0
    %4596 = vmatprep.subr.bf16.mxu0 0
    %4597 = vmatpush2.bf16.msra.mxu0 0
    %4598 = vmatprep.subr.bf16.mxu0 0
    %4599 = vmatpush2.bf16.msra.mxu0 0
    %4600 = vmatprep.subr.bf16.mxu0 0
    %4601 = vmatpush2.bf16.msra.mxu0 0
    %4602 = vmatprep.subr.bf16.mxu0 0
    %4603 = vmatpush2.bf16.msra.mxu0 0
    %4604 = vmatprep.subr.bf16.mxu0 0
    %4605 = vmatpush2.bf16.msra.mxu0 0
    %4606 = vmatprep.subr.bf16.mxu0 0
    %4607 = vmatpush2.bf16.msra.mxu0 0
    %4608 = vmatprep.mubr.bf16.mxu0 0
    %4609 = vmatmul.mubr.bf16.gmra.mxu0 %v3814
    %v4610 = vpop.f32.mrf.mxu0
    %v4611 = vadd.f32 %v4478, %v4610
    %v4612 = vpop.f32.mrf.mxu0
    %v4613 = vadd.f32 %v4480, %v4612
    %v4614 = vpop.f32.mrf.mxu0
    %v4615 = vadd.f32 %v4482, %v4614
    %v4616 = vpop.f32.mrf.mxu0
    %v4617 = vadd.f32 %v4484, %v4616
    %4618 = vmatprep.mubr.bf16.mxu0 0
    %4619 = vmatmul.mubr.bf16.gmra.mxu0 %v3819
    %v4620 = vpop.f32.mrf.mxu0
    %v4621 = vadd.f32 %v4488, %v4620
    %v4622 = vpop.f32.mrf.mxu0
    %v4623 = vadd.f32 %v4490, %v4622
    %v4624 = vpop.f32.mrf.mxu0
    %v4625 = vadd.f32 %v4492, %v4624
    %v4626 = vpop.f32.mrf.mxu0
    %v4627 = vadd.f32 %v4494, %v4626
    %4628 = vmatprep.mubr.bf16.mxu0 0
    %4629 = vmatmul.mubr.bf16.gmra.mxu0 %v3824
    %v4630 = vpop.f32.mrf.mxu0
    %v4631 = vadd.f32 %v4498, %v4630
    %v4632 = vpop.f32.mrf.mxu0
    %v4633 = vadd.f32 %v4500, %v4632
    %v4634 = vpop.f32.mrf.mxu0
    %v4635 = vadd.f32 %v4502, %v4634
    %v4636 = vpop.f32.mrf.mxu0
    %v4637 = vadd.f32 %v4504, %v4636
    %4638 = vmatprep.mubr.bf16.mxu0 0
    %4639 = vmatmul.mubr.bf16.gmra.mxu0 %v3829
    %v4640 = vpop.f32.mrf.mxu0
    %v4641 = vadd.f32 %v4508, %v4640
    %v4642 = vpop.f32.mrf.mxu0
    %v4643 = vadd.f32 %v4510, %v4642
    %v4644 = vpop.f32.mrf.mxu0
    %v4645 = vadd.f32 %v4512, %v4644
    %v4646 = vpop.f32.mrf.mxu0
    %v4647 = vadd.f32 %v4514, %v4646
    %4648 = vmatprep.mubr.bf16.mxu0 0
    %4649 = vmatmul.mubr.bf16.gmra.mxu0 %v3834
    %v4650 = vpop.f32.mrf.mxu0
    %v4651 = vadd.f32 %v4518, %v4650
    %v4652 = vpop.f32.mrf.mxu0
    %v4653 = vadd.f32 %v4520, %v4652
    %v4654 = vpop.f32.mrf.mxu0
    %v4655 = vadd.f32 %v4522, %v4654
    %v4656 = vpop.f32.mrf.mxu0
    %v4657 = vadd.f32 %v4524, %v4656
    %4658 = vmatprep.mubr.bf16.mxu0 0
    %4659 = vmatmul.mubr.bf16.gmra.mxu0 %v3839
    %v4660 = vpop.f32.mrf.mxu0
    %v4661 = vadd.f32 %v4528, %v4660
    %v4662 = vpop.f32.mrf.mxu0
    %v4663 = vadd.f32 %v4530, %v4662
    %v4664 = vpop.f32.mrf.mxu0
    %v4665 = vadd.f32 %v4532, %v4664
    %v4666 = vpop.f32.mrf.mxu0
    %v4667 = vadd.f32 %v4534, %v4666
    %4668 = vmatprep.mubr.bf16.mxu0 0
    %4669 = vmatmul.mubr.bf16.gmra.mxu0 %v3844
    %v4670 = vpop.f32.mrf.mxu0
    %v4671 = vadd.f32 %v4538, %v4670
    %v4672 = vpop.f32.mrf.mxu0
    %v4673 = vadd.f32 %v4540, %v4672
    %v4674 = vpop.f32.mrf.mxu0
    %v4675 = vadd.f32 %v4542, %v4674
    %v4676 = vpop.f32.mrf.mxu0
    %v4677 = vadd.f32 %v4544, %v4676
    %4678 = vmatprep.mubr.bf16.mxu0 0
    %4679 = vmatmul.mubr.bf16.gmra.mxu0 %v3849
    %v4680 = vpop.f32.mrf.mxu0
    %v4681 = vadd.f32 %v4548, %v4680
    %v4682 = vpop.f32.mrf.mxu0
    %v4683 = vadd.f32 %v4550, %v4682
    %v4684 = vpop.f32.mrf.mxu0
    %v4685 = vadd.f32 %v4552, %v4684
    %v4686 = vpop.f32.mrf.mxu0
    %v4687 = vadd.f32 %v4554, %v4686
    %4688 = vmatprep.mubr.bf16.mxu0 0
    %4689 = vmatmul.mubr.bf16.gmra.mxu0 %v3854
    %v4690 = vpop.f32.mrf.mxu0
    %v4691 = vadd.f32 %v4558, %v4690
    %v4692 = vpop.f32.mrf.mxu0
    %v4693 = vadd.f32 %v4560, %v4692
    %v4694 = vpop.f32.mrf.mxu0
    %v4695 = vadd.f32 %v4562, %v4694
    %v4696 = vpop.f32.mrf.mxu0
    %v4697 = vadd.f32 %v4564, %v4696
    %4698 = vmatprep.mubr.bf16.mxu0 0
    %4699 = vmatmul.mubr.bf16.gmra.mxu0 %v3859
    %v4700 = vpop.f32.mrf.mxu0
    %v4701 = vadd.f32 %v4568, %v4700
    %v4702 = vpop.f32.mrf.mxu0
    %v4703 = vadd.f32 %v4570, %v4702
    %v4704 = vpop.f32.mrf.mxu0
    %v4705 = vadd.f32 %v4572, %v4704
    %v4706 = vpop.f32.mrf.mxu0
    %v4707 = vadd.f32 %v4574, %v4706
    %4708 = vdwg.mxu0
    %v4709 = vmax.f32 %v4611, 0.0
    %v4710 = vmax.f32 %v4613, 0.0
    %v4711 = vmax.f32 %v4615, 0.0
    %v4712 = vmax.f32 %v4617, 0.0
    %v4713 = vmax.f32 %v4621, 0.0
    %v4714 = vmax.f32 %v4623, 0.0
    %v4715 = vmax.f32 %v4625, 0.0
    %v4716 = vmax.f32 %v4627, 0.0
    %v4717 = vmax.f32 %v4631, 0.0
    %v4718 = vmax.f32 %v4633, 0.0
    %v4719 = vmax.f32 %v4635, 0.0
    %v4720 = vmax.f32 %v4637, 0.0
    %v4721 = vmax.f32 %v4641, 0.0
    %v4722 = vmax.f32 %v4643, 0.0
    %v4723 = vmax.f32 %v4645, 0.0
    %v4724 = vmax.f32 %v4647, 0.0
    %v4725 = vmax.f32 %v4651, 0.0
    %v4726 = vmax.f32 %v4653, 0.0
    %v4727 = vmax.f32 %v4655, 0.0
    %v4728 = vmax.f32 %v4657, 0.0
    %v4729 = vmax.f32 %v4661, 0.0
    %v4730 = vmax.f32 %v4663, 0.0
    %v4731 = vmax.f32 %v4665, 0.0
    %v4732 = vmax.f32 %v4667, 0.0
    %v4733 = vmax.f32 %v4671, 0.0
    %v4734 = vmax.f32 %v4673, 0.0
    %v4735 = vmax.f32 %v4675, 0.0
    %v4736 = vmax.f32 %v4677, 0.0
    %v4737 = vmax.f32 %v4681, 0.0
    %v4738 = vmax.f32 %v4683, 0.0
    %v4739 = vmax.f32 %v4685, 0.0
    %v4740 = vmax.f32 %v4687, 0.0
    %v4741 = vmax.f32 %v4691, 0.0
    %v4742 = vmax.f32 %v4693, 0.0
    %v4743 = vmax.f32 %v4695, 0.0
    %v4744 = vmax.f32 %v4697, 0.0
    %v4745 = vmax.f32 %v4701, 0.0
    %v4746 = vmax.f32 %v4703, 0.0
    %v4747 = vmax.f32 %v4705, 0.0
    %v4748 = vmax.f32 %v4707, 0.0
    %v4749 = vmax.f32 %v4709, %v4710
    %v4750 = vmax.f32 %v4711, %v4712
    %v4751 = vmax.f32 %v4713, %v4714
    %v4752 = vmax.f32 %v4715, %v4716
    %v4753 = vmax.f32 %v4717, %v4718
    %v4754 = vmax.f32 %v4719, %v4720
    %v4755 = vmax.f32 %v4721, %v4722
    %v4756 = vmax.f32 %v4723, %v4724
    %v4757 = vmax.f32 %v4725, %v4726
    %v4758 = vmax.f32 %v4727, %v4728
    %v4759 = vmax.f32 %v4729, %v4730
    %v4760 = vmax.f32 %v4731, %v4732
    %v4761 = vmax.f32 %v4733, %v4734
    %v4762 = vmax.f32 %v4735, %v4736
    %v4763 = vmax.f32 %v4737, %v4738
    %v4764 = vmax.f32 %v4739, %v4740
    %v4765 = vmax.f32 %v4741, %v4742
    %v4766 = vmax.f32 %v4743, %v4744
    %v4767 = vmax.f32 %v4745, %v4746
    %v4768 = vmax.f32 %v4747, %v4748
    %v4769 = vmax.f32 %v4749, %v4751
    %v4770 = vmax.f32 %v4750, %v4752
    %v4771 = vmax.f32 %v4753, %v4755
    %v4772 = vmax.f32 %v4754, %v4756
    %v4773 = vmax.f32 %v4757, %v4759
    %v4774 = vmax.f32 %v4758, %v4760
    %v4775 = vmax.f32 %v4761, %v4763
    %v4776 = vmax.f32 %v4762, %v4764
    %v4777 = vmax.f32 %v4765, %v4767
    %v4778 = vmax.f32 %v4766, %v4768
    %v4779 = vpack.c.bf16 %v4770, %v4769
    %v4780 = vpack.c.bf16 %v4772, %v4771
    %v4781 = vpack.c.bf16 %v4774, %v4773
    %v4782 = vpack.c.bf16 %v4776, %v4775
    %v4783 = vpack.c.bf16 %v4778, %v4777
    %v4784 = vld [vmem:[#allocation6] sm:$0xf]
    %v4785 = vld [vmem:[#allocation6 + $0x4] sm:$0xf]
    %v4786 = vld [vmem:[#allocation6 + $0x8] sm:$0xf]
    %v4787 = vld [vmem:[#allocation6 + $0xc] sm:$0xf]
    %v4788 = vld [vmem:[#allocation6 + $0x10] sm:$0xf]
    %v4789 = vld [vmem:[#allocation6 + $0x14] sm:$0xf]
    %v4790 = vld [vmem:[#allocation6 + $0x18] sm:$0xf]
    %v4791 = vld [vmem:[#allocation6 + $0x1c] sm:$0xf]
    %v4792 = vld [vmem:[#allocation6 + $0x20] sm:$0xf]
    %v4793 = vld [vmem:[#allocation6 + $0x24] sm:$0xf]
    %v4794 = vld [vmem:[#allocation6 + $0x28] sm:$0xf]
    %v4795 = vld [vmem:[#allocation6 + $0x2c] sm:$0xf]
    %v4796 = vld [vmem:[#allocation6 + $0x30] sm:$0xf]
    %v4797 = vld [vmem:[#allocation6 + $0x34] sm:$0xf]
    %v4798 = vld [vmem:[#allocation6 + $0x38] sm:$0xf]
    %v4799 = vld [vmem:[#allocation6 + $0x3c] sm:$0xf]
    %s4800 = scalar_lea.vmem [#allocation6], 64
    %v4801 = vld [vmem:[%s4800] sm:$0xf]
    %v4802 = vld [vmem:[%s4800 + $0x4] sm:$0xf]
    %v4803 = vld [vmem:[%s4800 + $0x8] sm:$0xf]
    %v4804 = vld [vmem:[%s4800 + $0xc] sm:$0xf]
    %v4805 = vld [vmem:[%s4800 + $0x10] sm:$0xf]
    %v4806 = vld [vmem:[%s4800 + $0x14] sm:$0xf]
    %v4807 = vld [vmem:[%s4800 + $0x18] sm:$0xf]
    %v4808 = vld [vmem:[%s4800 + $0x1c] sm:$0xf]
    %v4809 = vld [vmem:[%s4800 + $0x20] sm:$0xf]
    %v4810 = vld [vmem:[%s4800 + $0x24] sm:$0xf]
    %v4811 = vld [vmem:[%s4800 + $0x28] sm:$0xf]
    %v4812 = vld [vmem:[%s4800 + $0x2c] sm:$0xf]
    %v4813 = vld [vmem:[%s4800 + $0x30] sm:$0xf]
    %v4814 = vld [vmem:[%s4800 + $0x34] sm:$0xf]
    %v4815 = vld [vmem:[%s4800 + $0x38] sm:$0xf]
    %v4816 = vld [vmem:[%s4800 + $0x3c] sm:$0xf]
    %v4833 = vunpack.c.l.b16 %v4801
    %v4834 = vunpack.c.l.b16 %v4802
    %v4835 = vunpack.c.l.b16 %v4803
    %v4836 = vunpack.c.l.b16 %v4804
    %v4837 = vunpack.c.l.b16 %v4805
    %v4838 = vunpack.c.l.b16 %v4806
    %v4839 = vunpack.c.l.b16 %v4807
    %v4840 = vunpack.c.l.b16 %v4808
    %v4841 = vunpack.c.l.b16 %v4809
    %v4842 = vunpack.c.l.b16 %v4810
    %v4843 = vunpack.c.l.b16 %v4811
    %v4844 = vunpack.c.l.b16 %v4812
    %v4845 = vunpack.c.l.b16 %v4813
    %v4846 = vunpack.c.l.b16 %v4814
    %v4847 = vunpack.c.l.b16 %v4815
    %v4848 = vunpack.c.l.b16 %v4816
    %v4849 = vpack.c.b16 %v4834, %v4833
    %v4850 = vpack.c.b16 %v4836, %v4835
    %v4851 = vpack.c.b16 %v4838, %v4837
    %v4852 = vpack.c.b16 %v4840, %v4839
    %v4853 = vpack.c.b16 %v4842, %v4841
    %v4854 = vpack.c.b16 %v4844, %v4843
    %v4855 = vpack.c.b16 %v4846, %v4845
    %v4856 = vpack.c.b16 %v4848, %v4847
    %4865 = vmatprep.subr.bf16.mxu0 0
    %4866 = vmatpush1.bf16.msra.mxu0 %v4856
    %4867 = vmatprep.subr.bf16.mxu0 0
    %4868 = vmatpush1.bf16.msra.mxu0 %v4855
    %4869 = vmatprep.subr.bf16.mxu0 0
    %4870 = vmatpush1.bf16.msra.mxu0 %v4854
    %4871 = vmatprep.subr.bf16.mxu0 0
    %4872 = vmatpush1.bf16.msra.mxu0 %v4853
    %4873 = vmatprep.subr.bf16.mxu0 0
    %4874 = vmatpush1.bf16.msra.mxu0 %v4852
    %4875 = vmatprep.subr.bf16.mxu0 0
    %4876 = vmatpush1.bf16.msra.mxu0 %v4851
    %4877 = vmatprep.subr.bf16.mxu0 0
    %4878 = vmatpush1.bf16.msra.mxu0 %v4850
    %4879 = vmatprep.subr.bf16.mxu0 0
    %4880 = vmatpush1.bf16.msra.mxu0 %v4849
    %4881 = vmatprep.subr.bf16.mxu0 0
    %4882 = vmatpush2.bf16.msra.mxu0 0
    %4883 = vmatprep.subr.bf16.mxu0 0
    %4884 = vmatpush2.bf16.msra.mxu0 0
    %4885 = vmatprep.subr.bf16.mxu0 0
    %4886 = vmatpush2.bf16.msra.mxu0 0
    %4887 = vmatprep.subr.bf16.mxu0 0
    %4888 = vmatpush2.bf16.msra.mxu0 0
    %4889 = vmatprep.subr.bf16.mxu0 0
    %4890 = vmatpush2.bf16.msra.mxu0 0
    %4891 = vmatprep.subr.bf16.mxu0 0
    %4892 = vmatpush2.bf16.msra.mxu0 0
    %4893 = vmatprep.subr.bf16.mxu0 0
    %4894 = vmatpush2.bf16.msra.mxu0 0
    %4895 = vmatprep.subr.bf16.mxu0 0
    %4896 = vmatpush2.bf16.msra.mxu0 0
    %4897 = vmatprep.mubr.bf16.mxu0 0
    %4898 = vmatmul.mubr.bf16.gmra.mxu0 %v4780
    %v4899 = vpop.f32.mrf.mxu0
    %v4900 = vadd.f32 0.0, %v4899
    %v4901 = vpop.f32.mrf.mxu0
    %v4902 = vpop.f32.mrf.mxu0
    %v4903 = vadd.f32 0.0, %v4902
    %v4904 = vpop.f32.mrf.mxu0
    %4905 = vdwg.mxu0
    %v4922 = vunpack.c.l.b16 %v4784
    %v4923 = vunpack.c.l.b16 %v4785
    %v4924 = vunpack.c.l.b16 %v4786
    %v4925 = vunpack.c.l.b16 %v4787
    %v4926 = vunpack.c.l.b16 %v4788
    %v4927 = vunpack.c.l.b16 %v4789
    %v4928 = vunpack.c.l.b16 %v4790
    %v4929 = vunpack.c.l.b16 %v4791
    %v4930 = vunpack.c.l.b16 %v4792
    %v4931 = vunpack.c.l.b16 %v4793
    %v4932 = vunpack.c.l.b16 %v4794
    %v4933 = vunpack.c.l.b16 %v4795
    %v4934 = vunpack.c.l.b16 %v4796
    %v4935 = vunpack.c.l.b16 %v4797
    %v4936 = vunpack.c.l.b16 %v4798
    %v4937 = vunpack.c.l.b16 %v4799
    %v4938 = vpack.c.b16 %v4923, %v4922
    %v4939 = vpack.c.b16 %v4925, %v4924
    %v4940 = vpack.c.b16 %v4927, %v4926
    %v4941 = vpack.c.b16 %v4929, %v4928
    %v4942 = vpack.c.b16 %v4931, %v4930
    %v4943 = vpack.c.b16 %v4933, %v4932
    %v4944 = vpack.c.b16 %v4935, %v4934
    %v4945 = vpack.c.b16 %v4937, %v4936
    %4954 = vmatprep.subr.bf16.mxu0 0
    %4955 = vmatpush1.bf16.msra.mxu0 %v4945
    %4956 = vmatprep.subr.bf16.mxu0 0
    %4957 = vmatpush1.bf16.msra.mxu0 %v4944
    %4958 = vmatprep.subr.bf16.mxu0 0
    %4959 = vmatpush1.bf16.msra.mxu0 %v4943
    %4960 = vmatprep.subr.bf16.mxu0 0
    %4961 = vmatpush1.bf16.msra.mxu0 %v4942
    %4962 = vmatprep.subr.bf16.mxu0 0
    %4963 = vmatpush1.bf16.msra.mxu0 %v4941
    %4964 = vmatprep.subr.bf16.mxu0 0
    %4965 = vmatpush1.bf16.msra.mxu0 %v4940
    %4966 = vmatprep.subr.bf16.mxu0 0
    %4967 = vmatpush1.bf16.msra.mxu0 %v4939
    %4968 = vmatprep.subr.bf16.mxu0 0
    %4969 = vmatpush1.bf16.msra.mxu0 %v4938
    %4970 = vmatprep.subr.bf16.mxu0 0
    %4971 = vmatpush2.bf16.msra.mxu0 0
    %4972 = vmatprep.subr.bf16.mxu0 0
    %4973 = vmatpush2.bf16.msra.mxu0 0
    %4974 = vmatprep.subr.bf16.mxu0 0
    %4975 = vmatpush2.bf16.msra.mxu0 0
    %4976 = vmatprep.subr.bf16.mxu0 0
    %4977 = vmatpush2.bf16.msra.mxu0 0
    %4978 = vmatprep.subr.bf16.mxu0 0
    %4979 = vmatpush2.bf16.msra.mxu0 0
    %4980 = vmatprep.subr.bf16.mxu0 0
    %4981 = vmatpush2.bf16.msra.mxu0 0
    %4982 = vmatprep.subr.bf16.mxu0 0
    %4983 = vmatpush2.bf16.msra.mxu0 0
    %4984 = vmatprep.subr.bf16.mxu0 0
    %4985 = vmatpush2.bf16.msra.mxu0 0
    %4986 = vmatprep.mubr.bf16.mxu0 0
    %4987 = vmatmul.mubr.bf16.gmra.mxu0 %v4779
    %v4988 = vpop.f32.mrf.mxu0
    %v4989 = vadd.f32 %v4900, %v4988
    %v4990 = vpop.f32.mrf.mxu0
    %v4991 = vpop.f32.mrf.mxu0
    %v4992 = vadd.f32 %v4903, %v4991
    %v4993 = vpop.f32.mrf.mxu0
    %4994 = vdwg.mxu0
    %s4995 = scalar_lea.vmem [#allocation6], 128
    %v4996 = vld [vmem:[%s4995] sm:$0xf]
    %v4997 = vld [vmem:[%s4995 + $0x4] sm:$0xf]
    %v4998 = vld [vmem:[%s4995 + $0x8] sm:$0xf]
    %v4999 = vld [vmem:[%s4995 + $0xc] sm:$0xf]
    %v5000 = vld [vmem:[%s4995 + $0x10] sm:$0xf]
    %v5001 = vld [vmem:[%s4995 + $0x14] sm:$0xf]
    %v5002 = vld [vmem:[%s4995 + $0x18] sm:$0xf]
    %v5003 = vld [vmem:[%s4995 + $0x1c] sm:$0xf]
    %v5004 = vld [vmem:[%s4995 + $0x20] sm:$0xf]
    %v5005 = vld [vmem:[%s4995 + $0x24] sm:$0xf]
    %v5006 = vld [vmem:[%s4995 + $0x28] sm:$0xf]
    %v5007 = vld [vmem:[%s4995 + $0x2c] sm:$0xf]
    %v5008 = vld [vmem:[%s4995 + $0x30] sm:$0xf]
    %v5009 = vld [vmem:[%s4995 + $0x34] sm:$0xf]
    %v5010 = vld [vmem:[%s4995 + $0x38] sm:$0xf]
    %v5011 = vld [vmem:[%s4995 + $0x3c] sm:$0xf]
    %v5028 = vunpack.c.l.b16 %v4996
    %v5029 = vunpack.c.l.b16 %v4997
    %v5030 = vunpack.c.l.b16 %v4998
    %v5031 = vunpack.c.l.b16 %v4999
    %v5032 = vunpack.c.l.b16 %v5000
    %v5033 = vunpack.c.l.b16 %v5001
    %v5034 = vunpack.c.l.b16 %v5002
    %v5035 = vunpack.c.l.b16 %v5003
    %v5036 = vunpack.c.l.b16 %v5004
    %v5037 = vunpack.c.l.b16 %v5005
    %v5038 = vunpack.c.l.b16 %v5006
    %v5039 = vunpack.c.l.b16 %v5007
    %v5040 = vunpack.c.l.b16 %v5008
    %v5041 = vunpack.c.l.b16 %v5009
    %v5042 = vunpack.c.l.b16 %v5010
    %v5043 = vunpack.c.l.b16 %v5011
    %v5044 = vpack.c.b16 %v5029, %v5028
    %v5045 = vpack.c.b16 %v5031, %v5030
    %v5046 = vpack.c.b16 %v5033, %v5032
    %v5047 = vpack.c.b16 %v5035, %v5034
    %v5048 = vpack.c.b16 %v5037, %v5036
    %v5049 = vpack.c.b16 %v5039, %v5038
    %v5050 = vpack.c.b16 %v5041, %v5040
    %v5051 = vpack.c.b16 %v5043, %v5042
    %5060 = vmatprep.subr.bf16.mxu0 0
    %5061 = vmatpush1.bf16.msra.mxu0 %v5051
    %5062 = vmatprep.subr.bf16.mxu0 0
    %5063 = vmatpush1.bf16.msra.mxu0 %v5050
    %5064 = vmatprep.subr.bf16.mxu0 0
    %5065 = vmatpush1.bf16.msra.mxu0 %v5049
    %5066 = vmatprep.subr.bf16.mxu0 0
    %5067 = vmatpush1.bf16.msra.mxu0 %v5048
    %5068 = vmatprep.subr.bf16.mxu0 0
    %5069 = vmatpush1.bf16.msra.mxu0 %v5047
    %5070 = vmatprep.subr.bf16.mxu0 0
    %5071 = vmatpush1.bf16.msra.mxu0 %v5046
    %5072 = vmatprep.subr.bf16.mxu0 0
    %5073 = vmatpush1.bf16.msra.mxu0 %v5045
    %5074 = vmatprep.subr.bf16.mxu0 0
    %5075 = vmatpush1.bf16.msra.mxu0 %v5044
    %5076 = vmatprep.subr.bf16.mxu0 0
    %5077 = vmatpush2.bf16.msra.mxu0 0
    %5078 = vmatprep.subr.bf16.mxu0 0
    %5079 = vmatpush2.bf16.msra.mxu0 0
    %5080 = vmatprep.subr.bf16.mxu0 0
    %5081 = vmatpush2.bf16.msra.mxu0 0
    %5082 = vmatprep.subr.bf16.mxu0 0
    %5083 = vmatpush2.bf16.msra.mxu0 0
    %5084 = vmatprep.subr.bf16.mxu0 0
    %5085 = vmatpush2.bf16.msra.mxu0 0
    %5086 = vmatprep.subr.bf16.mxu0 0
    %5087 = vmatpush2.bf16.msra.mxu0 0
    %5088 = vmatprep.subr.bf16.mxu0 0
    %5089 = vmatpush2.bf16.msra.mxu0 0
    %5090 = vmatprep.subr.bf16.mxu0 0
    %5091 = vmatpush2.bf16.msra.mxu0 0
    %5092 = vmatprep.mubr.bf16.mxu0 0
    %5093 = vmatmul.mubr.bf16.gmra.mxu0 %v4781
    %v5094 = vpop.f32.mrf.mxu0
    %v5095 = vadd.f32 0.0, %v5094
    %v5096 = vpop.f32.mrf.mxu0
    %v5097 = vpop.f32.mrf.mxu0
    %v5098 = vadd.f32 0.0, %v5097
    %v5099 = vpop.f32.mrf.mxu0
    %5100 = vdwg.mxu0
    %v5101 = vadd.f32 %v4989, %v5095
    %v5102 = vadd.f32 %v4992, %v5098
    %s5103 = scalar_lea.vmem [#allocation6], 192
    %v5104 = vld [vmem:[%s5103] sm:$0xf]
    %v5105 = vld [vmem:[%s5103 + $0x4] sm:$0xf]
    %v5106 = vld [vmem:[%s5103 + $0x8] sm:$0xf]
    %v5107 = vld [vmem:[%s5103 + $0xc] sm:$0xf]
    %v5108 = vld [vmem:[%s5103 + $0x10] sm:$0xf]
    %v5109 = vld [vmem:[%s5103 + $0x14] sm:$0xf]
    %v5110 = vld [vmem:[%s5103 + $0x18] sm:$0xf]
    %v5111 = vld [vmem:[%s5103 + $0x1c] sm:$0xf]
    %v5112 = vld [vmem:[%s5103 + $0x20] sm:$0xf]
    %v5113 = vld [vmem:[%s5103 + $0x24] sm:$0xf]
    %v5114 = vld [vmem:[%s5103 + $0x28] sm:$0xf]
    %v5115 = vld [vmem:[%s5103 + $0x2c] sm:$0xf]
    %v5116 = vld [vmem:[%s5103 + $0x30] sm:$0xf]
    %v5117 = vld [vmem:[%s5103 + $0x34] sm:$0xf]
    %v5118 = vld [vmem:[%s5103 + $0x38] sm:$0xf]
    %v5119 = vld [vmem:[%s5103 + $0x3c] sm:$0xf]
    %v5136 = vunpack.c.l.b16 %v5104
    %v5137 = vunpack.c.l.b16 %v5105
    %v5138 = vunpack.c.l.b16 %v5106
    %v5139 = vunpack.c.l.b16 %v5107
    %v5140 = vunpack.c.l.b16 %v5108
    %v5141 = vunpack.c.l.b16 %v5109
    %v5142 = vunpack.c.l.b16 %v5110
    %v5143 = vunpack.c.l.b16 %v5111
    %v5144 = vunpack.c.l.b16 %v5112
    %v5145 = vunpack.c.l.b16 %v5113
    %v5146 = vunpack.c.l.b16 %v5114
    %v5147 = vunpack.c.l.b16 %v5115
    %v5148 = vunpack.c.l.b16 %v5116
    %v5149 = vunpack.c.l.b16 %v5117
    %v5150 = vunpack.c.l.b16 %v5118
    %v5151 = vunpack.c.l.b16 %v5119
    %v5152 = vpack.c.b16 %v5137, %v5136
    %v5153 = vpack.c.b16 %v5139, %v5138
    %v5154 = vpack.c.b16 %v5141, %v5140
    %v5155 = vpack.c.b16 %v5143, %v5142
    %v5156 = vpack.c.b16 %v5145, %v5144
    %v5157 = vpack.c.b16 %v5147, %v5146
    %v5158 = vpack.c.b16 %v5149, %v5148
    %v5159 = vpack.c.b16 %v5151, %v5150
    %5168 = vmatprep.subr.bf16.mxu0 0
    %5169 = vmatpush1.bf16.msra.mxu0 %v5159
    %5170 = vmatprep.subr.bf16.mxu0 0
    %5171 = vmatpush1.bf16.msra.mxu0 %v5158
    %5172 = vmatprep.subr.bf16.mxu0 0
    %5173 = vmatpush1.bf16.msra.mxu0 %v5157
    %5174 = vmatprep.subr.bf16.mxu0 0
    %5175 = vmatpush1.bf16.msra.mxu0 %v5156
    %5176 = vmatprep.subr.bf16.mxu0 0
    %5177 = vmatpush1.bf16.msra.mxu0 %v5155
    %5178 = vmatprep.subr.bf16.mxu0 0
    %5179 = vmatpush1.bf16.msra.mxu0 %v5154
    %5180 = vmatprep.subr.bf16.mxu0 0
    %5181 = vmatpush1.bf16.msra.mxu0 %v5153
    %5182 = vmatprep.subr.bf16.mxu0 0
    %5183 = vmatpush1.bf16.msra.mxu0 %v5152
    %5184 = vmatprep.subr.bf16.mxu0 0
    %5185 = vmatpush2.bf16.msra.mxu0 0
    %5186 = vmatprep.subr.bf16.mxu0 0
    %5187 = vmatpush2.bf16.msra.mxu0 0
    %5188 = vmatprep.subr.bf16.mxu0 0
    %5189 = vmatpush2.bf16.msra.mxu0 0
    %5190 = vmatprep.subr.bf16.mxu0 0
    %5191 = vmatpush2.bf16.msra.mxu0 0
    %5192 = vmatprep.subr.bf16.mxu0 0
    %5193 = vmatpush2.bf16.msra.mxu0 0
    %5194 = vmatprep.subr.bf16.mxu0 0
    %5195 = vmatpush2.bf16.msra.mxu0 0
    %5196 = vmatprep.subr.bf16.mxu0 0
    %5197 = vmatpush2.bf16.msra.mxu0 0
    %5198 = vmatprep.subr.bf16.mxu0 0
    %5199 = vmatpush2.bf16.msra.mxu0 0
    %5200 = vmatprep.mubr.bf16.mxu0 0
    %5201 = vmatmul.mubr.bf16.gmra.mxu0 %v4782
    %v5202 = vpop.f32.mrf.mxu0
    %v5203 = vadd.f32 0.0, %v5202
    %v5204 = vpop.f32.mrf.mxu0
    %v5205 = vpop.f32.mrf.mxu0
    %v5206 = vadd.f32 0.0, %v5205
    %v5207 = vpop.f32.mrf.mxu0
    %5208 = vdwg.mxu0
    %v5209 = vadd.f32 %v5101, %v5203
    %v5210 = vadd.f32 %v5102, %v5206
    %s5211 = scalar_lea.vmem [#allocation6], 256
    %v5212 = vld [vmem:[%s5211] sm:$0xf]
    %v5213 = vld [vmem:[%s5211 + $0x4] sm:$0xf]
    %v5214 = vld [vmem:[%s5211 + $0x8] sm:$0xf]
    %v5215 = vld [vmem:[%s5211 + $0xc] sm:$0xf]
    %v5216 = vld [vmem:[%s5211 + $0x10] sm:$0xf]
    %v5217 = vld [vmem:[%s5211 + $0x14] sm:$0xf]
    %v5218 = vld [vmem:[%s5211 + $0x18] sm:$0xf]
    %v5219 = vld [vmem:[%s5211 + $0x1c] sm:$0xf]
    %v5220 = vld [vmem:[%s5211 + $0x20] sm:$0xf]
    %v5221 = vld [vmem:[%s5211 + $0x24] sm:$0xf]
    %v5222 = vld [vmem:[%s5211 + $0x28] sm:$0xf]
    %v5223 = vld [vmem:[%s5211 + $0x2c] sm:$0xf]
    %v5224 = vld [vmem:[%s5211 + $0x30] sm:$0xf]
    %v5225 = vld [vmem:[%s5211 + $0x34] sm:$0xf]
    %v5226 = vld [vmem:[%s5211 + $0x38] sm:$0xf]
    %v5227 = vld [vmem:[%s5211 + $0x3c] sm:$0xf]
    %v5244 = vunpack.c.l.b16 %v5212
    %v5245 = vunpack.c.l.b16 %v5213
    %v5246 = vunpack.c.l.b16 %v5214
    %v5247 = vunpack.c.l.b16 %v5215
    %v5248 = vunpack.c.l.b16 %v5216
    %v5249 = vunpack.c.l.b16 %v5217
    %v5250 = vunpack.c.l.b16 %v5218
    %v5251 = vunpack.c.l.b16 %v5219
    %v5252 = vunpack.c.l.b16 %v5220
    %v5253 = vunpack.c.l.b16 %v5221
    %v5254 = vunpack.c.l.b16 %v5222
    %v5255 = vunpack.c.l.b16 %v5223
    %v5256 = vunpack.c.l.b16 %v5224
    %v5257 = vunpack.c.l.b16 %v5225
    %v5258 = vunpack.c.l.b16 %v5226
    %v5259 = vunpack.c.l.b16 %v5227
    %v5260 = vpack.c.b16 %v5245, %v5244
    %v5261 = vpack.c.b16 %v5247, %v5246
    %v5262 = vpack.c.b16 %v5249, %v5248
    %v5263 = vpack.c.b16 %v5251, %v5250
    %v5264 = vpack.c.b16 %v5253, %v5252
    %v5265 = vpack.c.b16 %v5255, %v5254
    %v5266 = vpack.c.b16 %v5257, %v5256
    %v5267 = vpack.c.b16 %v5259, %v5258
    %5276 = vmatprep.subr.bf16.mxu0 0
    %5277 = vmatpush1.bf16.msra.mxu0 %v5267
    %5278 = vmatprep.subr.bf16.mxu0 0
    %5279 = vmatpush1.bf16.msra.mxu0 %v5266
    %5280 = vmatprep.subr.bf16.mxu0 0
    %5281 = vmatpush1.bf16.msra.mxu0 %v5265
    %5282 = vmatprep.subr.bf16.mxu0 0
    %5283 = vmatpush1.bf16.msra.mxu0 %v5264
    %5284 = vmatprep.subr.bf16.mxu0 0
    %5285 = vmatpush1.bf16.msra.mxu0 %v5263
    %5286 = vmatprep.subr.bf16.mxu0 0
    %5287 = vmatpush1.bf16.msra.mxu0 %v5262
    %5288 = vmatprep.subr.bf16.mxu0 0
    %5289 = vmatpush1.bf16.msra.mxu0 %v5261
    %5290 = vmatprep.subr.bf16.mxu0 0
    %5291 = vmatpush1.bf16.msra.mxu0 %v5260
    %5292 = vmatprep.subr.bf16.mxu0 0
    %5293 = vmatpush2.bf16.msra.mxu0 0
    %5294 = vmatprep.subr.bf16.mxu0 0
    %5295 = vmatpush2.bf16.msra.mxu0 0
    %5296 = vmatprep.subr.bf16.mxu0 0
    %5297 = vmatpush2.bf16.msra.mxu0 0
    %5298 = vmatprep.subr.bf16.mxu0 0
    %5299 = vmatpush2.bf16.msra.mxu0 0
    %5300 = vmatprep.subr.bf16.mxu0 0
    %5301 = vmatpush2.bf16.msra.mxu0 0
    %5302 = vmatprep.subr.bf16.mxu0 0
    %5303 = vmatpush2.bf16.msra.mxu0 0
    %5304 = vmatprep.subr.bf16.mxu0 0
    %5305 = vmatpush2.bf16.msra.mxu0 0
    %5306 = vmatprep.subr.bf16.mxu0 0
    %5307 = vmatpush2.bf16.msra.mxu0 0
    %5308 = vmatprep.mubr.bf16.mxu0 0
    %5309 = vmatmul.mubr.bf16.gmra.mxu0 %v4783
    %v5310 = vpop.f32.mrf.mxu0
    %v5311 = vadd.f32 0.0, %v5310
    %v5312 = vpop.f32.mrf.mxu0
    %v5313 = vpop.f32.mrf.mxu0
    %v5314 = vadd.f32 0.0, %v5313
    %v5315 = vpop.f32.mrf.mxu0
    %5316 = vdwg.mxu0
    %v5317 = vadd.f32 %v5209, %v5311
    %v5318 = vadd.f32 %v5210, %v5314
    %v5319 = vld [vmem:[%s6] sm:$0x1]
    %v5321 = vlaneseq
    %v5322 = vshrl.u32 %v5321, 7
    %v5323 = vsub.s32 0, %v5322
    %v5324 = vrot.slane %v5319, %v5323
    %v5326 = vadd.f32 %v5317, %v5324
    %v5327 = vadd.f32 %v5318, %v5324
    %v5328 = vmax.f32 %v5326, 0.0
    %v5329 = vmax.f32 %v5327, 0.0
    %v5330 = vpack.c.bf16 %v5329, %v5328
    %v5331 = vld [vmem:[%s7] sm:$0xf]
    %v5332 = vld [vmem:[%s7 + $0x4] sm:$0xf]
    %v5333 = vld [vmem:[%s7 + $0x8] sm:$0xf]
    %v5334 = vld [vmem:[%s7 + $0xc] sm:$0xf]
    %v5335 = vld [vmem:[%s7 + $0x10] sm:$0xf]
    %v5336 = vld [vmem:[%s7 + $0x14] sm:$0xf]
    %v5337 = vld [vmem:[%s7 + $0x18] sm:$0xf]
    %v5338 = vld [vmem:[%s7 + $0x1c] sm:$0xf]
    %v5339 = vld [vmem:[%s7 + $0x20] sm:$0xf]
    %v5340 = vld [vmem:[%s7 + $0x24] sm:$0xf]
    %v5341 = vld [vmem:[%s7 + $0x28] sm:$0xf]
    %v5342 = vld [vmem:[%s7 + $0x2c] sm:$0xf]
    %v5343 = vld [vmem:[%s7 + $0x30] sm:$0xf]
    %v5344 = vld [vmem:[%s7 + $0x34] sm:$0xf]
    %v5345 = vld [vmem:[%s7 + $0x38] sm:$0xf]
    %v5346 = vld [vmem:[%s7 + $0x3c] sm:$0xf]
    %v5347 = vld [vmem:[%s8] sm:$0x1]
    %v5349 = vlaneseq
    %v5350 = vshrl.u32 %v5349, 7
    %v5351 = vsub.s32 0, %v5350
    %v5352 = vrot.slane %v5347, %v5351
    %v5370 = vunpack.c.l.b16 %v5331
    %v5371 = vunpack.c.l.b16 %v5332
    %v5372 = vunpack.c.l.b16 %v5333
    %v5373 = vunpack.c.l.b16 %v5334
    %v5374 = vunpack.c.l.b16 %v5335
    %v5375 = vunpack.c.l.b16 %v5336
    %v5376 = vunpack.c.l.b16 %v5337
    %v5377 = vunpack.c.l.b16 %v5338
    %v5378 = vunpack.c.l.b16 %v5339
    %v5379 = vunpack.c.l.b16 %v5340
    %v5380 = vunpack.c.l.b16 %v5341
    %v5381 = vunpack.c.l.b16 %v5342
    %v5382 = vunpack.c.l.b16 %v5343
    %v5383 = vunpack.c.l.b16 %v5344
    %v5384 = vunpack.c.l.b16 %v5345
    %v5385 = vunpack.c.l.b16 %v5346
    %v5386 = vpack.c.b16 %v5371, %v5370
    %v5387 = vpack.c.b16 %v5373, %v5372
    %v5388 = vpack.c.b16 %v5375, %v5374
    %v5389 = vpack.c.b16 %v5377, %v5376
    %v5390 = vpack.c.b16 %v5379, %v5378
    %v5391 = vpack.c.b16 %v5381, %v5380
    %v5392 = vpack.c.b16 %v5383, %v5382
    %v5393 = vpack.c.b16 %v5385, %v5384
    %5402 = vmatprep.subr.bf16.mxu0 0
    %5403 = vmatpush1.bf16.msra.mxu0 %v5393
    %5404 = vmatprep.subr.bf16.mxu0 0
    %5405 = vmatpush1.bf16.msra.mxu0 %v5392
    %5406 = vmatprep.subr.bf16.mxu0 0
    %5407 = vmatpush1.bf16.msra.mxu0 %v5391
    %5408 = vmatprep.subr.bf16.mxu0 0
    %5409 = vmatpush1.bf16.msra.mxu0 %v5390
    %5410 = vmatprep.subr.bf16.mxu0 0
    %5411 = vmatpush1.bf16.msra.mxu0 %v5389
    %5412 = vmatprep.subr.bf16.mxu0 0
    %5413 = vmatpush1.bf16.msra.mxu0 %v5388
    %5414 = vmatprep.subr.bf16.mxu0 0
    %5415 = vmatpush1.bf16.msra.mxu0 %v5387
    %5416 = vmatprep.subr.bf16.mxu0 0
    %5417 = vmatpush1.bf16.msra.mxu0 %v5386
    %5418 = vmatprep.subr.bf16.mxu0 0
    %5419 = vmatpush2.bf16.msra.mxu0 0
    %5420 = vmatprep.subr.bf16.mxu0 0
    %5421 = vmatpush2.bf16.msra.mxu0 0
    %5422 = vmatprep.subr.bf16.mxu0 0
    %5423 = vmatpush2.bf16.msra.mxu0 0
    %5424 = vmatprep.subr.bf16.mxu0 0
    %5425 = vmatpush2.bf16.msra.mxu0 0
    %5426 = vmatprep.subr.bf16.mxu0 0
    %5427 = vmatpush2.bf16.msra.mxu0 0
    %5428 = vmatprep.subr.bf16.mxu0 0
    %5429 = vmatpush2.bf16.msra.mxu0 0
    %5430 = vmatprep.subr.bf16.mxu0 0
    %5431 = vmatpush2.bf16.msra.mxu0 0
    %5432 = vmatprep.subr.bf16.mxu0 0
    %5433 = vmatpush2.bf16.msra.mxu0 0
    %5434 = vmatprep.mubr.bf16.mxu0 0
    %5435 = vmatmul.mubr.bf16.gmra.mxu0 %v5330
    %v5436 = vpop.f32.mrf.mxu0
    %v5437 = vadd.f32 %v5352, %v5436
    %v5438 = vpop.f32.mrf.mxu0
    %v5439 = vpop.f32.mrf.mxu0
    %v5440 = vadd.f32 %v5352, %v5439
    %v5441 = vpop.f32.mrf.mxu0
    %5442 = vdwg.mxu0
    %v5443 = vmax.f32 %v5437, 0.0
    %v5444 = vmax.f32 %v5440, 0.0
    %v5445 = vpack.c.bf16 %v5444, %v5443
    %v5446 = vld [vmem:[%s9] sm:$0xf]
    %v5447 = vld [vmem:[%s9 + $0x4] sm:$0xf]
    %v5448 = vld [vmem:[%s9 + $0x8] sm:$0xf]
    %v5449 = vld [vmem:[%s9 + $0xc] sm:$0xf]
    %v5450 = vld [vmem:[%s9 + $0x10] sm:$0xf]
    %v5451 = vld [vmem:[%s9 + $0x14] sm:$0xf]
    %v5452 = vld [vmem:[%s9 + $0x18] sm:$0xf]
    %v5453 = vld [vmem:[%s9 + $0x1c] sm:$0xf]
    %v5454 = vld [vmem:[%s9 + $0x20] sm:$0xf]
    %v5455 = vld [vmem:[%s9 + $0x24] sm:$0xf]
    %v5456 = vld [vmem:[%s9 + $0x28] sm:$0xf]
    %v5457 = vld [vmem:[%s9 + $0x2c] sm:$0xf]
    %v5458 = vld [vmem:[%s9 + $0x30] sm:$0xf]
    %v5459 = vld [vmem:[%s9 + $0x34] sm:$0xf]
    %v5460 = vld [vmem:[%s9 + $0x38] sm:$0xf]
    %v5461 = vld [vmem:[%s9 + $0x3c] sm:$0xf]
    %v5462 = vld [vmem:[%s10] sm:$0x1]
    %v5464 = vlaneseq
    %v5465 = vshrl.u32 %v5464, 7
    %v5466 = vsub.s32 0, %v5465
    %v5467 = vrot.slane %v5462, %v5466
    %v5485 = vunpack.c.l.b16 %v5446
    %v5486 = vunpack.c.l.b16 %v5447
    %v5487 = vunpack.c.l.b16 %v5448
    %v5488 = vunpack.c.l.b16 %v5449
    %v5489 = vunpack.c.l.b16 %v5450
    %v5490 = vunpack.c.l.b16 %v5451
    %v5491 = vunpack.c.l.b16 %v5452
    %v5492 = vunpack.c.l.b16 %v5453
    %v5493 = vunpack.c.l.b16 %v5454
    %v5494 = vunpack.c.l.b16 %v5455
    %v5495 = vunpack.c.l.b16 %v5456
    %v5496 = vunpack.c.l.b16 %v5457
    %v5497 = vunpack.c.l.b16 %v5458
    %v5498 = vunpack.c.l.b16 %v5459
    %v5499 = vunpack.c.l.b16 %v5460
    %v5500 = vunpack.c.l.b16 %v5461
    %v5501 = vpack.c.b16 %v5486, %v5485
    %v5502 = vpack.c.b16 %v5488, %v5487
    %v5503 = vpack.c.b16 %v5490, %v5489
    %v5504 = vpack.c.b16 %v5492, %v5491
    %v5505 = vpack.c.b16 %v5494, %v5493
    %v5506 = vpack.c.b16 %v5496, %v5495
    %v5507 = vpack.c.b16 %v5498, %v5497
    %v5508 = vpack.c.b16 %v5500, %v5499
    %5517 = vmatprep.subr.bf16.mxu0 0
    %5518 = vmatpush1.bf16.msra.mxu0 %v5508
    %5519 = vmatprep.subr.bf16.mxu0 0
    %5520 = vmatpush1.bf16.msra.mxu0 %v5507
    %5521 = vmatprep.subr.bf16.mxu0 0
    %5522 = vmatpush1.bf16.msra.mxu0 %v5506
    %5523 = vmatprep.subr.bf16.mxu0 0
    %5524 = vmatpush1.bf16.msra.mxu0 %v5505
    %5525 = vmatprep.subr.bf16.mxu0 0
    %5526 = vmatpush1.bf16.msra.mxu0 %v5504
    %5527 = vmatprep.subr.bf16.mxu0 0
    %5528 = vmatpush1.bf16.msra.mxu0 %v5503
    %5529 = vmatprep.subr.bf16.mxu0 0
    %5530 = vmatpush1.bf16.msra.mxu0 %v5502
    %5531 = vmatprep.subr.bf16.mxu0 0
    %5532 = vmatpush1.bf16.msra.mxu0 %v5501
    %5533 = vmatprep.subr.bf16.mxu0 0
    %5534 = vmatpush2.bf16.msra.mxu0 0
    %5535 = vmatprep.subr.bf16.mxu0 0
    %5536 = vmatpush2.bf16.msra.mxu0 0
    %5537 = vmatprep.subr.bf16.mxu0 0
    %5538 = vmatpush2.bf16.msra.mxu0 0
    %5539 = vmatprep.subr.bf16.mxu0 0
    %5540 = vmatpush2.bf16.msra.mxu0 0
    %5541 = vmatprep.subr.bf16.mxu0 0
    %5542 = vmatpush2.bf16.msra.mxu0 0
    %5543 = vmatprep.subr.bf16.mxu0 0
    %5544 = vmatpush2.bf16.msra.mxu0 0
    %5545 = vmatprep.subr.bf16.mxu0 0
    %5546 = vmatpush2.bf16.msra.mxu0 0
    %5547 = vmatprep.subr.bf16.mxu0 0
    %5548 = vmatpush2.bf16.msra.mxu0 0
    %5549 = vmatprep.mubr.bf16.mxu0 0
    %5550 = vmatmul.mubr.bf16.gmra.mxu0 %v5445
    %v5551 = vpop.f32.mrf.mxu0
    %v5552 = vadd.f32 %v5467, %v5551
    %v5553 = vpop.f32.mrf.mxu0
    %v5554 = vpop.f32.mrf.mxu0
    %v5555 = vadd.f32 %v5467, %v5554
    %v5556 = vpop.f32.mrf.mxu0
    %5557 = vdwg.mxu0
    %5558 = vst [vmem:[%s11] sm:$0xff] %v5552
    %5559 = vst [vmem:[%s11 + $0x8] sm:$0xff] %v5555
    // Predicated region
    $region54: #{net_forward.1} parent=1 // pred_check
      _
    $region55: #{net_forward.1} parent=1 // pred_check_branch
      %5561 = sbr.rel (0) target = $region57
    $region56: #{net_forward.1} parent=1 // pred_region
      _
    $region57: #{net_forward.1} parent=1 // pred_fallthru
      _
    // Predicated region
    $region58: #{net_forward.1} parent=1 // pred_check
      _
    $region59: #{net_forward.1} parent=1 // pred_check_branch
      %5563 = sbr.rel (0) target = $region61
    $region60: #{net_forward.1} parent=1 // pred_region
      _
    $region61: #{net_forward.1} parent=1 // pred_fallthru
      _
    %5564 = vsyncpa [#allocation5], 1
    %5565 = vsyncpa [#allocation7], 1

</llo_original>
